<compile_context>
chip_gen: v7x
topology: tpu7x:2x2x1
jax: 0.10.0
libtpu: 0.0.40
codegen_flags: <defaults>
</compile_context>

<pallas_src>
import jax
import jax.numpy as jnp
from jax import lax
from jax.experimental import pallas as pl
from jax.experimental.pallas import tpu as pltpu


# ---------------------------------------------------------------------------
# In-kernel helpers
# ---------------------------------------------------------------------------

def _fill_pad(x_ref, scale, shift, pad_ref, r0, sid, ns, strip_h, w):
    """BN(affine)->ReLU the strip rows (+ 1-row halo) into the bf16 halo scratch.

    x_ref   : (1, H, W, Cp) whole-image VMEM block (f32 or bf16)
    scale   : (1, Cp) folded BN scale   shift : (1, Cp) folded BN shift
    pad_ref : (strip_h+2, w+2, Cp) bf16 scratch; left/right cols already zeroed
    r0      : first image row of this strip (dynamic)
    """
    cin_p = x_ref.shape[-1]

    def act(v):
        return jnp.maximum(v.astype(jnp.float32) * scale + shift,
                           0.0).astype(pad_ref.dtype)

    # Interior rows (always valid).
    pad_ref[1:strip_h + 1, 1:w + 1, :] = act(x_ref[0, pl.ds(r0, strip_h)])

    zrow = jnp.zeros((1, w, cin_p), pad_ref.dtype)

    # Top halo row.
    @pl.when(sid == 0)
    def _():
        pad_ref[0:1, 1:w + 1, :] = zrow

    @pl.when(sid > 0)
    def _():
        pad_ref[0:1, 1:w + 1, :] = act(x_ref[0, pl.ds(r0 - 1, 1)])

    # Bottom halo row.
    @pl.when(sid == ns - 1)
    def _():
        pad_ref[strip_h + 1:strip_h + 2, 1:w + 1, :] = zrow

    @pl.when(sid < ns - 1)
    def _():
        pad_ref[strip_h + 1:strip_h + 2, 1:w + 1, :] = act(
            x_ref[0, pl.ds(r0 + strip_h, 1)])


def _conv3x3_from_pad(pad_ref, w_ref, bias, strip_h, w):
    """3x3 conv (pad=1) on the halo scratch as ONE fat bf16 MXU dot.

    pad_ref : (strip_h+2, w+2, Cin_p) bf16, halo ring holds the zero padding
    w_ref   : (9*Cin_p, Cout_p) bf16 weights, row index = ky*3*Cin_p + kx*Cin_p + ci
    bias    : (1, Cout_p) f32
    returns : (strip_h*w, Cout_p) f32
    """
    cin_p = pad_ref.shape[-1]
    # kx-shifted slabs concatenated along lanes (lane-aligned: Cin_p % 128 == 0).
    slab = jnp.concatenate(
        [pad_ref[:, 0:w, :], pad_ref[:, 1:1 + w, :], pad_ref[:, 2:2 + w, :]],
        axis=-1)                                      # (strip_h+2, w, 3*Cin_p)
    # ky-shifted views concatenated along lanes -> single K = 9*Cin_p contraction.
    patch = jnp.concatenate(
        [slab[0:strip_h], slab[1:1 + strip_h], slab[2:2 + strip_h]],
        axis=-1).reshape(strip_h * w, 9 * cin_p)
    return jnp.dot(patch, w_ref[...], preferred_element_type=jnp.float32) + bias


def _zero_side_cols(pad_ref, strip_h, w):
    cin_p = pad_ref.shape[-1]
    zcol = jnp.zeros((strip_h + 2, 1, cin_p), pad_ref.dtype)
    pad_ref[:, 0:1, :] = zcol
    pad_ref[:, w + 1:w + 2, :] = zcol


# ---------------------------------------------------------------------------
# Kernels
# ---------------------------------------------------------------------------

def _fused_double_kernel(y_ref, sA_ref, tA_ref, wA_ref, bA_ref,
                         sC_ref, tC_ref, wC_ref, bC_ref,
                         h1_ref, sc_ref, st_ref, pad_ref):
    """Conv1 of double_conv and the shortcut conv, sharing one resident read of y.

    Also emits per-strip f32 sum / sumsq of h1 (rows 0/1 of st_ref) for BN-b.
    """
    strip_h, w = h1_ref.shape[1], h1_ref.shape[2]
    cout_p = h1_ref.shape[-1]
    sid = pl.program_id(1)
    ns = pl.num_programs(1)
    r0 = sid * strip_h

    _zero_side_cols(pad_ref, strip_h, w)

    # ---- conv A (first conv of double_conv) ----
    _fill_pad(y_ref, sA_ref[...], tA_ref[...], pad_ref, r0, sid, ns, strip_h, w)
    outA = _conv3x3_from_pad(pad_ref, wA_ref, bA_ref[...], strip_h, w)
    h1_ref[0] = outA.reshape(strip_h, w, cout_p).astype(h1_ref.dtype)
    # f32 partial statistics for BN-b (avoids an extra HBM read of h1 by XLA).
    st_ref[0, 0] = jnp.concatenate(
        [outA.sum(axis=0, keepdims=True),
         (outA * outA).sum(axis=0, keepdims=True),
         jnp.zeros((6, cout_p), jnp.float32)], axis=0)

    # ---- conv C (shortcut conv), reusing the same halo scratch ----
    _fill_pad(y_ref, sC_ref[...], tC_ref[...], pad_ref, r0, sid, ns, strip_h, w)
    outC = _conv3x3_from_pad(pad_ref, wC_ref, bC_ref[...], strip_h, w)
    sc_ref[0] = outC.reshape(strip_h, w, cout_p).astype(sc_ref.dtype)


def _conv_residual_kernel(x_ref, s_ref, t_ref, w_ref, b_ref, res_ref,
                          o_ref, pad_ref):
    """Conv2 of double_conv with the shortcut fused in as the residual add."""
    strip_h, w = o_ref.shape[1], o_ref.shape[2]
    cout_p = o_ref.shape[-1]
    sid = pl.program_id(1)
    ns = pl.num_programs(1)
    r0 = sid * strip_h

    _zero_side_cols(pad_ref, strip_h, w)
    _fill_pad(x_ref, s_ref[...], t_ref[...], pad_ref, r0, sid, ns, strip_h, w)
    out = _conv3x3_from_pad(pad_ref, w_ref, b_ref[...], strip_h, w)
    out = out.reshape(strip_h, w, cout_p) + res_ref[0].astype(jnp.float32)
    o_ref[0] = out.astype(o_ref.dtype)


# ---------------------------------------------------------------------------
# pallas_call wrappers
# ---------------------------------------------------------------------------

def _vmem_limit(est_bytes):
    # Generous headroom over the block/scratch estimate; above the default
    # scoped limit but safely under physical VMEM on v5e/v6e/v7x at test sizes.
    return int(min(max(4 * est_bytes, 48 << 20), 112 << 20))


def _pick_strip(h, w, cin_p, cout_p, budget=6 << 20):
    """Largest strip height dividing h whose per-strip VMEM footprint fits."""
    def strip_bytes(sh):
        pad = (sh + 2) * (w + 2) * cin_p * 2          # bf16 halo scratch
        patch = sh * w * 9 * cin_p * 2                # bf16 patch temp
        acc = sh * w * cout_p * 4                     # f32 accumulator
        outs = 2 * 2 * sh * w * cout_p * 4            # <=2 outs, double buffered
        return pad + patch + acc + outs

    best = 1
    for sh in range(1, h + 1):
        if h % sh == 0 and strip_bytes(sh) <= budget:
            best = sh
    return best


def double_branch_call(y_p, sA, tA, wA, bA, sC, tC, wC, bC, strip_h):
    N, h, w, cin_p = y_p.shape
    cout_p = wA.shape[-1]
    ns = h // strip_h

    img_in = pl.BlockSpec((1, h, w, cin_p), lambda n, s: (n, 0, 0, 0))
    vec_ci = pl.BlockSpec((1, cin_p), lambda n, s: (0, 0))
    vec_co = pl.BlockSpec((1, cout_p), lambda n, s: (0, 0))
    wspec = pl.BlockSpec((9 * cin_p, cout_p), lambda n, s: (0, 0))
    strip_out = pl.BlockSpec((1, strip_h, w, cout_p), lambda n, s: (n, s, 0, 0))
    stat_out = pl.BlockSpec((1, 1, 8, cout_p), lambda n, s: (n, s, 0, 0))

    est = (2 * h * w * cin_p * 4                    # resident y_p (f32, 2 bufs)
           + 2 * 2 * 9 * cin_p * cout_p * 2         # two weight tensors, 2 bufs
           + 2 * 2 * strip_h * w * cout_p * 2       # two bf16 output strips
           + (strip_h + 2) * (w + 2) * cin_p * 2    # halo scratch
           + strip_h * w * 9 * cin_p * 2            # patch temp
           + strip_h * w * cout_p * 4)              # acc temp

    return pl.pallas_call(
        _fused_double_kernel,
        out_shape=(jax.ShapeDtypeStruct((N, h, w, cout_p), jnp.bfloat16),
                   jax.ShapeDtypeStruct((N, h, w, cout_p), jnp.bfloat16),
                   jax.ShapeDtypeStruct((N, ns, 8, cout_p), jnp.float32)),
        grid=(N, ns),
        in_specs=[img_in, vec_ci, vec_ci, wspec, vec_co,
                  vec_ci, vec_ci, wspec, vec_co],
        out_specs=(strip_out, strip_out, stat_out),
        scratch_shapes=[pltpu.VMEM((strip_h + 2, w + 2, cin_p), jnp.bfloat16)],
        compiler_params=pltpu.CompilerParams(
            dimension_semantics=("parallel", "parallel"),
            vmem_limit_bytes=_vmem_limit(est)),
    )(y_p, sA, tA, wA, bA, sC, tC, wC, bC)


def conv_residual_call(x_p, s, t, wP, b, res, strip_h):
    N, h, w, cin_p = x_p.shape
    cout_p = wP.shape[-1]
    ns = h // strip_h

    img_in = pl.BlockSpec((1, h, w, cin_p), lambda n, s_: (n, 0, 0, 0))
    vec_ci = pl.BlockSpec((1, cin_p), lambda n, s_: (0, 0))
    vec_co = pl.BlockSpec((1, cout_p), lambda n, s_: (0, 0))
    wspec = pl.BlockSpec((9 * cin_p, cout_p), lambda n, s_: (0, 0))
    strip_res = pl.BlockSpec((1, strip_h, w, cout_p), lambda n, s_: (n, s_, 0, 0))
    strip_out = pl.BlockSpec((1, strip_h, w, cout_p), lambda n, s_: (n, s_, 0, 0))

    est = (2 * h * w * cin_p * 2                    # resident bf16 h1 (2 bufs)
           + 2 * 9 * cin_p * cout_p * 2             # weights
           + 2 * strip_h * w * cout_p * 2           # bf16 residual strips
           + 2 * strip_h * w * cout_p * 4           # f32 output strips
           + (strip_h + 2) * (w + 2) * cin_p * 2    # halo scratch
           + strip_h * w * 9 * cin_p * 2            # patch temp
           + strip_h * w * cout_p * 4)              # acc temp

    return pl.pallas_call(
        _conv_residual_kernel,
        out_shape=jax.ShapeDtypeStruct((N, h, w, cout_p), jnp.float32),
        grid=(N, ns),
        in_specs=[img_in, vec_ci, vec_ci, wspec, vec_co, strip_res],
        out_specs=strip_out,
        scratch_shapes=[pltpu.VMEM((strip_h + 2, w + 2, cin_p), jnp.bfloat16)],
        compiler_params=pltpu.CompilerParams(
            dimension_semantics=("parallel", "parallel"),
            vmem_limit_bytes=_vmem_limit(est)),
    )(x_p, s, t, wP, b, res)


# ---------------------------------------------------------------------------
# Wrapper-side glue (layout plumbing, BN statistics, maxpool)
# ---------------------------------------------------------------------------

def _round_up(x, m):
    return ((x + m - 1) // m) * m


def _pad_last(a, target):
    pad = target - a.shape[-1]
    if pad == 0:
        return a
    cfg = [(0, 0)] * (a.ndim - 1) + [(0, pad)]
    return jnp.pad(a, cfg)


def _pack_weights(w9, cin_p, cout_p):
    """(9, cin, cout) tap-major weights -> (9*cin_p, cout_p) bf16, ky/kx/ci-major."""
    cin, cout = w9.shape[1], w9.shape[2]
    wk = w9.reshape(3, 3, cin, cout)
    wk = jnp.pad(wk, ((0, 0), (0, 0), (0, cin_p - cin), (0, cout_p - cout)))
    return wk.reshape(9 * cin_p, cout_p).astype(jnp.bfloat16)


def _bn_fold(v, gamma, beta, cp, eps=1e-5):
    """PyTorch BatchNorm2d (training mode): batch stats over (N,H,W), biased
    variance, folded to per-channel (scale, shift), zero-padded to cp lanes."""
    mean = jnp.mean(v, axis=(0, 1, 2))
    var = jnp.mean(jnp.square(v - mean), axis=(0, 1, 2))
    scale = gamma * lax.rsqrt(var + eps)
    shift = beta - mean * scale
    return _pad_last(scale[None, :], cp), _pad_last(shift[None, :], cp)


def en_conv_forward(params, x_nchw):
    x = jnp.transpose(x_nchw, (0, 2, 3, 1)).astype(jnp.float32)  # NCHW -> NHWC
    N, H, W, cin = x.shape
    cout = params["w1"].shape[-1]
    cin_p = _round_up(cin, 128)
    cout_p = _round_up(cout, 128)

    # nn.MaxPool2d(2): 2x2 window, stride 2 (assumes even H, W).
    # TODO(synk): fuse pool + pad + BN-a/BN-c stats into a prologue Pallas kernel.
    y = x.reshape(N, H // 2, 2, W // 2, 2, cin).max(axis=(2, 4))
    h, w = H // 2, W // 2
    y_p = _pad_last(y, cin_p)

    # Fold BN-a / BN-c (batch stats from the real channels), pack weights.
    sA, tA = _bn_fold(y, params["bn_a_g"], params["bn_a_b"], cin_p)
    sC, tC = _bn_fold(y, params["bn_c_g"], params["bn_c_b"], cin_p)
    wA = _pack_weights(params["w1"], cin_p, cout_p)
    wC = _pack_weights(params["w3"], cin_p, cout_p)
    bA = _pad_last(params["b1"][None, :], cout_p)
    bC = _pad_last(params["b3"][None, :], cout_p)

    strip_h = _pick_strip(h, w, cin_p, cout_p)

    # Kernel 1: conv1 of double_conv + shortcut conv (one resident read of y_p),
    # plus per-strip f32 sum/sumsq of h1.
    h1_p, short_p, st = double_branch_call(y_p, sA, tA, wA, bA,
                                           sC, tC, wC, bC, strip_h)

    # BN-b statistics from the kernel's f32 partial sums (no HBM re-read of h1,
    # unaffected by bf16 storage of h1_p).
    cnt = N * h * w
    ssum = st[:, :, 0, :cout].sum(axis=(0, 1))
    ssq = st[:, :, 1, :cout].sum(axis=(0, 1))
    mean = ssum / cnt
    var = jnp.maximum(ssq / cnt - mean * mean, 0.0)
    scaleB = params["bn_b_g"] * lax.rsqrt(var + 1e-5)
    shiftB = params["bn_b_b"] - mean * scaleB
    sB = _pad_last(scaleB[None, :], cout_p)
    tB = _pad_last(shiftB[None, :], cout_p)

    wB = _pack_weights(params["w2"], cout_p, cout_p)
    bB = _pad_last(params["b2"][None, :], cout_p)

    # Kernel 2: conv2 with the shortcut fused in as the residual.
    out_p = conv_residual_call(h1_p, sB, tB, wB, bB, short_p, strip_h)
    return jnp.transpose(out_p[..., :cout], (0, 3, 1, 2))  # back to NCHW


# ---------------------------------------------------------------------------
# Pure-JAX reference + params + self-test
# ---------------------------------------------------------------------------

def en_conv_reference(params, x_nchw):
    """Pure-JAX reference (lax.conv) for a correctness check."""
    x = jnp.transpose(x_nchw, (0, 2, 3, 1)).astype(jnp.float32)
    N, H, W, cin = x.shape
    y = x.reshape(N, H // 2, 2, W // 2, 2, cin).max(axis=(2, 4))

    def bn_relu(v, g, b, eps=1e-5):
        m = jnp.mean(v, axis=(0, 1, 2))
        var = jnp.mean(jnp.square(v - m), axis=(0, 1, 2))
        return jnp.maximum(g * (v - m) * lax.rsqrt(var + eps) + b, 0.0)

    def conv(v, w9, b):
        ci, co = w9.shape[1], w9.shape[2]
        wk = w9.reshape(3, 3, ci, co)
        o = lax.conv_general_dilated(v, wk, (1, 1), "SAME",
                                     dimension_numbers=("NHWC", "HWIO", "NHWC"))
        return o + b

    h1 = conv(bn_relu(y, params["bn_a_g"], params["bn_a_b"]),
              params["w1"], params["b1"])
    d = conv(bn_relu(h1, params["bn_b_g"], params["bn_b_b"]),
             params["w2"], params["b2"])
    s = conv(bn_relu(y, params["bn_c_g"], params["bn_c_b"]),
             params["w3"], params["b3"])
    return jnp.transpose(d + s, (0, 3, 1, 2))


def init_params(key, cin, cout):
    ks = jax.random.split(key, 12)

    def conv_w(k, ci, co):
        fan_in = 9 * ci
        return jax.random.normal(k, (9, ci, co), jnp.float32) / jnp.sqrt(fan_in)

    def conv_b(k, ci, co):
        bound = 1.0 / jnp.sqrt(9 * ci)
        return bound * jax.random.uniform(k, (co,), jnp.float32, -1.0, 1.0)

    return dict(
        bn_a_g=1.0 + 0.1 * jax.random.normal(ks[0], (cin,), jnp.float32),
        bn_a_b=0.1 * jax.random.normal(ks[1], (cin,), jnp.float32),
        bn_b_g=1.0 + 0.1 * jax.random.normal(ks[2], (cout,), jnp.float32),
        bn_b_b=0.1 * jax.random.normal(ks[3], (cout,), jnp.float32),
        bn_c_g=1.0 + 0.1 * jax.random.normal(ks[4], (cin,), jnp.float32),
        bn_c_b=0.1 * jax.random.normal(ks[5], (cin,), jnp.float32),
        w1=conv_w(ks[6], cin, cout), b1=conv_b(ks[7], cin, cout),
        w2=conv_w(ks[8], cout, cout), b2=conv_b(ks[9], cout, cout),
        w3=conv_w(ks[10], cin, cout), b3=conv_b(ks[11], cin, cout),
    )


if __name__ == "__main__":
    key = jax.random.PRNGKey(0)
    kx, kp = jax.random.split(key)
    N, CIN, COUT, H, W = 2, 4, 8, 16, 16

    x = jax.random.normal(kx, (N, CIN, H, W), jnp.float32)
    params = init_params(kp, CIN, COUT)

    out = jax.block_until_ready(en_conv_forward(params, x))
    ref = jax.block_until_ready(en_conv_reference(params, x))

    assert out.shape == (N, COUT, H // 2, W // 2)
    # bf16 MXU operands + bf16 inter-kernel intermediates (f32 accumulation)
    # -> slightly looser tolerance vs the f32 lax.conv reference.
    assert bool(jnp.allclose(out, ref, atol=5e-2, rtol=5e-2))
    print("KERNEL_OK")
</pallas_src>

<mosaic_0001>
module attributes {stable_mosaic.version = 11 : i64} {
  func.func @_fused_double_kernel(%arg0: i32, %arg1: i32, %arg2: memref<1x8x8x128xf32, #tpu.memory_space<vmem>>, %arg3: memref<1x128xf32, #tpu.memory_space<vmem>>, %arg4: memref<1x128xf32, #tpu.memory_space<vmem>>, %arg5: memref<1152x128xbf16, #tpu.memory_space<vmem>>, %arg6: memref<1x128xf32, #tpu.memory_space<vmem>>, %arg7: memref<1x128xf32, #tpu.memory_space<vmem>>, %arg8: memref<1x128xf32, #tpu.memory_space<vmem>>, %arg9: memref<1152x128xbf16, #tpu.memory_space<vmem>>, %arg10: memref<1x128xf32, #tpu.memory_space<vmem>>, %arg11: memref<1x8x8x128xbf16, #tpu.memory_space<vmem>>, %arg12: memref<1x8x8x128xbf16, #tpu.memory_space<vmem>>, %arg13: memref<1x1x8x128xf32, #tpu.memory_space<vmem>>, %arg14: memref<10x10x128xbf16, #tpu.memory_space<vmem>>) attributes {dimension_semantics = [#tpu.dimension_semantics<parallel>, #tpu.dimension_semantics<parallel>], iteration_bounds = array<i64: 2, 1>, scalar_prefetch = 0 : i64, scratch_operands = 1 : i64, tpu.core_type = #tpu.core_type<tc>, window_params = [{transform_indices = @transform_0, window_bounds = array<i64: 1, 8, 8, 128>}, {pipeline_mode = #tpu.pipeline_mode<synchronous>, transform_indices = @transform_1, window_bounds = array<i64: 1, 128>}, {pipeline_mode = #tpu.pipeline_mode<synchronous>, transform_indices = @transform_2, window_bounds = array<i64: 1, 128>}, {pipeline_mode = #tpu.pipeline_mode<synchronous>, transform_indices = @transform_3, window_bounds = array<i64: 1152, 128>}, {pipeline_mode = #tpu.pipeline_mode<synchronous>, transform_indices = @transform_4, window_bounds = array<i64: 1, 128>}, {pipeline_mode = #tpu.pipeline_mode<synchronous>, transform_indices = @transform_5, window_bounds = array<i64: 1, 128>}, {pipeline_mode = #tpu.pipeline_mode<synchronous>, transform_indices = @transform_6, window_bounds = array<i64: 1, 128>}, {pipeline_mode = #tpu.pipeline_mode<synchronous>, transform_indices = @transform_7, window_bounds = array<i64: 1152, 128>}, {pipeline_mode = #tpu.pipeline_mode<synchronous>, transform_indices = @transform_8, window_bounds = array<i64: 1, 128>}, {transform_indices = @transform_9, window_bounds = array<i64: 1, 8, 8, 128>}, {transform_indices = @transform_10, window_bounds = array<i64: 1, 8, 8, 128>}, {transform_indices = @transform_11, window_bounds = array<i64: 1, 1, 8, 128>}]} {
    %c8_i32 = arith.constant 8 : i32
    %0 = arith.muli %arg1, %c8_i32 : i32
    %cst = arith.constant 0.000000e+00 : bf16
    %1 = vector.broadcast %cst : bf16 to vector<10x1x128xbf16>
    %c0 = arith.constant 0 : index
    %c0_0 = arith.constant 0 : index
    %c0_1 = arith.constant 0 : index
    %2 = vector.load %arg14[%c0, %c0_0, %c0_1] : memref<10x10x128xbf16, #tpu.memory_space<vmem>>, vector<10x1x128xbf16>
    tpu.vector_store %arg14[%c0, %c0_0, %c0_1], %1 {strides = array<i32>} : memref<10x10x128xbf16, #tpu.memory_space<vmem>>, vector<10x1x128xbf16>,
    %c0_2 = arith.constant 0 : index
    %c9 = arith.constant 9 : index
    %c0_3 = arith.constant 0 : index
    %3 = vector.load %arg14[%c0_2, %c9, %c0_3] : memref<10x10x128xbf16, #tpu.memory_space<vmem>>, vector<10x1x128xbf16>
    tpu.vector_store %arg14[%c0_2, %c9, %c0_3], %1 {strides = array<i32>} : memref<10x10x128xbf16, #tpu.memory_space<vmem>>, vector<10x1x128xbf16>,
    %c0_4 = arith.constant 0 : index
    %c0_5 = arith.constant 0 : index
    %4 = vector.load %arg3[%c0_4, %c0_5] : memref<1x128xf32, #tpu.memory_space<vmem>>, vector<1x128xf32>
    %c0_6 = arith.constant 0 : index
    %c0_7 = arith.constant 0 : index
    %5 = vector.load %arg4[%c0_6, %c0_7] : memref<1x128xf32, #tpu.memory_space<vmem>>, vector<1x128xf32>
    %c0_8 = arith.constant 0 : index
    %6 = arith.index_cast %0 : i32 to index
    %c0_9 = arith.constant 0 : index
    %c0_10 = arith.constant 0 : index
    %7 = vector.load %arg2[%c0_8, %6, %c0_9, %c0_10] : memref<1x8x8x128xf32, #tpu.memory_space<vmem>>, vector<1x8x8x128xf32>
    %8 = vector.shape_cast %7 : vector<1x8x8x128xf32> to vector<8x8x128xf32>
    %9 = vector.shape_cast %4 : vector<1x128xf32> to vector<1x1x128xf32>
    %10 = vector.broadcast %9 : vector<1x1x128xf32> to vector<8x8x128xf32>
    %11 = arith.mulf %8, %10 : vector<8x8x128xf32>
    %12 = vector.shape_cast %5 : vector<1x128xf32> to vector<1x1x128xf32>
    %13 = vector.broadcast %12 : vector<1x1x128xf32> to vector<8x8x128xf32>
    %14 = arith.addf %11, %13 : vector<8x8x128xf32>
    %cst_11 = arith.constant 0.000000e+00 : f32
    %15 = vector.broadcast %cst_11 : f32 to vector<8x8x128xf32>
    %16 = arith.maximumf %14, %15 : vector<8x8x128xf32>
    %17 = arith.truncf %16 : vector<8x8x128xf32> to vector<8x8x128xbf16>
    %c1 = arith.constant 1 : index
    %c1_12 = arith.constant 1 : index
    %c0_13 = arith.constant 0 : index
    %18 = vector.load %arg14[%c1, %c1_12, %c0_13] : memref<10x10x128xbf16, #tpu.memory_space<vmem>>, vector<8x8x128xbf16>
    tpu.vector_store %arg14[%c1, %c1_12, %c0_13], %17 {strides = array<i32>} : memref<10x10x128xbf16, #tpu.memory_space<vmem>>, vector<8x8x128xbf16>,
    %cst_14 = arith.constant 0.000000e+00 : bf16
    %19 = vector.broadcast %cst_14 : bf16 to vector<1x8x128xbf16>
    %c0_i32 = arith.constant 0 : i32
    %20 = arith.cmpi eq, %arg1, %c0_i32 : i32
    %21 = arith.extui %20 : i1 to i32
    %c0_i32_15 = arith.constant 0 : i32
    %22 = arith.cmpi ne, %21, %c0_i32_15 : i32
    scf.if %22 {
      %c0_84 = arith.constant 0 : index
      %c1_85 = arith.constant 1 : index
      %c0_86 = arith.constant 0 : index
      %108 = vector.load %arg14[%c0_84, %c1_85, %c0_86] : memref<10x10x128xbf16, #tpu.memory_space<vmem>>, vector<1x8x128xbf16>
      tpu.vector_store %arg14[%c0_84, %c1_85, %c0_86], %19 {strides = array<i32>} : memref<10x10x128xbf16, #tpu.memory_space<vmem>>, vector<1x8x128xbf16>,
    } else {
    }
    %c0_i32_16 = arith.constant 0 : i32
    %23 = arith.cmpi sgt, %arg1, %c0_i32_16 : i32
    %24 = arith.extui %23 : i1 to i32
    %c0_i32_17 = arith.constant 0 : i32
    %25 = arith.cmpi ne, %24, %c0_i32_17 : i32
    scf.if %25 {
      %c1_i32 = arith.constant 1 : i32
      %108 = arith.subi %0, %c1_i32 : i32
      %c0_84 = arith.constant 0 : index
      %109 = arith.index_cast %108 : i32 to index
      %c0_85 = arith.constant 0 : index
      %c0_86 = arith.constant 0 : index
      %110 = vector.load %arg2[%c0_84, %109, %c0_85, %c0_86] : memref<1x8x8x128xf32, #tpu.memory_space<vmem>>, vector<1x1x8x128xf32>
      %111 = vector.shape_cast %110 : vector<1x1x8x128xf32> to vector<1x8x128xf32>
      %112 = vector.shape_cast %4 : vector<1x128xf32> to vector<1x1x128xf32>
      %113 = vector.broadcast %112 : vector<1x1x128xf32> to vector<1x8x128xf32>
      %114 = arith.mulf %111, %113 : vector<1x8x128xf32>
      %115 = vector.shape_cast %5 : vector<1x128xf32> to vector<1x1x128xf32>
      %116 = vector.broadcast %115 : vector<1x1x128xf32> to vector<1x8x128xf32>
      %117 = arith.addf %114, %116 : vector<1x8x128xf32>
      %cst_87 = arith.constant 0.000000e+00 : f32
      %118 = vector.broadcast %cst_87 : f32 to vector<1x8x128xf32>
      %119 = arith.maximumf %117, %118 : vector<1x8x128xf32>
      %120 = arith.truncf %119 : vector<1x8x128xf32> to vector<1x8x128xbf16>
      %c0_88 = arith.constant 0 : index
      %c1_89 = arith.constant 1 : index
      %c0_90 = arith.constant 0 : index
      %121 = vector.load %arg14[%c0_88, %c1_89, %c0_90] : memref<10x10x128xbf16, #tpu.memory_space<vmem>>, vector<1x8x128xbf16>
      tpu.vector_store %arg14[%c0_88, %c1_89, %c0_90], %120 {strides = array<i32>} : memref<10x10x128xbf16, #tpu.memory_space<vmem>>, vector<1x8x128xbf16>,
    } else {
    }
    %c0_i32_18 = arith.constant 0 : i32
    %26 = arith.cmpi eq, %arg1, %c0_i32_18 : i32
    %27 = arith.extui %26 : i1 to i32
    %c0_i32_19 = arith.constant 0 : i32
    %28 = arith.cmpi ne, %27, %c0_i32_19 : i32
    scf.if %28 {
      %c9_84 = arith.constant 9 : index
      %c1_85 = arith.constant 1 : index
      %c0_86 = arith.constant 0 : index
      %108 = vector.load %arg14[%c9_84, %c1_85, %c0_86] : memref<10x10x128xbf16, #tpu.memory_space<vmem>>, vector<1x8x128xbf16>
      tpu.vector_store %arg14[%c9_84, %c1_85, %c0_86], %19 {strides = array<i32>} : memref<10x10x128xbf16, #tpu.memory_space<vmem>>, vector<1x8x128xbf16>,
    } else {
    }
    %c0_i32_20 = arith.constant 0 : i32
    %29 = arith.cmpi slt, %arg1, %c0_i32_20 : i32
    %30 = arith.extui %29 : i1 to i32
    %c0_i32_21 = arith.constant 0 : i32
    %31 = arith.cmpi ne, %30, %c0_i32_21 : i32
    scf.if %31 {
      %c8_i32_84 = arith.constant 8 : i32
      %108 = arith.addi %0, %c8_i32_84 : i32
      %c0_85 = arith.constant 0 : index
      %109 = arith.index_cast %108 : i32 to index
      %c0_86 = arith.constant 0 : index
      %c0_87 = arith.constant 0 : index
      %110 = vector.load %arg2[%c0_85, %109, %c0_86, %c0_87] : memref<1x8x8x128xf32, #tpu.memory_space<vmem>>, vector<1x1x8x128xf32>
      %111 = vector.shape_cast %110 : vector<1x1x8x128xf32> to vector<1x8x128xf32>
      %112 = vector.shape_cast %4 : vector<1x128xf32> to vector<1x1x128xf32>
      %113 = vector.broadcast %112 : vector<1x1x128xf32> to vector<1x8x128xf32>
      %114 = arith.mulf %111, %113 : vector<1x8x128xf32>
      %115 = vector.shape_cast %5 : vector<1x128xf32> to vector<1x1x128xf32>
      %116 = vector.broadcast %115 : vector<1x1x128xf32> to vector<1x8x128xf32>
      %117 = arith.addf %114, %116 : vector<1x8x128xf32>
      %cst_88 = arith.constant 0.000000e+00 : f32
      %118 = vector.broadcast %cst_88 : f32 to vector<1x8x128xf32>
      %119 = arith.maximumf %117, %118 : vector<1x8x128xf32>
      %120 = arith.truncf %119 : vector<1x8x128xf32> to vector<1x8x128xbf16>
      %c9_89 = arith.constant 9 : index
      %c1_90 = arith.constant 1 : index
      %c0_91 = arith.constant 0 : index
      %121 = vector.load %arg14[%c9_89, %c1_90, %c0_91] : memref<10x10x128xbf16, #tpu.memory_space<vmem>>, vector<1x8x128xbf16>
      tpu.vector_store %arg14[%c9_89, %c1_90, %c0_91], %120 {strides = array<i32>} : memref<10x10x128xbf16, #tpu.memory_space<vmem>>, vector<1x8x128xbf16>,
    } else {
    }
    %c0_22 = arith.constant 0 : index
    %c0_23 = arith.constant 0 : index
    %32 = vector.load %arg6[%c0_22, %c0_23] : memref<1x128xf32, #tpu.memory_space<vmem>>, vector<1x128xf32>
    %c0_24 = arith.constant 0 : index
    %c0_25 = arith.constant 0 : index
    %c0_26 = arith.constant 0 : index
    %33 = vector.load %arg14[%c0_24, %c0_25, %c0_26] : memref<10x10x128xbf16, #tpu.memory_space<vmem>>, vector<10x8x128xbf16>
    %c0_27 = arith.constant 0 : index
    %c1_28 = arith.constant 1 : index
    %c0_29 = arith.constant 0 : index
    %34 = vector.load %arg14[%c0_27, %c1_28, %c0_29] : memref<10x10x128xbf16, #tpu.memory_space<vmem>>, vector<10x8x128xbf16>
    %c0_30 = arith.constant 0 : index
    %c2 = arith.constant 2 : index
    %c0_31 = arith.constant 0 : index
    %35 = vector.load %arg14[%c0_30, %c2, %c0_31] : memref<10x10x128xbf16, #tpu.memory_space<vmem>>, vector<10x8x128xbf16>
    %36 = tpu.concatenate %33, %34, %35 in 2 : vector<10x8x128xbf16>, vector<10x8x128xbf16>, vector<10x8x128xbf16> -> vector<10x8x384xbf16>
    %37 = vector.extract_strided_slice %36 {offsets = [0, 0, 0], sizes = [8, 8, 384], strides = [1, 1, 1]} : vector<10x8x384xbf16> to vector<8x8x384xbf16>
    %38 = vector.extract_strided_slice %36 {offsets = [1, 0, 0], sizes = [8, 8, 384], strides = [1, 1, 1]} : vector<10x8x384xbf16> to vector<8x8x384xbf16>
    %39 = vector.extract_strided_slice %36 {offsets = [2, 0, 0], sizes = [8, 8, 384], strides = [1, 1, 1]} : vector<10x8x384xbf16> to vector<8x8x384xbf16>
    %40 = tpu.concatenate %37, %38, %39 in 2 : vector<8x8x384xbf16>, vector<8x8x384xbf16>, vector<8x8x384xbf16> -> vector<8x8x1152xbf16>
    %41 = vector.shape_cast %40 : vector<8x8x1152xbf16> to vector<64x1152xbf16>
    %c0_32 = arith.constant 0 : index
    %c0_33 = arith.constant 0 : index
    %42 = vector.load %arg5[%c0_32, %c0_33] : memref<1152x128xbf16, #tpu.memory_space<vmem>>, vector<1152x128xbf16>
    %cst_34 = arith.constant dense<0.000000e+00> : vector<64x128xf32>
    %43 = tpu.matmul %41, %42, %cst_34 {dimension_numbers = #tpu.dot_dimension_numbers<[1], [0], [0], [1], [0, 0, 1, 1], [], []>} : vector<64x1152xbf16>, vector<1152x128xbf16>, vector<64x128xf32> -> vector<64x128xf32>
    %44 = vector.broadcast %32 : vector<1x128xf32> to vector<64x128xf32>
    %45 = arith.addf %43, %44 : vector<64x128xf32>
    %46 = vector.shape_cast %45 : vector<64x128xf32> to vector<8x8x128xf32>
    %47 = arith.truncf %46 : vector<8x8x128xf32> to vector<8x8x128xbf16>
    %c0_35 = arith.constant 0 : index
    %c0_36 = arith.constant 0 : index
    %c0_37 = arith.constant 0 : index
    %c0_38 = arith.constant 0 : index
    %48 = vector.load %arg11[%c0_35, %c0_36, %c0_37, %c0_38] : memref<1x8x8x128xbf16, #tpu.memory_space<vmem>>, vector<1x8x8x128xbf16>
    %49 = vector.shape_cast %48 : vector<1x8x8x128xbf16> to vector<8x8x128xbf16>
    %50 = vector.shape_cast %47 : vector<8x8x128xbf16> to vector<1x8x8x128xbf16>
    tpu.vector_store %arg11[%c0_35, %c0_36, %c0_37, %c0_38], %50 {strides = array<i32>} : memref<1x8x8x128xbf16, #tpu.memory_space<vmem>>, vector<1x8x8x128xbf16>,
    %cst_39 = arith.constant dense<0.000000e+00> : vector<128xf32>
    %51 = vector.multi_reduction <add>, %45, %cst_39 [0] : vector<64x128xf32> to vector<128xf32>
    %52 = vector.shape_cast %51 : vector<128xf32> to vector<1x128xf32>
    %53 = arith.mulf %45, %45 : vector<64x128xf32>
    %cst_40 = arith.constant dense<0.000000e+00> : vector<128xf32>
    %54 = vector.multi_reduction <add>, %53, %cst_40 [0] : vector<64x128xf32> to vector<128xf32>
    %55 = vector.shape_cast %54 : vector<128xf32> to vector<1x128xf32>
    %cst_41 = arith.constant 0.000000e+00 : f32
    %56 = vector.broadcast %cst_41 : f32 to vector<6x128xf32>
    %57 = tpu.concatenate %52, %55, %56 in 0 : vector<1x128xf32>, vector<1x128xf32>, vector<6x128xf32> -> vector<8x128xf32>
    %c0_42 = arith.constant 0 : index
    %c0_43 = arith.constant 0 : index
    %c0_44 = arith.constant 0 : index
    %c0_45 = arith.constant 0 : index
    %58 = vector.load %arg13[%c0_42, %c0_43, %c0_44, %c0_45] : memref<1x1x8x128xf32, #tpu.memory_space<vmem>>, vector<1x1x8x128xf32>
    %59 = vector.shape_cast %58 : vector<1x1x8x128xf32> to vector<8x128xf32>
    %60 = vector.shape_cast %57 : vector<8x128xf32> to vector<1x1x8x128xf32>
    tpu.vector_store %arg13[%c0_42, %c0_43, %c0_44, %c0_45], %60 {strides = array<i32>} : memref<1x1x8x128xf32, #tpu.memory_space<vmem>>, vector<1x1x8x128xf32>,
    %c0_46 = arith.constant 0 : index
    %c0_47 = arith.constant 0 : index
    %61 = vector.load %arg7[%c0_46, %c0_47] : memref<1x128xf32, #tpu.memory_space<vmem>>, vector<1x128xf32>
    %c0_48 = arith.constant 0 : index
    %c0_49 = arith.constant 0 : index
    %62 = vector.load %arg8[%c0_48, %c0_49] : memref<1x128xf32, #tpu.memory_space<vmem>>, vector<1x128xf32>
    %c0_50 = arith.constant 0 : index
    %63 = arith.index_cast %0 : i32 to index
    %c0_51 = arith.constant 0 : index
    %c0_52 = arith.constant 0 : index
    %64 = vector.load %arg2[%c0_50, %63, %c0_51, %c0_52] : memref<1x8x8x128xf32, #tpu.memory_space<vmem>>, vector<1x8x8x128xf32>
    %65 = vector.shape_cast %64 : vector<1x8x8x128xf32> to vector<8x8x128xf32>
    %66 = vector.shape_cast %61 : vector<1x128xf32> to vector<1x1x128xf32>
    %67 = vector.broadcast %66 : vector<1x1x128xf32> to vector<8x8x128xf32>
    %68 = arith.mulf %65, %67 : vector<8x8x128xf32>
    %69 = vector.shape_cast %62 : vector<1x128xf32> to vector<1x1x128xf32>
    %70 = vector.broadcast %69 : vector<1x1x128xf32> to vector<8x8x128xf32>
    %71 = arith.addf %68, %70 : vector<8x8x128xf32>
    %cst_53 = arith.constant 0.000000e+00 : f32
    %72 = vector.broadcast %cst_53 : f32 to vector<8x8x128xf32>
    %73 = arith.maximumf %71, %72 : vector<8x8x128xf32>
    %74 = arith.truncf %73 : vector<8x8x128xf32> to vector<8x8x128xbf16>
    %c1_54 = arith.constant 1 : index
    %c1_55 = arith.constant 1 : index
    %c0_56 = arith.constant 0 : index
    %75 = vector.load %arg14[%c1_54, %c1_55, %c0_56] : memref<10x10x128xbf16, #tpu.memory_space<vmem>>, vector<8x8x128xbf16>
    tpu.vector_store %arg14[%c1_54, %c1_55, %c0_56], %74 {strides = array<i32>} : memref<10x10x128xbf16, #tpu.memory_space<vmem>>, vector<8x8x128xbf16>,
    %cst_57 = arith.constant 0.000000e+00 : bf16
    %76 = vector.broadcast %cst_57 : bf16 to vector<1x8x128xbf16>
    %c0_i32_58 = arith.constant 0 : i32
    %77 = arith.cmpi eq, %arg1, %c0_i32_58 : i32
    %78 = arith.extui %77 : i1 to i32
    %c0_i32_59 = arith.constant 0 : i32
    %79 = arith.cmpi ne, %78, %c0_i32_59 : i32
    scf.if %79 {
      %c0_84 = arith.constant 0 : index
      %c1_85 = arith.constant 1 : index
      %c0_86 = arith.constant 0 : index
      %108 = vector.load %arg14[%c0_84, %c1_85, %c0_86] : memref<10x10x128xbf16, #tpu.memory_space<vmem>>, vector<1x8x128xbf16>
      tpu.vector_store %arg14[%c0_84, %c1_85, %c0_86], %76 {strides = array<i32>} : memref<10x10x128xbf16, #tpu.memory_space<vmem>>, vector<1x8x128xbf16>,
    } else {
    }
    %c0_i32_60 = arith.constant 0 : i32
    %80 = arith.cmpi sgt, %arg1, %c0_i32_60 : i32
    %81 = arith.extui %80 : i1 to i32
    %c0_i32_61 = arith.constant 0 : i32
    %82 = arith.cmpi ne, %81, %c0_i32_61 : i32
    scf.if %82 {
      %c1_i32 = arith.constant 1 : i32
      %108 = arith.subi %0, %c1_i32 : i32
      %c0_84 = arith.constant 0 : index
      %109 = arith.index_cast %108 : i32 to index
      %c0_85 = arith.constant 0 : index
      %c0_86 = arith.constant 0 : index
      %110 = vector.load %arg2[%c0_84, %109, %c0_85, %c0_86] : memref<1x8x8x128xf32, #tpu.memory_space<vmem>>, vector<1x1x8x128xf32>
      %111 = vector.shape_cast %110 : vector<1x1x8x128xf32> to vector<1x8x128xf32>
      %112 = vector.shape_cast %61 : vector<1x128xf32> to vector<1x1x128xf32>
      %113 = vector.broadcast %112 : vector<1x1x128xf32> to vector<1x8x128xf32>
      %114 = arith.mulf %111, %113 : vector<1x8x128xf32>
      %115 = vector.shape_cast %62 : vector<1x128xf32> to vector<1x1x128xf32>
      %116 = vector.broadcast %115 : vector<1x1x128xf32> to vector<1x8x128xf32>
      %117 = arith.addf %114, %116 : vector<1x8x128xf32>
      %cst_87 = arith.constant 0.000000e+00 : f32
      %118 = vector.broadcast %cst_87 : f32 to vector<1x8x128xf32>
      %119 = arith.maximumf %117, %118 : vector<1x8x128xf32>
      %120 = arith.truncf %119 : vector<1x8x128xf32> to vector<1x8x128xbf16>
      %c0_88 = arith.constant 0 : index
      %c1_89 = arith.constant 1 : index
      %c0_90 = arith.constant 0 : index
      %121 = vector.load %arg14[%c0_88, %c1_89, %c0_90] : memref<10x10x128xbf16, #tpu.memory_space<vmem>>, vector<1x8x128xbf16>
      tpu.vector_store %arg14[%c0_88, %c1_89, %c0_90], %120 {strides = array<i32>} : memref<10x10x128xbf16, #tpu.memory_space<vmem>>, vector<1x8x128xbf16>,
    } else {
    }
    %c0_i32_62 = arith.constant 0 : i32
    %83 = arith.cmpi eq, %arg1, %c0_i32_62 : i32
    %84 = arith.extui %83 : i1 to i32
    %c0_i32_63 = arith.constant 0 : i32
    %85 = arith.cmpi ne, %84, %c0_i32_63 : i32
    scf.if %85 {
      %c9_84 = arith.constant 9 : index
      %c1_85 = arith.constant 1 : index
      %c0_86 = arith.constant 0 : index
      %108 = vector.load %arg14[%c9_84, %c1_85, %c0_86] : memref<10x10x128xbf16, #tpu.memory_space<vmem>>, vector<1x8x128xbf16>
      tpu.vector_store %arg14[%c9_84, %c1_85, %c0_86], %76 {strides = array<i32>} : memref<10x10x128xbf16, #tpu.memory_space<vmem>>, vector<1x8x128xbf16>,
    } else {
    }
    %c0_i32_64 = arith.constant 0 : i32
    %86 = arith.cmpi slt, %arg1, %c0_i32_64 : i32
    %87 = arith.extui %86 : i1 to i32
    %c0_i32_65 = arith.constant 0 : i32
    %88 = arith.cmpi ne, %87, %c0_i32_65 : i32
    scf.if %88 {
      %c8_i32_84 = arith.constant 8 : i32
      %108 = arith.addi %0, %c8_i32_84 : i32
      %c0_85 = arith.constant 0 : index
      %109 = arith.index_cast %108 : i32 to index
      %c0_86 = arith.constant 0 : index
      %c0_87 = arith.constant 0 : index
      %110 = vector.load %arg2[%c0_85, %109, %c0_86, %c0_87] : memref<1x8x8x128xf32, #tpu.memory_space<vmem>>, vector<1x1x8x128xf32>
      %111 = vector.shape_cast %110 : vector<1x1x8x128xf32> to vector<1x8x128xf32>
      %112 = vector.shape_cast %61 : vector<1x128xf32> to vector<1x1x128xf32>
      %113 = vector.broadcast %112 : vector<1x1x128xf32> to vector<1x8x128xf32>
      %114 = arith.mulf %111, %113 : vector<1x8x128xf32>
      %115 = vector.shape_cast %62 : vector<1x128xf32> to vector<1x1x128xf32>
      %116 = vector.broadcast %115 : vector<1x1x128xf32> to vector<1x8x128xf32>
      %117 = arith.addf %114, %116 : vector<1x8x128xf32>
      %cst_88 = arith.constant 0.000000e+00 : f32
      %118 = vector.broadcast %cst_88 : f32 to vector<1x8x128xf32>
      %119 = arith.maximumf %117, %118 : vector<1x8x128xf32>
      %120 = arith.truncf %119 : vector<1x8x128xf32> to vector<1x8x128xbf16>
      %c9_89 = arith.constant 9 : index
      %c1_90 = arith.constant 1 : index
      %c0_91 = arith.constant 0 : index
      %121 = vector.load %arg14[%c9_89, %c1_90, %c0_91] : memref<10x10x128xbf16, #tpu.memory_space<vmem>>, vector<1x8x128xbf16>
      tpu.vector_store %arg14[%c9_89, %c1_90, %c0_91], %120 {strides = array<i32>} : memref<10x10x128xbf16, #tpu.memory_space<vmem>>, vector<1x8x128xbf16>,
    } else {
    }
    %c0_66 = arith.constant 0 : index
    %c0_67 = arith.constant 0 : index
    %89 = vector.load %arg10[%c0_66, %c0_67] : memref<1x128xf32, #tpu.memory_space<vmem>>, vector<1x128xf32>
    %c0_68 = arith.constant 0 : index
    %c0_69 = arith.constant 0 : index
    %c0_70 = arith.constant 0 : index
    %90 = vector.load %arg14[%c0_68, %c0_69, %c0_70] : memref<10x10x128xbf16, #tpu.memory_space<vmem>>, vector<10x8x128xbf16>
    %c0_71 = arith.constant 0 : index
    %c1_72 = arith.constant 1 : index
    %c0_73 = arith.constant 0 : index
    %91 = vector.load %arg14[%c0_71, %c1_72, %c0_73] : memref<10x10x128xbf16, #tpu.memory_space<vmem>>, vector<10x8x128xbf16>
    %c0_74 = arith.constant 0 : index
    %c2_75 = arith.constant 2 : index
    %c0_76 = arith.constant 0 : index
    %92 = vector.load %arg14[%c0_74, %c2_75, %c0_76] : memref<10x10x128xbf16, #tpu.memory_space<vmem>>, vector<10x8x128xbf16>
    %93 = tpu.concatenate %90, %91, %92 in 2 : vector<10x8x128xbf16>, vector<10x8x128xbf16>, vector<10x8x128xbf16> -> vector<10x8x384xbf16>
    %94 = vector.extract_strided_slice %93 {offsets = [0, 0, 0], sizes = [8, 8, 384], strides = [1, 1, 1]} : vector<10x8x384xbf16> to vector<8x8x384xbf16>
    %95 = vector.extract_strided_slice %93 {offsets = [1, 0, 0], sizes = [8, 8, 384], strides = [1, 1, 1]} : vector<10x8x384xbf16> to vector<8x8x384xbf16>
    %96 = vector.extract_strided_slice %93 {offsets = [2, 0, 0], sizes = [8, 8, 384], strides = [1, 1, 1]} : vector<10x8x384xbf16> to vector<8x8x384xbf16>
    %97 = tpu.concatenate %94, %95, %96 in 2 : vector<8x8x384xbf16>, vector<8x8x384xbf16>, vector<8x8x384xbf16> -> vector<8x8x1152xbf16>
    %98 = vector.shape_cast %97 : vector<8x8x1152xbf16> to vector<64x1152xbf16>
    %c0_77 = arith.constant 0 : index
    %c0_78 = arith.constant 0 : index
    %99 = vector.load %arg9[%c0_77, %c0_78] : memref<1152x128xbf16, #tpu.memory_space<vmem>>, vector<1152x128xbf16>
    %cst_79 = arith.constant dense<0.000000e+00> : vector<64x128xf32>
    %100 = tpu.matmul %98, %99, %cst_79 {dimension_numbers = #tpu.dot_dimension_numbers<[1], [0], [0], [1], [0, 0, 1, 1], [], []>} : vector<64x1152xbf16>, vector<1152x128xbf16>, vector<64x128xf32> -> vector<64x128xf32>
    %101 = vector.broadcast %89 : vector<1x128xf32> to vector<64x128xf32>
    %102 = arith.addf %100, %101 : vector<64x128xf32>
    %103 = vector.shape_cast %102 : vector<64x128xf32> to vector<8x8x128xf32>
    %104 = arith.truncf %103 : vector<8x8x128xf32> to vector<8x8x128xbf16>
    %c0_80 = arith.constant 0 : index
    %c0_81 = arith.constant 0 : index
    %c0_82 = arith.constant 0 : index
    %c0_83 = arith.constant 0 : index
    %105 = vector.load %arg12[%c0_80, %c0_81, %c0_82, %c0_83] : memref<1x8x8x128xbf16, #tpu.memory_space<vmem>>, vector<1x8x8x128xbf16>
    %106 = vector.shape_cast %105 : vector<1x8x8x128xbf16> to vector<8x8x128xbf16>
    %107 = vector.shape_cast %104 : vector<8x8x128xbf16> to vector<1x8x8x128xbf16>
    tpu.vector_store %arg12[%c0_80, %c0_81, %c0_82, %c0_83], %107 {strides = array<i32>} : memref<1x8x8x128xbf16, #tpu.memory_space<vmem>>, vector<1x8x8x128xbf16>,
    return
  }
  func.func @transform_0(%arg0: i32, %arg1: i32) -> (i32, i32, i32, i32) {
    %c0_i32 = arith.constant 0 : i32
    %c0_i32_0 = arith.constant 0 : i32
    %c0_i32_1 = arith.constant 0 : i32
    %c0_i32_2 = arith.constant 0 : i32
    return %arg0, %c0_i32, %c0_i32_0, %c0_i32_1 : i32, i32, i32, i32
  }
  func.func @transform_1(%arg0: i32, %arg1: i32) -> (i32, i32) {
    %c0_i32 = arith.constant 0 : i32
    %c0_i32_0 = arith.constant 0 : i32
    %c0_i32_1 = arith.constant 0 : i32
    return %c0_i32, %c0_i32_0 : i32, i32
  }
  func.func @transform_2(%arg0: i32, %arg1: i32) -> (i32, i32) {
    %c0_i32 = arith.constant 0 : i32
    %c0_i32_0 = arith.constant 0 : i32
    %c0_i32_1 = arith.constant 0 : i32
    return %c0_i32, %c0_i32_0 : i32, i32
  }
  func.func @transform_3(%arg0: i32, %arg1: i32) -> (i32, i32) {
    %c0_i32 = arith.constant 0 : i32
    %c0_i32_0 = arith.constant 0 : i32
    %c0_i32_1 = arith.constant 0 : i32
    return %c0_i32, %c0_i32_0 : i32, i32
  }
  func.func @transform_4(%arg0: i32, %arg1: i32) -> (i32, i32) {
    %c0_i32 = arith.constant 0 : i32
    %c0_i32_0 = arith.constant 0 : i32
    %c0_i32_1 = arith.constant 0 : i32
    return %c0_i32, %c0_i32_0 : i32, i32
  }
  func.func @transform_5(%arg0: i32, %arg1: i32) -> (i32, i32) {
    %c0_i32 = arith.constant 0 : i32
    %c0_i32_0 = arith.constant 0 : i32
    %c0_i32_1 = arith.constant 0 : i32
    return %c0_i32, %c0_i32_0 : i32, i32
  }
  func.func @transform_6(%arg0: i32, %arg1: i32) -> (i32, i32) {
    %c0_i32 = arith.constant 0 : i32
    %c0_i32_0 = arith.constant 0 : i32
    %c0_i32_1 = arith.constant 0 : i32
    return %c0_i32, %c0_i32_0 : i32, i32
  }
  func.func @transform_7(%arg0: i32, %arg1: i32) -> (i32, i32) {
    %c0_i32 = arith.constant 0 : i32
    %c0_i32_0 = arith.constant 0 : i32
    %c0_i32_1 = arith.constant 0 : i32
    return %c0_i32, %c0_i32_0 : i32, i32
  }
  func.func @transform_8(%arg0: i32, %arg1: i32) -> (i32, i32) {
    %c0_i32 = arith.constant 0 : i32
    %c0_i32_0 = arith.constant 0 : i32
    %c0_i32_1 = arith.constant 0 : i32
    return %c0_i32, %c0_i32_0 : i32, i32
  }
  func.func @transform_9(%arg0: i32, %arg1: i32) -> (i32, i32, i32, i32) {
    %c0_i32 = arith.constant 0 : i32
    %c0_i32_0 = arith.constant 0 : i32
    %c0_i32_1 = arith.constant 0 : i32
    return %arg0, %arg1, %c0_i32, %c0_i32_0 : i32, i32, i32, i32
  }
  func.func @transform_10(%arg0: i32, %arg1: i32) -> (i32, i32, i32, i32) {
    %c0_i32 = arith.constant 0 : i32
    %c0_i32_0 = arith.constant 0 : i32
    %c0_i32_1 = arith.constant 0 : i32
    return %arg0, %arg1, %c0_i32, %c0_i32_0 : i32, i32, i32, i32
  }
  func.func @transform_11(%arg0: i32, %arg1: i32) -> (i32, i32, i32, i32) {
    %c0_i32 = arith.constant 0 : i32
    %c0_i32_0 = arith.constant 0 : i32
    %c0_i32_1 = arith.constant 0 : i32
    return %arg0, %arg1, %c0_i32, %c0_i32_0 : i32, i32, i32, i32
  }
}

</mosaic_0001>

<llo_original>
// kernel: tpu_custom_call.1
$region0: #{tpu_custom_call.1}
  #allocation0 [shape = 'u32[]', space=smem, size = 0x4, offset = 0x4, fixed_abs, tag = 'smem constant byte address 0x4 - core index']
  #allocation1 [shape = 'u32[144,128]{1,0:T(1,128)}', space=vmem, size = 0x12000, scoped, tag = 'internal scratch']
  #allocation2 [shape = 'bf16[10,10,128]{2,1,0:T(8,128)(2,1)}', space=vmem, size = 0xa000, scoped, tag = 'scratch operand']
  %s0 = inlined_call_operand.hbm [shape: f32[2,8,8,128], index: 0, kind: input, shape index: {}]
  %s1 = inlined_call_operand.vmem [shape: f32[1,128], index: 1, kind: input, shape index: {}]
  %s2 = inlined_call_operand.vmem [shape: f32[1,128], index: 2, kind: input, shape index: {}]
  %s3 = inlined_call_operand.hbm [shape: bf16[1152,128], index: 3, kind: input, shape index: {}]
  %s4 = inlined_call_operand.vmem [shape: f32[1,128], index: 4, kind: input, shape index: {}]
  %s5 = inlined_call_operand.vmem [shape: f32[1,128], index: 5, kind: input, shape index: {}]
  %s6 = inlined_call_operand.vmem [shape: f32[1,128], index: 6, kind: input, shape index: {}]
  %s7 = inlined_call_operand.hbm [shape: bf16[1152,128], index: 7, kind: input, shape index: {}]
  %s8 = inlined_call_operand.vmem [shape: f32[1,128], index: 8, kind: input, shape index: {}]
  %s9 = inlined_call_operand.hbm [shape: bf16[2,8,8,128], index: 9, kind: output, shape index: {0}]
  %s10 = inlined_call_operand.hbm [shape: bf16[2,8,8,128], index: 10, kind: output, shape index: {1}]
  %s11 = inlined_call_operand.hbm [shape: f32[2,1,8,128], index: 11, kind: output, shape index: {2}]
  %12 = xla_tuple %s9, %s10, %s11
  %s13 = sld [smem:[#allocation0]]
  $region129: #{tpu_custom_call.1} parent=0
    _
  %s15 = ssub.s32 1, %s13
  %s16 = scalar_select 0, %s15, %s13
  $region1: #{tpu_custom_call.1} parent=0
    #allocation3 [shape = 'u8[65536]{0}', space=vmem, size = 0x10000, scoped, tag = 'input window, operand 0']
    #allocation4 [shape = 's32[2]{0}', space=sflag, size = 0x8, scoped, tag = 'scoped memory for tpu_custom_call.1']
    #allocation5 [shape = 's32[2]{0}', space=sflag, size = 0x8, scoped, tag = 'scoped memory for tpu_custom_call.1']
    #allocation6 [shape = 'u8[294912]{0}', space=vmem, size = 0x48000, scoped, tag = 'input window, operand 3, single buffered']
    #allocation7 [shape = 's32[1]{0}', space=sflag, size = 0x4, scoped, tag = 'scoped memory for tpu_custom_call.1']
    #allocation8 [shape = 'u8[294912]{0}', space=vmem, size = 0x48000, scoped, tag = 'input window, operand 7, single buffered']
    #allocation9 [shape = 'u8[32768]{0}', space=vmem, size = 0x8000, scoped, tag = 'output window, operand 0']
    #allocation10 [shape = 'u8[32768]{0}', space=vmem, size = 0x8000, scoped, tag = 'output window, operand 1']
    #allocation11 [shape = 's32[2]{0}', space=sflag, size = 0x8, scoped, tag = 'scoped memory for tpu_custom_call.1']
    #allocation12 [shape = 'u8[8192]{0}', space=vmem, size = 0x2000, scoped, tag = 'output window, operand 2']
    %17 = vsyncpa [#allocation4], 0
    %s18 = scalar_lea.sflag [#allocation4], 1
    %19 = vsyncpa %s18, 0
    %20 = vsyncpa [#allocation7], 0
    %21 = vsyncpa [#allocation5], 0
    %s22 = scalar_lea.sflag [#allocation5], 1
    %23 = vsyncpa %s22, 0
    %24 = vsyncpa [#allocation11], 0
    %s25 = scalar_lea.sflag [#allocation11], 1
    %26 = vsyncpa %s25, 0
    loop: start=0, step=1, limit=4
    $region2: #{tpu_custom_call.1} parent=1 // loop_pre_header
      _
    $region3: #{tpu_custom_call.1} parent=1 // loop_header
      %s28 = sphi 0, %s32
      %p29 = scmp.ge.s32.totalorder %s28, 4
      %s35 = sphi 0, %s47
      %s36 = sphi 0, %s43
      %s37 = sphi 0, %s35
      %s38 = sphi 0, %s36
      %s39 = sphi 0, %s37
      %s40 = sphi 0, %s38
      %s50 = sphi 0, %s52
      %s53 = sphi 0, %s50
      %s54 = sphi 0, %s53
      %s70 = sphi 0, %s54
      %s74 = sphi 0, %s74
      %s76 = sphi 0, %s74
      %s77 = sphi 0, %s76
      %s91 = sphi 0, %s77
      %s95 = sphi 0, %s95
      %s97 = sphi 0, %s95
      %s98 = sphi 0, %s97
      %s112 = sphi 0, %s98
      %s116 = sphi 0, %s116
      %s118 = sphi 0, %s116
      %s119 = sphi 0, %s118
      %s133 = sphi 0, %s119
      %s137 = sphi 0, %s137
      %s139 = sphi 0, %s137
      %s140 = sphi 0, %s139
      %s154 = sphi 0, %s140
      %s158 = sphi 0, %s158
      %s160 = sphi 0, %s158
      %s161 = sphi 0, %s160
      %s175 = sphi 0, %s161
      %s179 = sphi 0, %s179
      %s181 = sphi 0, %s179
      %s182 = sphi 0, %s181
      %s196 = sphi 0, %s182
      %s200 = sphi 0, %s200
      %s202 = sphi 0, %s200
      %s203 = sphi 0, %s202
      %s217 = sphi 0, %s203
      %s221 = sphi 0, %s221
      %s223 = sphi 0, %s221
      %s224 = sphi 0, %s223
      %s238 = sphi 0, %s224
      %s246 = sphi 0, %s248
      %s249 = sphi 0, %s246
      %s250 = sphi 0, %s249
      %s266 = sphi 0, %s250
      %s274 = sphi 0, %s276
      %s277 = sphi 0, %s274
      %s278 = sphi 0, %s277
      %s294 = sphi 0, %s278
      %s302 = sphi 0, %s304
      %s305 = sphi 0, %s302
      %s306 = sphi 0, %s305
      %s322 = sphi 0, %s306
    $region4: #{tpu_custom_call.1} parent=1 // loop_header_branch
      %31 = sbr.rel (%p29) target = $region8
    $region5: #{tpu_custom_call.1} parent=1 // loop_body
      %s33 = ssub.s32 %s28, 1
      %s34 = ssub.s32 %s28, 2
      %s41 = sadd.s32 1, %s36
      %p42 = scmp.ge.s32.totalorder %s41, 1
      %s43 = scalar_select %p42, 0, %s41
      %s44 = sadd.s32 1, %s35
      %s45 = scalar_select %p42, %s44, %s35
      %p46 = scmp.ge.s32.totalorder %s45, 2
      %s47 = scalar_select %p46, 0, %s45
      %s48 = ssub.s32 %s35, %s47
      %p49 = scmp.eq.s32.totalorder %s48, 0
      %s51 = sadd.s32 %s50, 1
      %s52 = scalar_select %p49, %s50, %s51
      %p55 = pneg %p49
      %p56 = scmp.eq.s32.totalorder %s28, 1
      %p57 = por %p55, %p56
      %p58 = scmp.ne.s32.totalorder %s50, %s53
      %p59 = scmp.eq.s32.totalorder %s28, 0
      %p60 = por %p58, %p59
      %p61 = scmp.ne.s32.totalorder %s50, %s53
      %p62 = scmp.eq.s32.totalorder %s33, 1
      %p63 = por %p61, %p62
      %p64 = scmp.ne.s32.totalorder %s53, %s54
      %p65 = scmp.eq.s32.totalorder %s33, 0
      %p66 = por %p64, %p65
      %p67 = scmp.ne.s32.totalorder %s53, %s54
      %p68 = scmp.eq.s32.totalorder %s34, 1
      %p69 = por %p67, %p68
      %p71 = scmp.ne.s32.totalorder %s54, %s70
      %p72 = scmp.eq.s32.totalorder %s34, 0
      %p73 = por %p71, %p72
      %s75 = sadd.s32 %s74, 1
      %p78 = scmp.eq.s32.totalorder %s28, 1
      %p79 = scmp.ne.s32.totalorder %s74, %s76
      %p80 = scmp.eq.s32.totalorder %s28, 0
      %p81 = por %p79, %p80
      %p82 = scmp.ne.s32.totalorder %s74, %s76
      %p83 = scmp.eq.s32.totalorder %s33, 1
      %p84 = por %p82, %p83
      %p85 = scmp.ne.s32.totalorder %s76, %s77
      %p86 = scmp.eq.s32.totalorder %s33, 0
      %p87 = por %p85, %p86
      %p88 = scmp.ne.s32.totalorder %s76, %s77
      %p89 = scmp.eq.s32.totalorder %s34, 1
      %p90 = por %p88, %p89
      %p92 = scmp.ne.s32.totalorder %s77, %s91
      %p93 = scmp.eq.s32.totalorder %s34, 0
      %p94 = por %p92, %p93
      %s96 = sadd.s32 %s95, 1
      %p99 = scmp.eq.s32.totalorder %s28, 1
      %p100 = scmp.ne.s32.totalorder %s95, %s97
      %p101 = scmp.eq.s32.totalorder %s28, 0
      %p102 = por %p100, %p101
      %p103 = scmp.ne.s32.totalorder %s95, %s97
      %p104 = scmp.eq.s32.totalorder %s33, 1
      %p105 = por %p103, %p104
      %p106 = scmp.ne.s32.totalorder %s97, %s98
      %p107 = scmp.eq.s32.totalorder %s33, 0
      %p108 = por %p106, %p107
      %p109 = scmp.ne.s32.totalorder %s97, %s98
      %p110 = scmp.eq.s32.totalorder %s34, 1
      %p111 = por %p109, %p110
      %p113 = scmp.ne.s32.totalorder %s98, %s112
      %p114 = scmp.eq.s32.totalorder %s34, 0
      %p115 = por %p113, %p114
      %s117 = sadd.s32 %s116, 1
      %p120 = scmp.eq.s32.totalorder %s28, 1
      %p121 = scmp.ne.s32.totalorder %s116, %s118
      %p122 = scmp.eq.s32.totalorder %s28, 0
      %p123 = por %p121, %p122
      %p124 = scmp.ne.s32.totalorder %s116, %s118
      %p125 = scmp.eq.s32.totalorder %s33, 1
      %p126 = por %p124, %p125
      %p127 = scmp.ne.s32.totalorder %s118, %s119
      %p128 = scmp.eq.s32.totalorder %s33, 0
      %p129 = por %p127, %p128
      %p130 = scmp.ne.s32.totalorder %s118, %s119
      %p131 = scmp.eq.s32.totalorder %s34, 1
      %p132 = por %p130, %p131
      %p134 = scmp.ne.s32.totalorder %s119, %s133
      %p135 = scmp.eq.s32.totalorder %s34, 0
      %p136 = por %p134, %p135
      %s138 = sadd.s32 %s137, 1
      %p141 = scmp.eq.s32.totalorder %s28, 1
      %p142 = scmp.ne.s32.totalorder %s137, %s139
      %p143 = scmp.eq.s32.totalorder %s28, 0
      %p144 = por %p142, %p143
      %p145 = scmp.ne.s32.totalorder %s137, %s139
      %p146 = scmp.eq.s32.totalorder %s33, 1
      %p147 = por %p145, %p146
      %p148 = scmp.ne.s32.totalorder %s139, %s140
      %p149 = scmp.eq.s32.totalorder %s33, 0
      %p150 = por %p148, %p149
      %p151 = scmp.ne.s32.totalorder %s139, %s140
      %p152 = scmp.eq.s32.totalorder %s34, 1
      %p153 = por %p151, %p152
      %p155 = scmp.ne.s32.totalorder %s140, %s154
      %p156 = scmp.eq.s32.totalorder %s34, 0
      %p157 = por %p155, %p156
      %s159 = sadd.s32 %s158, 1
      %p162 = scmp.eq.s32.totalorder %s28, 1
      %p163 = scmp.ne.s32.totalorder %s158, %s160
      %p164 = scmp.eq.s32.totalorder %s28, 0
      %p165 = por %p163, %p164
      %p166 = scmp.ne.s32.totalorder %s158, %s160
      %p167 = scmp.eq.s32.totalorder %s33, 1
      %p168 = por %p166, %p167
      %p169 = scmp.ne.s32.totalorder %s160, %s161
      %p170 = scmp.eq.s32.totalorder %s33, 0
      %p171 = por %p169, %p170
      %p172 = scmp.ne.s32.totalorder %s160, %s161
      %p173 = scmp.eq.s32.totalorder %s34, 1
      %p174 = por %p172, %p173
      %p176 = scmp.ne.s32.totalorder %s161, %s175
      %p177 = scmp.eq.s32.totalorder %s34, 0
      %p178 = por %p176, %p177
      %s180 = sadd.s32 %s179, 1
      %p183 = scmp.eq.s32.totalorder %s28, 1
      %p184 = scmp.ne.s32.totalorder %s179, %s181
      %p185 = scmp.eq.s32.totalorder %s28, 0
      %p186 = por %p184, %p185
      %p187 = scmp.ne.s32.totalorder %s179, %s181
      %p188 = scmp.eq.s32.totalorder %s33, 1
      %p189 = por %p187, %p188
      %p190 = scmp.ne.s32.totalorder %s181, %s182
      %p191 = scmp.eq.s32.totalorder %s33, 0
      %p192 = por %p190, %p191
      %p193 = scmp.ne.s32.totalorder %s181, %s182
      %p194 = scmp.eq.s32.totalorder %s34, 1
      %p195 = por %p193, %p194
      %p197 = scmp.ne.s32.totalorder %s182, %s196
      %p198 = scmp.eq.s32.totalorder %s34, 0
      %p199 = por %p197, %p198
      %s201 = sadd.s32 %s200, 1
      %p204 = scmp.eq.s32.totalorder %s28, 1
      %p205 = scmp.ne.s32.totalorder %s200, %s202
      %p206 = scmp.eq.s32.totalorder %s28, 0
      %p207 = por %p205, %p206
      %p208 = scmp.ne.s32.totalorder %s200, %s202
      %p209 = scmp.eq.s32.totalorder %s33, 1
      %p210 = por %p208, %p209
      %p211 = scmp.ne.s32.totalorder %s202, %s203
      %p212 = scmp.eq.s32.totalorder %s33, 0
      %p213 = por %p211, %p212
      %p214 = scmp.ne.s32.totalorder %s202, %s203
      %p215 = scmp.eq.s32.totalorder %s34, 1
      %p216 = por %p214, %p215
      %p218 = scmp.ne.s32.totalorder %s203, %s217
      %p219 = scmp.eq.s32.totalorder %s34, 0
      %p220 = por %p218, %p219
      %s222 = sadd.s32 %s221, 1
      %p225 = scmp.eq.s32.totalorder %s28, 1
      %p226 = scmp.ne.s32.totalorder %s221, %s223
      %p227 = scmp.eq.s32.totalorder %s28, 0
      %p228 = por %p226, %p227
      %p229 = scmp.ne.s32.totalorder %s221, %s223
      %p230 = scmp.eq.s32.totalorder %s33, 1
      %p231 = por %p229, %p230
      %p232 = scmp.ne.s32.totalorder %s223, %s224
      %p233 = scmp.eq.s32.totalorder %s33, 0
      %p234 = por %p232, %p233
      %p235 = scmp.ne.s32.totalorder %s223, %s224
      %p236 = scmp.eq.s32.totalorder %s34, 1
      %p237 = por %p235, %p236
      %p239 = scmp.ne.s32.totalorder %s224, %s238
      %p240 = scmp.eq.s32.totalorder %s34, 0
      %p241 = por %p239, %p240
      %s242 = ssub.s32 %s35, %s47
      %s243 = ssub.s32 %s36, %s43
      %s244 = sor.u32 %s242, %s243
      %p245 = scmp.eq.s32.totalorder %s244, 0
      %s247 = sadd.s32 %s246, 1
      %s248 = scalar_select %p245, %s246, %s247
      %p251 = pneg %p245
      %p252 = scmp.eq.s32.totalorder %s28, 1
      %p253 = por %p251, %p252
      %p254 = scmp.ne.s32.totalorder %s246, %s249
      %p255 = scmp.eq.s32.totalorder %s28, 0
      %p256 = por %p254, %p255
      %p257 = scmp.ne.s32.totalorder %s246, %s249
      %p258 = scmp.eq.s32.totalorder %s33, 1
      %p259 = por %p257, %p258
      %p260 = scmp.ne.s32.totalorder %s249, %s250
      %p261 = scmp.eq.s32.totalorder %s33, 0
      %p262 = por %p260, %p261
      %p263 = scmp.ne.s32.totalorder %s249, %s250
      %p264 = scmp.eq.s32.totalorder %s34, 1
      %p265 = por %p263, %p264
      %p267 = scmp.ne.s32.totalorder %s250, %s266
      %p268 = scmp.eq.s32.totalorder %s34, 0
      %p269 = por %p267, %p268
      %s270 = ssub.s32 %s35, %s47
      %s271 = ssub.s32 %s36, %s43
      %s272 = sor.u32 %s270, %s271
      %p273 = scmp.eq.s32.totalorder %s272, 0
      %s275 = sadd.s32 %s274, 1
      %s276 = scalar_select %p273, %s274, %s275
      %p279 = pneg %p273
      %p280 = scmp.eq.s32.totalorder %s28, 1
      %p281 = por %p279, %p280
      %p282 = scmp.ne.s32.totalorder %s274, %s277
      %p283 = scmp.eq.s32.totalorder %s28, 0
      %p284 = por %p282, %p283
      %p285 = scmp.ne.s32.totalorder %s274, %s277
      %p286 = scmp.eq.s32.totalorder %s33, 1
      %p287 = por %p285, %p286
      %p288 = scmp.ne.s32.totalorder %s277, %s278
      %p289 = scmp.eq.s32.totalorder %s33, 0
      %p290 = por %p288, %p289
      %p291 = scmp.ne.s32.totalorder %s277, %s278
      %p292 = scmp.eq.s32.totalorder %s34, 1
      %p293 = por %p291, %p292
      %p295 = scmp.ne.s32.totalorder %s278, %s294
      %p296 = scmp.eq.s32.totalorder %s34, 0
      %p297 = por %p295, %p296
      %s298 = ssub.s32 %s35, %s47
      %s299 = ssub.s32 %s36, %s43
      %s300 = sor.u32 %s298, %s299
      %p301 = scmp.eq.s32.totalorder %s300, 0
      %s303 = sadd.s32 %s302, 1
      %s304 = scalar_select %p301, %s302, %s303
      %p307 = pneg %p301
      %p308 = scmp.eq.s32.totalorder %s28, 1
      %p309 = por %p307, %p308
      %p310 = scmp.ne.s32.totalorder %s302, %s305
      %p311 = scmp.eq.s32.totalorder %s28, 0
      %p312 = por %p310, %p311
      %p313 = scmp.ne.s32.totalorder %s302, %s305
      %p314 = scmp.eq.s32.totalorder %s33, 1
      %p315 = por %p313, %p314
      %p316 = scmp.ne.s32.totalorder %s305, %s306
      %p317 = scmp.eq.s32.totalorder %s33, 0
      %p318 = por %p316, %p317
      %p319 = scmp.ne.s32.totalorder %s305, %s306
      %p320 = scmp.eq.s32.totalorder %s34, 1
      %p321 = por %p319, %p320
      %p323 = scmp.ne.s32.totalorder %s306, %s322
      %p324 = scmp.eq.s32.totalorder %s34, 0
      %p325 = por %p323, %p324
      %p326 = scmp.le.s32.totalorder 1, %s28
      %p327 = scmp.lt.s32.totalorder %s28, 3
      %p328 = pnand %p326, %p327
      %p329 = pneg %p328
      // Predicated region
      $region9: #{tpu_custom_call.1} parent=5 // pred_check
        _
      $region10: #{tpu_custom_call.1} parent=5 // pred_check_branch
        %331 = sbr.rel (%p328) target = $region12
      $region11: #{tpu_custom_call.1} parent=5 // pred_region
        %s332 = ssub.s32 %s28, 1
        // Predicated region
        $region13: #{tpu_custom_call.1} parent=11 // pred_check
          %p333 = pneg %p87
        $region14: #{tpu_custom_call.1} parent=11 // pred_check_branch
          %335 = sbr.rel (%p333) target = $region16
        $region15: #{tpu_custom_call.1} parent=11 // pred_region
          _
        $region16: #{tpu_custom_call.1} parent=11 // pred_fallthru
          _
        // Predicated region
        $region17: #{tpu_custom_call.1} parent=11 // pred_check
          %p336 = pneg %p108
        $region18: #{tpu_custom_call.1} parent=11 // pred_check_branch
          %338 = sbr.rel (%p336) target = $region20
        $region19: #{tpu_custom_call.1} parent=11 // pred_region
          _
        $region20: #{tpu_custom_call.1} parent=11 // pred_fallthru
          _
        // Predicated region
        $region21: #{tpu_custom_call.1} parent=11 // pred_check
          %p339 = pneg %p129
        $region22: #{tpu_custom_call.1} parent=11 // pred_check_branch
          %341 = sbr.rel (%p339) target = $region24
        $region23: #{tpu_custom_call.1} parent=11 // pred_region
          %s343 = ssub.s32 9216, 9216
          %344 = vsyncadd [#allocation7], %s343
          %s345 = sshll.u32 [#allocation6], 4
          %s346 = int_to_ptr.vmem [resolvable:$true] %s345
          %351 = dma.hbm_to_vmem [thread:$0]  %s3, 9216, %s346, [#allocation7], 64, 64, 4
        $region24: #{tpu_custom_call.1} parent=11 // pred_fallthru
          _
        // Predicated region
        $region25: #{tpu_custom_call.1} parent=11 // pred_check
          %p352 = pneg %p150
        $region26: #{tpu_custom_call.1} parent=11 // pred_check_branch
          %354 = sbr.rel (%p352) target = $region28
        $region27: #{tpu_custom_call.1} parent=11 // pred_region
          _
        $region28: #{tpu_custom_call.1} parent=11 // pred_fallthru
          _
        // Predicated region
        $region29: #{tpu_custom_call.1} parent=11 // pred_check
          %p355 = pneg %p171
        $region30: #{tpu_custom_call.1} parent=11 // pred_check_branch
          %357 = sbr.rel (%p355) target = $region32
        $region31: #{tpu_custom_call.1} parent=11 // pred_region
          _
        $region32: #{tpu_custom_call.1} parent=11 // pred_fallthru
          _
        // Predicated region
        $region33: #{tpu_custom_call.1} parent=11 // pred_check
          %p358 = pneg %p192
        $region34: #{tpu_custom_call.1} parent=11 // pred_check_branch
          %360 = sbr.rel (%p358) target = $region36
        $region35: #{tpu_custom_call.1} parent=11 // pred_region
          _
        $region36: #{tpu_custom_call.1} parent=11 // pred_fallthru
          _
        // Predicated region
        $region37: #{tpu_custom_call.1} parent=11 // pred_check
          %p361 = pneg %p213
        $region38: #{tpu_custom_call.1} parent=11 // pred_check_branch
          %363 = sbr.rel (%p361) target = $region40
        $region39: #{tpu_custom_call.1} parent=11 // pred_region
          %s365 = ssub.s32 9216, 9216
          %366 = vsyncadd [#allocation7], %s365
          %s367 = sshll.u32 [#allocation8], 4
          %s368 = int_to_ptr.vmem [resolvable:$true] %s367
          %373 = dma.hbm_to_vmem [thread:$0]  %s7, 9216, %s368, [#allocation7], 64, 64, 4
        $region40: #{tpu_custom_call.1} parent=11 // pred_fallthru
          _
        // Predicated region
        $region41: #{tpu_custom_call.1} parent=11 // pred_check
          %p374 = pneg %p234
        $region42: #{tpu_custom_call.1} parent=11 // pred_check_branch
          %376 = sbr.rel (%p374) target = $region44
        $region43: #{tpu_custom_call.1} parent=11 // pred_region
          _
        $region44: #{tpu_custom_call.1} parent=11 // pred_fallthru
          _
      $region12: #{tpu_custom_call.1} parent=5 // pred_fallthru
        _
      %p377 = scmp.lt.s32.totalorder %s28, 2
      // Predicated region
      $region45: #{tpu_custom_call.1} parent=5 // pred_check
        %p378 = pneg %p377
      $region46: #{tpu_custom_call.1} parent=5 // pred_check_branch
        %380 = sbr.rel (%p378) target = $region48
      $region47: #{tpu_custom_call.1} parent=5 // pred_region
        // Predicated region
        $region49: #{tpu_custom_call.1} parent=47 // pred_check
          %p381 = pneg %p60
        $region50: #{tpu_custom_call.1} parent=47 // pred_check_branch
          %383 = sbr.rel (%p381) target = $region52
        $region51: #{tpu_custom_call.1} parent=47 // pred_region
          %s384 = sand.u32 %s50, 1
          %s385 = scalar_lea.sflag [#allocation4], %s384
          %s386 = sand.u32 %s50, 1
          %s387 = smul.addr %s386, 64
          %s388 = scalar_lea.vmem [#allocation3], %s387
          %s390 = ssub.s32 1024, 1024
          %391 = vsyncadd %s385, %s390
          %s392 = smul.addr %s35, 8
          %s393 = smul.addr %s392, 128
          %s394 = scalar_lea.hbm %s0, %s393
          %s395 = sshll.u32 %s388, 4
          %s396 = int_to_ptr.vmem [resolvable:$true] %s395
          %401 = dma.hbm_to_vmem [thread:$0]  %s394, 1024, %s396, %s385, 128, 128, 8
        $region52: #{tpu_custom_call.1} parent=47 // pred_fallthru
          _
      $region48: #{tpu_custom_call.1} parent=5 // pred_fallthru
        _
      %p402 = scmp.le.s32.totalorder 1, %s28
      %p403 = scmp.lt.s32.totalorder %s28, 3
      %p404 = pnand %p402, %p403
      %p405 = pneg %p404
      // Predicated region
      $region53: #{tpu_custom_call.1} parent=5 // pred_check
        _
      $region54: #{tpu_custom_call.1} parent=5 // pred_check_branch
        %407 = sbr.rel (%p404) target = $region56
      $region55: #{tpu_custom_call.1} parent=5 // pred_region
        %s408 = ssub.s32 %s28, 1
        %s409 = sand.u32 %s53, 1
        %s410 = scalar_lea.sflag [#allocation4], %s409
        %s411 = sand.u32 %s53, 1
        %s412 = smul.addr %s411, 64
        %s413 = scalar_lea.vmem [#allocation3], %s412
        // Predicated region
        $region57: #{tpu_custom_call.1} parent=55 // pred_check
          %p414 = pneg %p66
        $region58: #{tpu_custom_call.1} parent=55 // pred_check_branch
          %416 = sbr.rel (%p414) target = $region60
        $region59: #{tpu_custom_call.1} parent=55 // pred_region
          %417 = dma.done %s410, 1024
        $region60: #{tpu_custom_call.1} parent=55 // pred_fallthru
          _
        // Predicated region
        $region61: #{tpu_custom_call.1} parent=55 // pred_check
          %p418 = pneg %p129
        $region62: #{tpu_custom_call.1} parent=55 // pred_check_branch
          %420 = sbr.rel (%p418) target = $region64
        $region63: #{tpu_custom_call.1} parent=55 // pred_region
          %421 = dma.done [#allocation7], 9216
        $region64: #{tpu_custom_call.1} parent=55 // pred_fallthru
          _
        // Predicated region
        $region65: #{tpu_custom_call.1} parent=55 // pred_check
          %p422 = pneg %p213
        $region66: #{tpu_custom_call.1} parent=55 // pred_check_branch
          %424 = sbr.rel (%p422) target = $region68
        $region67: #{tpu_custom_call.1} parent=55 // pred_region
          %425 = dma.done [#allocation7], 9216
        $region68: #{tpu_custom_call.1} parent=55 // pred_fallthru
          _
        %s426 = sand.u32 %s53, 1
        %s427 = scalar_lea.sflag [#allocation4], %s426
        %s428 = sand.u32 %s53, 1
        %s429 = smul.addr %s428, 64
        %s430 = scalar_lea.vmem [#allocation3], %s429
        %p431 = pneg %p66
        %p432 = pneg %p63
        %p433 = pneg %p87
        %p434 = pneg %p84
        %p435 = pneg %p108
        %p436 = pneg %p105
        %p437 = pneg %p129
        %p438 = pneg %p126
        %p439 = pneg %p150
        %p440 = pneg %p147
        %p441 = pneg %p171
        %p442 = pneg %p168
        %p443 = pneg %p192
        %p444 = pneg %p189
        %p445 = pneg %p213
        %p446 = pneg %p210
        %p447 = pneg %p234
        %p448 = pneg %p231
        %p449 = pneg %p262
        %p450 = pneg %p259
        %s451 = sand.u32 %s249, 1
        %s452 = scalar_lea.sflag [#allocation5], %s451
        %s453 = sand.u32 %s249, 1
        %s454 = smul.addr %s453, 32
        %s455 = scalar_lea.vmem [#allocation9], %s454
        %p456 = pneg %p290
        %p457 = pneg %p287
        %s458 = sand.u32 %s33, 1
        %s459 = scalar_lea.sflag [#allocation11], %s458
        %s460 = sand.u32 %s277, 1
        %s461 = smul.addr %s460, 32
        %s462 = scalar_lea.vmem [#allocation10], %s461
        %p463 = pneg %p318
        %p464 = pneg %p315
        %s465 = sand.u32 %s33, 1
        %s466 = scalar_lea.sflag [#allocation11], %s465
        %s467 = sand.u32 %s305, 1
        %s468 = smul.addr %s467, 8
        %s469 = scalar_lea.vmem [#allocation12], %s468
        %s470 = smul.u32 8, %s38
        %s471 = smul.u32 8, %s38
        %s473 = smul.u32 %s38, 8
        %vm474 = vcmask 1040384
        %vm475 = vsmask.f32 256
        %vm476 = vmand %vm474, %vm475
        %v477 = vld [vmem:[#allocation2] sm:$0x1]
        %v478 = vsel %vm476, 0, %v477
        %479 = vst [vmem:[#allocation2] sm:$0x1] %v478
        %v480 = vld [vmem:[#allocation2 + $0x8] sm:$0x1]
        %v481 = vsel %vm476, 0, %v480
        %482 = vst [vmem:[#allocation2 + $0x8] sm:$0x1] %v481
        %v483 = vld [vmem:[#allocation2 + $0x10] sm:$0x1]
        %v484 = vsel %vm476, 0, %v483
        %485 = vst [vmem:[#allocation2 + $0x10] sm:$0x1] %v484
        %v486 = vld [vmem:[#allocation2 + $0x18] sm:$0x1]
        %v487 = vsel %vm476, 0, %v486
        %488 = vst [vmem:[#allocation2 + $0x18] sm:$0x1] %v487
        %v489 = vld [vmem:[#allocation2 + $0x20] sm:$0x1]
        %v490 = vsel %vm476, 0, %v489
        %491 = vst [vmem:[#allocation2 + $0x20] sm:$0x1] %v490
        %v492 = vld [vmem:[#allocation2 + $0x28] sm:$0x1]
        %v493 = vsel %vm476, 0, %v492
        %494 = vst [vmem:[#allocation2 + $0x28] sm:$0x1] %v493
        %v495 = vld [vmem:[#allocation2 + $0x30] sm:$0x1]
        %v496 = vsel %vm476, 0, %v495
        %497 = vst [vmem:[#allocation2 + $0x30] sm:$0x1] %v496
        %v498 = vld [vmem:[#allocation2 + $0x38] sm:$0x1]
        %v499 = vsel %vm476, 0, %v498
        %500 = vst [vmem:[#allocation2 + $0x38] sm:$0x1] %v499
        %v501 = vld [vmem:[#allocation2 + $0x40] sm:$0x1]
        %v502 = vsel %vm476, 0, %v501
        %503 = vst [vmem:[#allocation2 + $0x40] sm:$0x1] %v502
        %v504 = vld [vmem:[#allocation2 + $0x48] sm:$0x1]
        %v505 = vsel %vm476, 0, %v504
        %506 = vst [vmem:[#allocation2 + $0x48] sm:$0x1] %v505
        %vm507 = vsmask.f32 7938
        %vm508 = vmand %vm474, %vm507
        %v509 = vld [vmem:[#allocation2 + $0x4] sm:$0x1]
        %v510 = vsel %vm508, 0, %v509
        %511 = vst [vmem:[#allocation2 + $0x4] sm:$0x1] %v510
        %v512 = vld [vmem:[#allocation2 + $0xc] sm:$0x1]
        %v513 = vsel %vm508, 0, %v512
        %514 = vst [vmem:[#allocation2 + $0xc] sm:$0x1] %v513
        %v515 = vld [vmem:[#allocation2 + $0x14] sm:$0x1]
        %v516 = vsel %vm508, 0, %v515
        %517 = vst [vmem:[#allocation2 + $0x14] sm:$0x1] %v516
        %v518 = vld [vmem:[#allocation2 + $0x1c] sm:$0x1]
        %v519 = vsel %vm508, 0, %v518
        %520 = vst [vmem:[#allocation2 + $0x1c] sm:$0x1] %v519
        %v521 = vld [vmem:[#allocation2 + $0x24] sm:$0x1]
        %v522 = vsel %vm508, 0, %v521
        %523 = vst [vmem:[#allocation2 + $0x24] sm:$0x1] %v522
        %v524 = vld [vmem:[#allocation2 + $0x2c] sm:$0x1]
        %v525 = vsel %vm508, 0, %v524
        %526 = vst [vmem:[#allocation2 + $0x2c] sm:$0x1] %v525
        %v527 = vld [vmem:[#allocation2 + $0x34] sm:$0x1]
        %v528 = vsel %vm508, 0, %v527
        %529 = vst [vmem:[#allocation2 + $0x34] sm:$0x1] %v528
        %v530 = vld [vmem:[#allocation2 + $0x3c] sm:$0x1]
        %v531 = vsel %vm508, 0, %v530
        %532 = vst [vmem:[#allocation2 + $0x3c] sm:$0x1] %v531
        %v533 = vld [vmem:[#allocation2 + $0x44] sm:$0x1]
        %v534 = vsel %vm508, 0, %v533
        %535 = vst [vmem:[#allocation2 + $0x44] sm:$0x1] %v534
        %v536 = vld [vmem:[#allocation2 + $0x4c] sm:$0x1]
        %v537 = vsel %vm508, 0, %v536
        %538 = vst [vmem:[#allocation2 + $0x4c] sm:$0x1] %v537
        %v539 = vld [vmem:[%s1] sm:$0x1]
        %v540 = vld [vmem:[%s2] sm:$0x1]
        %s541 = smul.u32 %s473, 8
        %s542 = scalar_lea.vmem %s413, %s541 [#allocation3]
        %v543 = vld [vmem:[%s542] sm:$0xff]
        %v544 = vld [vmem:[%s542 + $0x8] sm:$0xff]
        %v545 = vld [vmem:[%s542 + $0x10] sm:$0xff]
        %v546 = vld [vmem:[%s542 + $0x18] sm:$0xff]
        %v547 = vld [vmem:[%s542 + $0x20] sm:$0xff]
        %v548 = vld [vmem:[%s542 + $0x28] sm:$0xff]
        %v549 = vld [vmem:[%s542 + $0x30] sm:$0xff]
        %v550 = vld [vmem:[%s542 + $0x38] sm:$0xff]
        %v552 = vlaneseq
        %v553 = vshrl.u32 %v552, 7
        %v554 = vsub.s32 0, %v553
        %v555 = vrot.slane %v539, %v554
        %v557 = vmul.f32 %v543, %v555
        %v558 = vmul.f32 %v544, %v555
        %v559 = vmul.f32 %v545, %v555
        %v560 = vmul.f32 %v546, %v555
        %v561 = vmul.f32 %v547, %v555
        %v562 = vmul.f32 %v548, %v555
        %v563 = vmul.f32 %v549, %v555
        %v564 = vmul.f32 %v550, %v555
        %v566 = vlaneseq
        %v567 = vshrl.u32 %v566, 7
        %v568 = vsub.s32 0, %v567
        %v569 = vrot.slane %v540, %v568
        %v571 = vadd.f32 %v557, %v569
        %v572 = vadd.f32 %v558, %v569
        %v573 = vadd.f32 %v559, %v569
        %v574 = vadd.f32 %v560, %v569
        %v575 = vadd.f32 %v561, %v569
        %v576 = vadd.f32 %v562, %v569
        %v577 = vadd.f32 %v563, %v569
        %v578 = vadd.f32 %v564, %v569
        %v579 = vmax.f32 %v571, 0.0
        %v580 = vmax.f32 %v572, 0.0
        %v581 = vmax.f32 %v573, 0.0
        %v582 = vmax.f32 %v574, 0.0
        %v583 = vmax.f32 %v575, 0.0
        %v584 = vmax.f32 %v576, 0.0
        %v585 = vmax.f32 %v577, 0.0
        %v586 = vmax.f32 %v578, 0.0
        %v587 = vpack.c.bf16 %v579, %v579
        %v588 = vpack.c.bf16 %v580, %v580
        %v589 = vpack.c.bf16 %v581, %v581
        %v590 = vpack.c.bf16 %v582, %v582
        %v591 = vpack.c.bf16 %v583, %v583
        %v592 = vpack.c.bf16 %v584, %v584
        %v593 = vpack.c.bf16 %v585, %v585
        %v594 = vpack.c.bf16 %v586, %v586
        %v603 = vunpack.c.l.b16 %v587
        %v604 = vunpack.c.l.b16 %v588
        %v605 = vunpack.c.l.b16 %v589
        %v606 = vunpack.c.l.b16 %v590
        %v607 = vunpack.c.l.b16 %v591
        %v608 = vunpack.c.l.b16 %v592
        %v609 = vunpack.c.l.b16 %v593
        %v610 = vunpack.c.l.b16 %v594
        %v611 = vpack.c.b16 %v603, %v603
        %v612 = vpack.c.b16 %v604, %v604
        %v613 = vpack.c.b16 %v605, %v605
        %v614 = vpack.c.b16 %v606, %v606
        %v615 = vpack.c.b16 %v607, %v607
        %v616 = vpack.c.b16 %v608, %v608
        %v617 = vpack.c.b16 %v609, %v609
        %v618 = vpack.c.b16 %v610, %v610
        %v620 = vshrl.u32 %v611, 16
        %v622 = vrot.slane %v620, 7
        %v623 = vshll.u32 %v611, 16
        %v625 = vor.u32 %v622, %v623
        %v626 = vrot.slane %v622, 4
        %v628 = vshrl.u32 %v612, 16
        %v630 = vrot.slane %v628, 7
        %v631 = vshll.u32 %v612, 16
        %v633 = vor.u32 %v630, %v631
        %v634 = vrot.slane %v630, 4
        %v636 = vshrl.u32 %v613, 16
        %v638 = vrot.slane %v636, 7
        %v639 = vshll.u32 %v613, 16
        %v641 = vor.u32 %v638, %v639
        %v642 = vrot.slane %v638, 4
        %v644 = vshrl.u32 %v614, 16
        %v646 = vrot.slane %v644, 7
        %v647 = vshll.u32 %v614, 16
        %v649 = vor.u32 %v646, %v647
        %v650 = vrot.slane %v646, 4
        %v652 = vshrl.u32 %v615, 16
        %v654 = vrot.slane %v652, 7
        %v655 = vshll.u32 %v615, 16
        %v657 = vor.u32 %v654, %v655
        %v658 = vrot.slane %v654, 4
        %v660 = vshrl.u32 %v616, 16
        %v662 = vrot.slane %v660, 7
        %v663 = vshll.u32 %v616, 16
        %v665 = vor.u32 %v662, %v663
        %v666 = vrot.slane %v662, 4
        %v668 = vshrl.u32 %v617, 16
        %v670 = vrot.slane %v668, 7
        %v671 = vshll.u32 %v617, 16
        %v673 = vor.u32 %v670, %v671
        %v674 = vrot.slane %v670, 4
        %v676 = vshrl.u32 %v618, 16
        %v678 = vrot.slane %v676, 7
        %v679 = vshll.u32 %v618, 16
        %v681 = vor.u32 %v678, %v679
        %v682 = vrot.slane %v678, 4
        %s699 = scalar_lea.vmem [#allocation2], 8
        %vm700 = vcmask 1043456
        %vm701 = vmand %vm700, %vm507
        %v702 = vld [vmem:[%s699] sm:$0xf]
        %v703 = vsel %vm701, %v625, %v702
        %704 = vst [vmem:[%s699] sm:$0xf] %v703
        %v705 = vld [vmem:[%s699 + $0x4] sm:$0x1]
        %v706 = vsel %vm476, %v626, %v705
        %707 = vst [vmem:[%s699 + $0x4] sm:$0x1] %v706
        %v708 = vld [vmem:[%s699 + $0x8] sm:$0xf]
        %v709 = vsel %vm701, %v633, %v708
        %710 = vst [vmem:[%s699 + $0x8] sm:$0xf] %v709
        %v711 = vld [vmem:[%s699 + $0xc] sm:$0x1]
        %v712 = vsel %vm476, %v634, %v711
        %713 = vst [vmem:[%s699 + $0xc] sm:$0x1] %v712
        %v714 = vld [vmem:[%s699 + $0x10] sm:$0xf]
        %v715 = vsel %vm701, %v641, %v714
        %716 = vst [vmem:[%s699 + $0x10] sm:$0xf] %v715
        %v717 = vld [vmem:[%s699 + $0x14] sm:$0x1]
        %v718 = vsel %vm476, %v642, %v717
        %719 = vst [vmem:[%s699 + $0x14] sm:$0x1] %v718
        %v720 = vld [vmem:[%s699 + $0x18] sm:$0xf]
        %v721 = vsel %vm701, %v649, %v720
        %722 = vst [vmem:[%s699 + $0x18] sm:$0xf] %v721
        %v723 = vld [vmem:[%s699 + $0x1c] sm:$0x1]
        %v724 = vsel %vm476, %v650, %v723
        %725 = vst [vmem:[%s699 + $0x1c] sm:$0x1] %v724
        %v726 = vld [vmem:[%s699 + $0x20] sm:$0xf]
        %v727 = vsel %vm701, %v657, %v726
        %728 = vst [vmem:[%s699 + $0x20] sm:$0xf] %v727
        %v729 = vld [vmem:[%s699 + $0x24] sm:$0x1]
        %v730 = vsel %vm476, %v658, %v729
        %731 = vst [vmem:[%s699 + $0x24] sm:$0x1] %v730
        %v732 = vld [vmem:[%s699 + $0x28] sm:$0xf]
        %v733 = vsel %vm701, %v665, %v732
        %734 = vst [vmem:[%s699 + $0x28] sm:$0xf] %v733
        %v735 = vld [vmem:[%s699 + $0x2c] sm:$0x1]
        %v736 = vsel %vm476, %v666, %v735
        %737 = vst [vmem:[%s699 + $0x2c] sm:$0x1] %v736
        %v738 = vld [vmem:[%s699 + $0x30] sm:$0xf]
        %v739 = vsel %vm701, %v673, %v738
        %740 = vst [vmem:[%s699 + $0x30] sm:$0xf] %v739
        %v741 = vld [vmem:[%s699 + $0x34] sm:$0x1]
        %v742 = vsel %vm476, %v674, %v741
        %743 = vst [vmem:[%s699 + $0x34] sm:$0x1] %v742
        %v744 = vld [vmem:[%s699 + $0x38] sm:$0xf]
        %v745 = vsel %vm701, %v681, %v744
        %746 = vst [vmem:[%s699 + $0x38] sm:$0xf] %v745
        %v747 = vld [vmem:[%s699 + $0x3c] sm:$0x1]
        %v748 = vsel %vm476, %v682, %v747
        %749 = vst [vmem:[%s699 + $0x3c] sm:$0x1] %v748
        %p750 = scmp.eq.s32.totalorder %s38, 0
        // Predicated region
        $region69: #{tpu_custom_call.1} parent=55 // pred_check
          %p751 = pneg %p750
        $region70: #{tpu_custom_call.1} parent=55 // pred_check_branch
          %753 = sbr.rel (%p751) target = $region72
        $region71: #{tpu_custom_call.1} parent=55 // pred_region
          %v754 = vld [vmem:[#allocation2] sm:$0xf]
          %v755 = vsel %vm701, 0, %v754
          %756 = vst [vmem:[#allocation2] sm:$0xf] %v755
          %v757 = vld [vmem:[#allocation2 + $0x4] sm:$0x1]
          %v758 = vsel %vm476, 0, %v757
          %759 = vst [vmem:[#allocation2 + $0x4] sm:$0x1] %v758
        $region72: #{tpu_custom_call.1} parent=55 // pred_fallthru
          _
        %p760 = scmp.gt.s32.totalorder %s38, 0
        // Predicated region
        $region73: #{tpu_custom_call.1} parent=55 // pred_check
          %p761 = pneg %p760
        $region74: #{tpu_custom_call.1} parent=55 // pred_check_branch
          %763 = sbr.rel (%p761) target = $region76
        $region75: #{tpu_custom_call.1} parent=55 // pred_region
          %s764 = ssub.s32 %s473, 1
          %s765 = smul.u32 %s764, 8
          %s766 = scalar_lea.vmem %s413, %s765 [#allocation3]
          %v767 = vld [vmem:[%s766] sm:$0xff]
          %v768 = vmul.f32 %v767, %v555
          %v769 = vadd.f32 %v768, %v569
          %v770 = vmax.f32 %v769, 0.0
          %v771 = vpack.c.bf16 %v770, %v770
          %v773 = vunpack.c.l.b16 %v771
          %v774 = vpack.c.b16 %v773, %v773
          %v776 = vshrl.u32 %v774, 16
          %v778 = vrot.slane %v776, 7
          %v779 = vshll.u32 %v774, 16
          %v781 = vor.u32 %v778, %v779
          %v782 = vrot.slane %v778, 4
          %v785 = vld [vmem:[#allocation2] sm:$0xf]
          %v786 = vsel %vm701, %v781, %v785
          %787 = vst [vmem:[#allocation2] sm:$0xf] %v786
          %v788 = vld [vmem:[#allocation2 + $0x4] sm:$0x1]
          %v789 = vsel %vm476, %v782, %v788
          %790 = vst [vmem:[#allocation2 + $0x4] sm:$0x1] %v789
        $region76: #{tpu_custom_call.1} parent=55 // pred_fallthru
          _
        // Predicated region
        $region77: #{tpu_custom_call.1} parent=55 // pred_check
          %p791 = pneg %p750
        $region78: #{tpu_custom_call.1} parent=55 // pred_check_branch
          %793 = sbr.rel (%p791) target = $region80
        $region79: #{tpu_custom_call.1} parent=55 // pred_region
          %s794 = scalar_lea.vmem [#allocation2], 72
          %v795 = vld [vmem:[%s794] sm:$0xf]
          %v796 = vsel %vm701, 0, %v795
          %797 = vst [vmem:[%s794] sm:$0xf] %v796
          %v798 = vld [vmem:[%s794 + $0x4] sm:$0x1]
          %v799 = vsel %vm476, 0, %v798
          %800 = vst [vmem:[%s794 + $0x4] sm:$0x1] %v799
        $region80: #{tpu_custom_call.1} parent=55 // pred_fallthru
          _
        %p801 = scmp.lt.s32.totalorder %s38, 0
        // Predicated region
        $region81: #{tpu_custom_call.1} parent=55 // pred_check
          %p802 = pneg %p801
        $region82: #{tpu_custom_call.1} parent=55 // pred_check_branch
          %804 = sbr.rel (%p802) target = $region84
        $region83: #{tpu_custom_call.1} parent=55 // pred_region
          %s805 = sadd.s32 %s473, 8
          %s806 = smul.u32 %s805, 8
          %s807 = scalar_lea.vmem %s413, %s806 [#allocation3]
          %v808 = vld [vmem:[%s807] sm:$0xff]
          %v809 = vmul.f32 %v808, %v555
          %v810 = vadd.f32 %v809, %v569
          %v811 = vmax.f32 %v810, 0.0
          %v812 = vpack.c.bf16 %v811, %v811
          %v814 = vunpack.c.l.b16 %v812
          %v815 = vpack.c.b16 %v814, %v814
          %v817 = vshrl.u32 %v815, 16
          %v819 = vrot.slane %v817, 7
          %v820 = vshll.u32 %v815, 16
          %v822 = vor.u32 %v819, %v820
          %v823 = vrot.slane %v819, 4
          %s826 = scalar_lea.vmem [#allocation2], 72
          %v827 = vld [vmem:[%s826] sm:$0xf]
          %v828 = vsel %vm701, %v822, %v827
          %829 = vst [vmem:[%s826] sm:$0xf] %v828
          %v830 = vld [vmem:[%s826 + $0x4] sm:$0x1]
          %v831 = vsel %vm476, %v823, %v830
          %832 = vst [vmem:[%s826 + $0x4] sm:$0x1] %v831
        $region84: #{tpu_custom_call.1} parent=55 // pred_fallthru
          _
        %v833 = vld [vmem:[%s4] sm:$0x1]
        %v834 = vld [vmem:[#allocation2] sm:$0xf]
        %v835 = vld [vmem:[#allocation2 + $0x8] sm:$0xf]
        %v836 = vld [vmem:[#allocation2 + $0x10] sm:$0xf]
        %v837 = vld [vmem:[#allocation2 + $0x18] sm:$0xf]
        %v838 = vld [vmem:[#allocation2 + $0x20] sm:$0xf]
        %v839 = vld [vmem:[#allocation2 + $0x28] sm:$0xf]
        %v840 = vld [vmem:[#allocation2 + $0x30] sm:$0xf]
        %v841 = vld [vmem:[#allocation2 + $0x38] sm:$0xf]
        %v842 = vld [vmem:[#allocation2 + $0x40] sm:$0xf]
        %v843 = vld [vmem:[#allocation2 + $0x48] sm:$0xf]
        %v844 = vld [vmem:[#allocation2 + $0x4] sm:$0x1]
        %v845 = vld [vmem:[#allocation2 + $0xc] sm:$0x1]
        %v846 = vld [vmem:[#allocation2 + $0x14] sm:$0x1]
        %v847 = vld [vmem:[#allocation2 + $0x1c] sm:$0x1]
        %v848 = vld [vmem:[#allocation2 + $0x24] sm:$0x1]
        %v849 = vld [vmem:[#allocation2 + $0x2c] sm:$0x1]
        %v850 = vld [vmem:[#allocation2 + $0x34] sm:$0x1]
        %v851 = vld [vmem:[#allocation2 + $0x3c] sm:$0x1]
        %v852 = vld [vmem:[#allocation2 + $0x44] sm:$0x1]
        %v853 = vld [vmem:[#allocation2 + $0x4c] sm:$0x1]
        %v854 = vld [vmem:[#allocation2] sm:$0xe]
        %v855 = vld [vmem:[#allocation2 + $0x8] sm:$0xe]
        %v856 = vld [vmem:[#allocation2 + $0x10] sm:$0xe]
        %v857 = vld [vmem:[#allocation2 + $0x18] sm:$0xe]
        %v858 = vld [vmem:[#allocation2 + $0x20] sm:$0xe]
        %v859 = vld [vmem:[#allocation2 + $0x28] sm:$0xe]
        %v860 = vld [vmem:[#allocation2 + $0x30] sm:$0xe]
        %v861 = vld [vmem:[#allocation2 + $0x38] sm:$0xe]
        %v862 = vld [vmem:[#allocation2 + $0x40] sm:$0xe]
        %v863 = vld [vmem:[#allocation2 + $0x48] sm:$0xe]
        %v884 = vunpack.c.l.b16 %v834
        %v885 = vunpack.c.l.b16 %v844
        %v886 = vunpack.c.l.b16 %v835
        %v887 = vunpack.c.l.b16 %v845
        %v888 = vunpack.c.l.b16 %v836
        %v889 = vunpack.c.l.b16 %v846
        %v890 = vunpack.c.l.b16 %v837
        %v891 = vunpack.c.l.b16 %v847
        %v892 = vunpack.c.l.b16 %v838
        %v893 = vunpack.c.l.b16 %v848
        %v894 = vunpack.c.l.b16 %v839
        %v895 = vunpack.c.l.b16 %v849
        %v896 = vunpack.c.l.b16 %v840
        %v897 = vunpack.c.l.b16 %v850
        %v898 = vunpack.c.l.b16 %v841
        %v899 = vunpack.c.l.b16 %v851
        %v900 = vunpack.c.l.b16 %v842
        %v901 = vunpack.c.l.b16 %v852
        %v902 = vunpack.c.l.b16 %v843
        %v903 = vunpack.c.l.b16 %v853
        %v904 = vpack.c.b16 %v885, %v884
        %v905 = vpack.c.b16 %v887, %v886
        %v906 = vpack.c.b16 %v889, %v888
        %v907 = vpack.c.b16 %v891, %v890
        %v908 = vpack.c.b16 %v893, %v892
        %v909 = vpack.c.b16 %v895, %v894
        %v910 = vpack.c.b16 %v897, %v896
        %v911 = vpack.c.b16 %v899, %v898
        %v912 = vpack.c.b16 %v901, %v900
        %v913 = vpack.c.b16 %v903, %v902
        %v915 = vshrl.u32 %v904, 16
        %v917 = vshll.u32 %v904, 16
        %v919 = vrot.slane %v917, 1
        %v920 = vor.u32 %v915, %v919
        %v922 = vshrl.u32 %v905, 16
        %v924 = vshll.u32 %v905, 16
        %v926 = vrot.slane %v924, 1
        %v927 = vor.u32 %v922, %v926
        %v929 = vshrl.u32 %v906, 16
        %v931 = vshll.u32 %v906, 16
        %v933 = vrot.slane %v931, 1
        %v934 = vor.u32 %v929, %v933
        %v936 = vshrl.u32 %v907, 16
        %v938 = vshll.u32 %v907, 16
        %v940 = vrot.slane %v938, 1
        %v941 = vor.u32 %v936, %v940
        %v943 = vshrl.u32 %v908, 16
        %v945 = vshll.u32 %v908, 16
        %v947 = vrot.slane %v945, 1
        %v948 = vor.u32 %v943, %v947
        %v950 = vshrl.u32 %v909, 16
        %v952 = vshll.u32 %v909, 16
        %v954 = vrot.slane %v952, 1
        %v955 = vor.u32 %v950, %v954
        %v957 = vshrl.u32 %v910, 16
        %v959 = vshll.u32 %v910, 16
        %v961 = vrot.slane %v959, 1
        %v962 = vor.u32 %v957, %v961
        %v964 = vshrl.u32 %v911, 16
        %v966 = vshll.u32 %v911, 16
        %v968 = vrot.slane %v966, 1
        %v969 = vor.u32 %v964, %v968
        %v971 = vshrl.u32 %v912, 16
        %v973 = vshll.u32 %v912, 16
        %v975 = vrot.slane %v973, 1
        %v976 = vor.u32 %v971, %v975
        %v978 = vshrl.u32 %v913, 16
        %v980 = vshll.u32 %v913, 16
        %v982 = vrot.slane %v980, 1
        %v983 = vor.u32 %v978, %v982
        %v994 = vunpack.c.l.b16 %v854
        %v995 = vunpack.c.l.b16 %v855
        %v996 = vunpack.c.l.b16 %v856
        %v997 = vunpack.c.l.b16 %v857
        %v998 = vunpack.c.l.b16 %v858
        %v999 = vunpack.c.l.b16 %v859
        %v1000 = vunpack.c.l.b16 %v860
        %v1001 = vunpack.c.l.b16 %v861
        %v1002 = vunpack.c.l.b16 %v862
        %v1003 = vunpack.c.l.b16 %v863
        %v1004 = vpack.c.b16 %v885, %v994
        %v1005 = vpack.c.b16 %v887, %v995
        %v1006 = vpack.c.b16 %v889, %v996
        %v1007 = vpack.c.b16 %v891, %v997
        %v1008 = vpack.c.b16 %v893, %v998
        %v1009 = vpack.c.b16 %v895, %v999
        %v1010 = vpack.c.b16 %v897, %v1000
        %v1011 = vpack.c.b16 %v899, %v1001
        %v1012 = vpack.c.b16 %v901, %v1002
        %v1013 = vpack.c.b16 %v903, %v1003
        %v1014 = vrot.slane %v1004, 1
        %v1015 = vrot.slane %v1005, 1
        %v1016 = vrot.slane %v1006, 1
        %v1017 = vrot.slane %v1007, 1
        %v1018 = vrot.slane %v1008, 1
        %v1019 = vrot.slane %v1009, 1
        %v1020 = vrot.slane %v1010, 1
        %v1021 = vrot.slane %v1011, 1
        %v1022 = vrot.slane %v1012, 1
        %v1023 = vrot.slane %v1013, 1
        %v1024 = vunpack.c.l.b16 %v920
        %v1025 = vunpack.c.l.b16 %v1014
        %v1026 = vunpack.c.l.b16 %v927
        %v1027 = vunpack.c.l.b16 %v1015
        %v1028 = vunpack.c.l.b16 %v934
        %v1029 = vunpack.c.l.b16 %v1016
        %v1030 = vunpack.c.l.b16 %v941
        %v1031 = vunpack.c.l.b16 %v1017
        %v1032 = vunpack.c.l.b16 %v948
        %v1033 = vunpack.c.l.b16 %v1018
        %v1034 = vunpack.c.l.b16 %v955
        %v1035 = vunpack.c.l.b16 %v1019
        %v1036 = vunpack.c.l.b16 %v962
        %v1037 = vunpack.c.l.b16 %v1020
        %v1038 = vunpack.c.l.b16 %v969
        %v1039 = vunpack.c.l.b16 %v1021
        %v1040 = vunpack.c.l.b16 %v976
        %v1041 = vunpack.c.l.b16 %v1022
        %v1042 = vunpack.c.l.b16 %v983
        %v1043 = vunpack.c.l.b16 %v1023
        %v1044 = vld [vmem:[#allocation6] sm:$0xf]
        %v1045 = vld [vmem:[#allocation6 + $0x4] sm:$0xf]
        %v1046 = vld [vmem:[#allocation6 + $0x8] sm:$0xf]
        %v1047 = vld [vmem:[#allocation6 + $0xc] sm:$0xf]
        %v1048 = vld [vmem:[#allocation6 + $0x10] sm:$0xf]
        %v1049 = vld [vmem:[#allocation6 + $0x14] sm:$0xf]
        %v1050 = vld [vmem:[#allocation6 + $0x18] sm:$0xf]
        %v1051 = vld [vmem:[#allocation6 + $0x1c] sm:$0xf]
        %v1052 = vld [vmem:[#allocation6 + $0x20] sm:$0xf]
        %v1053 = vld [vmem:[#allocation6 + $0x24] sm:$0xf]
        %v1054 = vld [vmem:[#allocation6 + $0x28] sm:$0xf]
        %v1055 = vld [vmem:[#allocation6 + $0x2c] sm:$0xf]
        %v1056 = vld [vmem:[#allocation6 + $0x30] sm:$0xf]
        %v1057 = vld [vmem:[#allocation6 + $0x34] sm:$0xf]
        %v1058 = vld [vmem:[#allocation6 + $0x38] sm:$0xf]
        %v1059 = vld [vmem:[#allocation6 + $0x3c] sm:$0xf]
        %v1060 = vld [vmem:[#allocation6 + $0x40] sm:$0xf]
        %v1061 = vld [vmem:[#allocation6 + $0x44] sm:$0xf]
        %v1062 = vld [vmem:[#allocation6 + $0x48] sm:$0xf]
        %v1063 = vld [vmem:[#allocation6 + $0x4c] sm:$0xf]
        %v1064 = vld [vmem:[#allocation6 + $0x50] sm:$0xf]
        %v1065 = vld [vmem:[#allocation6 + $0x54] sm:$0xf]
        %v1066 = vld [vmem:[#allocation6 + $0x58] sm:$0xf]
        %v1067 = vld [vmem:[#allocation6 + $0x5c] sm:$0xf]
        %v1068 = vld [vmem:[#allocation6 + $0x60] sm:$0xf]
        %v1069 = vld [vmem:[#allocation6 + $0x64] sm:$0xf]
        %v1070 = vld [vmem:[#allocation6 + $0x68] sm:$0xf]
        %v1071 = vld [vmem:[#allocation6 + $0x6c] sm:$0xf]
        %v1072 = vld [vmem:[#allocation6 + $0x70] sm:$0xf]
        %v1073 = vld [vmem:[#allocation6 + $0x74] sm:$0xf]
        %v1074 = vld [vmem:[#allocation6 + $0x78] sm:$0xf]
        %v1075 = vld [vmem:[#allocation6 + $0x7c] sm:$0xf]
        %v1076 = vld [vmem:[#allocation6 + $0x80] sm:$0xf]
        %v1077 = vld [vmem:[#allocation6 + $0x84] sm:$0xf]
        %v1078 = vld [vmem:[#allocation6 + $0x88] sm:$0xf]
        %v1079 = vld [vmem:[#allocation6 + $0x8c] sm:$0xf]
        %v1080 = vld [vmem:[#allocation6 + $0x90] sm:$0xf]
        %v1081 = vld [vmem:[#allocation6 + $0x94] sm:$0xf]
        %v1082 = vld [vmem:[#allocation6 + $0x98] sm:$0xf]
        %v1083 = vld [vmem:[#allocation6 + $0x9c] sm:$0xf]
        %v1084 = vld [vmem:[#allocation6 + $0xa0] sm:$0xf]
        %v1085 = vld [vmem:[#allocation6 + $0xa4] sm:$0xf]
        %v1086 = vld [vmem:[#allocation6 + $0xa8] sm:$0xf]
        %v1087 = vld [vmem:[#allocation6 + $0xac] sm:$0xf]
        %v1088 = vld [vmem:[#allocation6 + $0xb0] sm:$0xf]
        %v1089 = vld [vmem:[#allocation6 + $0xb4] sm:$0xf]
        %v1090 = vld [vmem:[#allocation6 + $0xb8] sm:$0xf]
        %v1091 = vld [vmem:[#allocation6 + $0xbc] sm:$0xf]
        %v1092 = vld [vmem:[#allocation6 + $0xc0] sm:$0xf]
        %v1093 = vld [vmem:[#allocation6 + $0xc4] sm:$0xf]
        %v1094 = vld [vmem:[#allocation6 + $0xc8] sm:$0xf]
        %v1095 = vld [vmem:[#allocation6 + $0xcc] sm:$0xf]
        %v1096 = vld [vmem:[#allocation6 + $0xd0] sm:$0xf]
        %v1097 = vld [vmem:[#allocation6 + $0xd4] sm:$0xf]
        %v1098 = vld [vmem:[#allocation6 + $0xd8] sm:$0xf]
        %v1099 = vld [vmem:[#allocation6 + $0xdc] sm:$0xf]
        %v1100 = vld [vmem:[#allocation6 + $0xe0] sm:$0xf]
        %v1101 = vld [vmem:[#allocation6 + $0xe4] sm:$0xf]
        %v1102 = vld [vmem:[#allocation6 + $0xe8] sm:$0xf]
        %v1103 = vld [vmem:[#allocation6 + $0xec] sm:$0xf]
        %v1104 = vld [vmem:[#allocation6 + $0xf0] sm:$0xf]
        %v1105 = vld [vmem:[#allocation6 + $0xf4] sm:$0xf]
        %v1106 = vld [vmem:[#allocation6 + $0xf8] sm:$0xf]
        %v1107 = vld [vmem:[#allocation6 + $0xfc] sm:$0xf]
        %v1108 = vld [vmem:[#allocation6 + $0x100] sm:$0xf]
        %v1109 = vld [vmem:[#allocation6 + $0x104] sm:$0xf]
        %v1110 = vld [vmem:[#allocation6 + $0x108] sm:$0xf]
        %v1111 = vld [vmem:[#allocation6 + $0x10c] sm:$0xf]
        %v1112 = vld [vmem:[#allocation6 + $0x110] sm:$0xf]
        %v1113 = vld [vmem:[#allocation6 + $0x114] sm:$0xf]
        %v1114 = vld [vmem:[#allocation6 + $0x118] sm:$0xf]
        %v1115 = vld [vmem:[#allocation6 + $0x11c] sm:$0xf]
        %v1116 = vld [vmem:[#allocation6 + $0x120] sm:$0xf]
        %v1117 = vld [vmem:[#allocation6 + $0x124] sm:$0xf]
        %v1118 = vld [vmem:[#allocation6 + $0x128] sm:$0xf]
        %v1119 = vld [vmem:[#allocation6 + $0x12c] sm:$0xf]
        %v1120 = vld [vmem:[#allocation6 + $0x130] sm:$0xf]
        %v1121 = vld [vmem:[#allocation6 + $0x134] sm:$0xf]
        %v1122 = vld [vmem:[#allocation6 + $0x138] sm:$0xf]
        %v1123 = vld [vmem:[#allocation6 + $0x13c] sm:$0xf]
        %v1124 = vld [vmem:[#allocation6 + $0x140] sm:$0xf]
        %v1125 = vld [vmem:[#allocation6 + $0x144] sm:$0xf]
        %v1126 = vld [vmem:[#allocation6 + $0x148] sm:$0xf]
        %v1127 = vld [vmem:[#allocation6 + $0x14c] sm:$0xf]
        %v1128 = vld [vmem:[#allocation6 + $0x150] sm:$0xf]
        %v1129 = vld [vmem:[#allocation6 + $0x154] sm:$0xf]
        %v1130 = vld [vmem:[#allocation6 + $0x158] sm:$0xf]
        %v1131 = vld [vmem:[#allocation6 + $0x15c] sm:$0xf]
        %v1132 = vld [vmem:[#allocation6 + $0x160] sm:$0xf]
        %v1133 = vld [vmem:[#allocation6 + $0x164] sm:$0xf]
        %v1134 = vld [vmem:[#allocation6 + $0x168] sm:$0xf]
        %v1135 = vld [vmem:[#allocation6 + $0x16c] sm:$0xf]
        %v1136 = vld [vmem:[#allocation6 + $0x170] sm:$0xf]
        %v1137 = vld [vmem:[#allocation6 + $0x174] sm:$0xf]
        %v1138 = vld [vmem:[#allocation6 + $0x178] sm:$0xf]
        %v1139 = vld [vmem:[#allocation6 + $0x17c] sm:$0xf]
        %v1140 = vld [vmem:[#allocation6 + $0x180] sm:$0xf]
        %v1141 = vld [vmem:[#allocation6 + $0x184] sm:$0xf]
        %v1142 = vld [vmem:[#allocation6 + $0x188] sm:$0xf]
        %v1143 = vld [vmem:[#allocation6 + $0x18c] sm:$0xf]
        %v1144 = vld [vmem:[#allocation6 + $0x190] sm:$0xf]
        %v1145 = vld [vmem:[#allocation6 + $0x194] sm:$0xf]
        %v1146 = vld [vmem:[#allocation6 + $0x198] sm:$0xf]
        %v1147 = vld [vmem:[#allocation6 + $0x19c] sm:$0xf]
        %v1148 = vld [vmem:[#allocation6 + $0x1a0] sm:$0xf]
        %v1149 = vld [vmem:[#allocation6 + $0x1a4] sm:$0xf]
        %v1150 = vld [vmem:[#allocation6 + $0x1a8] sm:$0xf]
        %v1151 = vld [vmem:[#allocation6 + $0x1ac] sm:$0xf]
        %v1152 = vld [vmem:[#allocation6 + $0x1b0] sm:$0xf]
        %v1153 = vld [vmem:[#allocation6 + $0x1b4] sm:$0xf]
        %v1154 = vld [vmem:[#allocation6 + $0x1b8] sm:$0xf]
        %v1155 = vld [vmem:[#allocation6 + $0x1bc] sm:$0xf]
        %v1156 = vld [vmem:[#allocation6 + $0x1c0] sm:$0xf]
        %v1157 = vld [vmem:[#allocation6 + $0x1c4] sm:$0xf]
        %v1158 = vld [vmem:[#allocation6 + $0x1c8] sm:$0xf]
        %v1159 = vld [vmem:[#allocation6 + $0x1cc] sm:$0xf]
        %v1160 = vld [vmem:[#allocation6 + $0x1d0] sm:$0xf]
        %v1161 = vld [vmem:[#allocation6 + $0x1d4] sm:$0xf]
        %v1162 = vld [vmem:[#allocation6 + $0x1d8] sm:$0xf]
        %v1163 = vld [vmem:[#allocation6 + $0x1dc] sm:$0xf]
        %v1164 = vld [vmem:[#allocation6 + $0x1e0] sm:$0xf]
        %v1165 = vld [vmem:[#allocation6 + $0x1e4] sm:$0xf]
        %v1166 = vld [vmem:[#allocation6 + $0x1e8] sm:$0xf]
        %v1167 = vld [vmem:[#allocation6 + $0x1ec] sm:$0xf]
        %v1168 = vld [vmem:[#allocation6 + $0x1f0] sm:$0xf]
        %v1169 = vld [vmem:[#allocation6 + $0x1f4] sm:$0xf]
        %v1170 = vld [vmem:[#allocation6 + $0x1f8] sm:$0xf]
        %v1171 = vld [vmem:[#allocation6 + $0x1fc] sm:$0xf]
        %v1172 = vld [vmem:[#allocation6 + $0x200] sm:$0xf]
        %v1173 = vld [vmem:[#allocation6 + $0x204] sm:$0xf]
        %v1174 = vld [vmem:[#allocation6 + $0x208] sm:$0xf]
        %v1175 = vld [vmem:[#allocation6 + $0x20c] sm:$0xf]
        %v1176 = vld [vmem:[#allocation6 + $0x210] sm:$0xf]
        %v1177 = vld [vmem:[#allocation6 + $0x214] sm:$0xf]
        %v1178 = vld [vmem:[#allocation6 + $0x218] sm:$0xf]
        %v1179 = vld [vmem:[#allocation6 + $0x21c] sm:$0xf]
        %v1180 = vld [vmem:[#allocation6 + $0x220] sm:$0xf]
        %v1181 = vld [vmem:[#allocation6 + $0x224] sm:$0xf]
        %v1182 = vld [vmem:[#allocation6 + $0x228] sm:$0xf]
        %v1183 = vld [vmem:[#allocation6 + $0x22c] sm:$0xf]
        %v1184 = vld [vmem:[#allocation6 + $0x230] sm:$0xf]
        %v1185 = vld [vmem:[#allocation6 + $0x234] sm:$0xf]
        %v1186 = vld [vmem:[#allocation6 + $0x238] sm:$0xf]
        %v1187 = vld [vmem:[#allocation6 + $0x23c] sm:$0xf]
        %v1189 = vlaneseq
        %v1190 = vshrl.u32 %v1189, 7
        %v1191 = vsub.s32 0, %v1190
        %v1192 = vrot.slane %v833, %v1191
        %v1194 = vpack.c.b16 %v886, %v884
        %v1195 = vpack.c.b16 %v1026, %v1024
        %v1196 = vpack.c.b16 %v1027, %v1025
        %v1197 = vpack.c.b16 %v888, %v886
        %v1198 = vpack.c.b16 %v1028, %v1026
        %v1199 = vpack.c.b16 %v1029, %v1027
        %v1200 = vpack.c.b16 %v890, %v888
        %v1201 = vpack.c.b16 %v1030, %v1028
        %v1202 = vpack.c.b16 %v1031, %v1029
        %v1203 = vpack.c.b16 %v892, %v890
        %v1204 = vpack.c.b16 %v1032, %v1030
        %v1205 = vpack.c.b16 %v1033, %v1031
        %v1206 = vpack.c.b16 %v894, %v892
        %v1207 = vpack.c.b16 %v1034, %v1032
        %v1208 = vpack.c.b16 %v1035, %v1033
        %v1209 = vpack.c.b16 %v896, %v894
        %v1210 = vpack.c.b16 %v1036, %v1034
        %v1211 = vpack.c.b16 %v1037, %v1035
        %v1212 = vpack.c.b16 %v898, %v896
        %v1213 = vpack.c.b16 %v1038, %v1036
        %v1214 = vpack.c.b16 %v1039, %v1037
        %v1215 = vpack.c.b16 %v900, %v898
        %v1216 = vpack.c.b16 %v1040, %v1038
        %v1217 = vpack.c.b16 %v1041, %v1039
        %v1218 = vpack.c.b16 %v902, %v900
        %v1219 = vpack.c.b16 %v1042, %v1040
        %v1220 = vpack.c.b16 %v1043, %v1041
        %v1392 = vunpack.c.l.b16 %v1044
        %v1393 = vunpack.c.l.b16 %v1045
        %v1394 = vunpack.c.l.b16 %v1046
        %v1395 = vunpack.c.l.b16 %v1047
        %v1396 = vunpack.c.l.b16 %v1048
        %v1397 = vunpack.c.l.b16 %v1049
        %v1398 = vunpack.c.l.b16 %v1050
        %v1399 = vunpack.c.l.b16 %v1051
        %v1400 = vunpack.c.l.b16 %v1052
        %v1401 = vunpack.c.l.b16 %v1053
        %v1402 = vunpack.c.l.b16 %v1054
        %v1403 = vunpack.c.l.b16 %v1055
        %v1404 = vunpack.c.l.b16 %v1056
        %v1405 = vunpack.c.l.b16 %v1057
        %v1406 = vunpack.c.l.b16 %v1058
        %v1407 = vunpack.c.l.b16 %v1059
        %v1408 = vunpack.c.l.b16 %v1060
        %v1409 = vunpack.c.l.b16 %v1061
        %v1410 = vunpack.c.l.b16 %v1062
        %v1411 = vunpack.c.l.b16 %v1063
        %v1412 = vunpack.c.l.b16 %v1064
        %v1413 = vunpack.c.l.b16 %v1065
        %v1414 = vunpack.c.l.b16 %v1066
        %v1415 = vunpack.c.l.b16 %v1067
        %v1416 = vunpack.c.l.b16 %v1068
        %v1417 = vunpack.c.l.b16 %v1069
        %v1418 = vunpack.c.l.b16 %v1070
        %v1419 = vunpack.c.l.b16 %v1071
        %v1420 = vunpack.c.l.b16 %v1072
        %v1421 = vunpack.c.l.b16 %v1073
        %v1422 = vunpack.c.l.b16 %v1074
        %v1423 = vunpack.c.l.b16 %v1075
        %v1424 = vunpack.c.l.b16 %v1076
        %v1425 = vunpack.c.l.b16 %v1077
        %v1426 = vunpack.c.l.b16 %v1078
        %v1427 = vunpack.c.l.b16 %v1079
        %v1428 = vunpack.c.l.b16 %v1080
        %v1429 = vunpack.c.l.b16 %v1081
        %v1430 = vunpack.c.l.b16 %v1082
        %v1431 = vunpack.c.l.b16 %v1083
        %v1432 = vunpack.c.l.b16 %v1084
        %v1433 = vunpack.c.l.b16 %v1085
        %v1434 = vunpack.c.l.b16 %v1086
        %v1435 = vunpack.c.l.b16 %v1087
        %v1436 = vunpack.c.l.b16 %v1088
        %v1437 = vunpack.c.l.b16 %v1089
        %v1438 = vunpack.c.l.b16 %v1090
        %v1439 = vunpack.c.l.b16 %v1091
        %v1440 = vunpack.c.l.b16 %v1092
        %v1441 = vunpack.c.l.b16 %v1093
        %v1442 = vunpack.c.l.b16 %v1094
        %v1443 = vunpack.c.l.b16 %v1095
        %v1444 = vunpack.c.l.b16 %v1096
        %v1445 = vunpack.c.l.b16 %v1097
        %v1446 = vunpack.c.l.b16 %v1098
        %v1447 = vunpack.c.l.b16 %v1099
        %v1448 = vunpack.c.l.b16 %v1100
        %v1449 = vunpack.c.l.b16 %v1101
        %v1450 = vunpack.c.l.b16 %v1102
        %v1451 = vunpack.c.l.b16 %v1103
        %v1452 = vunpack.c.l.b16 %v1104
        %v1453 = vunpack.c.l.b16 %v1105
        %v1454 = vunpack.c.l.b16 %v1106
        %v1455 = vunpack.c.l.b16 %v1107
        %v1456 = vunpack.c.l.b16 %v1108
        %v1457 = vunpack.c.l.b16 %v1109
        %v1458 = vunpack.c.l.b16 %v1110
        %v1459 = vunpack.c.l.b16 %v1111
        %v1460 = vunpack.c.l.b16 %v1112
        %v1461 = vunpack.c.l.b16 %v1113
        %v1462 = vunpack.c.l.b16 %v1114
        %v1463 = vunpack.c.l.b16 %v1115
        %v1464 = vunpack.c.l.b16 %v1116
        %v1465 = vunpack.c.l.b16 %v1117
        %v1466 = vunpack.c.l.b16 %v1118
        %v1467 = vunpack.c.l.b16 %v1119
        %v1468 = vunpack.c.l.b16 %v1120
        %v1469 = vunpack.c.l.b16 %v1121
        %v1470 = vunpack.c.l.b16 %v1122
        %v1471 = vunpack.c.l.b16 %v1123
        %v1472 = vunpack.c.l.b16 %v1124
        %v1473 = vunpack.c.l.b16 %v1125
        %v1474 = vunpack.c.l.b16 %v1126
        %v1475 = vunpack.c.l.b16 %v1127
        %v1476 = vunpack.c.l.b16 %v1128
        %v1477 = vunpack.c.l.b16 %v1129
        %v1478 = vunpack.c.l.b16 %v1130
        %v1479 = vunpack.c.l.b16 %v1131
        %v1480 = vunpack.c.l.b16 %v1132
        %v1481 = vunpack.c.l.b16 %v1133
        %v1482 = vunpack.c.l.b16 %v1134
        %v1483 = vunpack.c.l.b16 %v1135
        %v1484 = vunpack.c.l.b16 %v1136
        %v1485 = vunpack.c.l.b16 %v1137
        %v1486 = vunpack.c.l.b16 %v1138
        %v1487 = vunpack.c.l.b16 %v1139
        %v1488 = vunpack.c.l.b16 %v1140
        %v1489 = vunpack.c.l.b16 %v1141
        %v1490 = vunpack.c.l.b16 %v1142
        %v1491 = vunpack.c.l.b16 %v1143
        %v1492 = vunpack.c.l.b16 %v1144
        %v1493 = vunpack.c.l.b16 %v1145
        %v1494 = vunpack.c.l.b16 %v1146
        %v1495 = vunpack.c.l.b16 %v1147
        %v1496 = vunpack.c.l.b16 %v1148
        %v1497 = vunpack.c.l.b16 %v1149
        %v1498 = vunpack.c.l.b16 %v1150
        %v1499 = vunpack.c.l.b16 %v1151
        %v1500 = vunpack.c.l.b16 %v1152
        %v1501 = vunpack.c.l.b16 %v1153
        %v1502 = vunpack.c.l.b16 %v1154
        %v1503 = vunpack.c.l.b16 %v1155
        %v1504 = vunpack.c.l.b16 %v1156
        %v1505 = vunpack.c.l.b16 %v1157
        %v1506 = vunpack.c.l.b16 %v1158
        %v1507 = vunpack.c.l.b16 %v1159
        %v1508 = vunpack.c.l.b16 %v1160
        %v1509 = vunpack.c.l.b16 %v1161
        %v1510 = vunpack.c.l.b16 %v1162
        %v1511 = vunpack.c.l.b16 %v1163
        %v1512 = vunpack.c.l.b16 %v1164
        %v1513 = vunpack.c.l.b16 %v1165
        %v1514 = vunpack.c.l.b16 %v1166
        %v1515 = vunpack.c.l.b16 %v1167
        %v1516 = vunpack.c.l.b16 %v1168
        %v1517 = vunpack.c.l.b16 %v1169
        %v1518 = vunpack.c.l.b16 %v1170
        %v1519 = vunpack.c.l.b16 %v1171
        %v1520 = vunpack.c.l.b16 %v1172
        %v1521 = vunpack.c.l.b16 %v1173
        %v1522 = vunpack.c.l.b16 %v1174
        %v1523 = vunpack.c.l.b16 %v1175
        %v1524 = vunpack.c.l.b16 %v1176
        %v1525 = vunpack.c.l.b16 %v1177
        %v1526 = vunpack.c.l.b16 %v1178
        %v1527 = vunpack.c.l.b16 %v1179
        %v1528 = vunpack.c.l.b16 %v1180
        %v1529 = vunpack.c.l.b16 %v1181
        %v1530 = vunpack.c.l.b16 %v1182
        %v1531 = vunpack.c.l.b16 %v1183
        %v1532 = vunpack.c.l.b16 %v1184
        %v1533 = vunpack.c.l.b16 %v1185
        %v1534 = vunpack.c.l.b16 %v1186
        %v1535 = vunpack.c.l.b16 %v1187
        %v1536 = vpack.c.b16 %v1393, %v1392
        %v1537 = vpack.c.b16 %v1395, %v1394
        %v1538 = vpack.c.b16 %v1397, %v1396
        %v1539 = vpack.c.b16 %v1399, %v1398
        %v1540 = vpack.c.b16 %v1401, %v1400
        %v1541 = vpack.c.b16 %v1403, %v1402
        %v1542 = vpack.c.b16 %v1405, %v1404
        %v1543 = vpack.c.b16 %v1407, %v1406
        %v1544 = vpack.c.b16 %v1409, %v1408
        %v1545 = vpack.c.b16 %v1411, %v1410
        %v1546 = vpack.c.b16 %v1413, %v1412
        %v1547 = vpack.c.b16 %v1415, %v1414
        %v1548 = vpack.c.b16 %v1417, %v1416
        %v1549 = vpack.c.b16 %v1419, %v1418
        %v1550 = vpack.c.b16 %v1421, %v1420
        %v1551 = vpack.c.b16 %v1423, %v1422
        %v1552 = vpack.c.b16 %v1425, %v1424
        %v1553 = vpack.c.b16 %v1427, %v1426
        %v1554 = vpack.c.b16 %v1429, %v1428
        %v1555 = vpack.c.b16 %v1431, %v1430
        %v1556 = vpack.c.b16 %v1433, %v1432
        %v1557 = vpack.c.b16 %v1435, %v1434
        %v1558 = vpack.c.b16 %v1437, %v1436
        %v1559 = vpack.c.b16 %v1439, %v1438
        %v1560 = vpack.c.b16 %v1441, %v1440
        %v1561 = vpack.c.b16 %v1443, %v1442
        %v1562 = vpack.c.b16 %v1445, %v1444
        %v1563 = vpack.c.b16 %v1447, %v1446
        %v1564 = vpack.c.b16 %v1449, %v1448
        %v1565 = vpack.c.b16 %v1451, %v1450
        %v1566 = vpack.c.b16 %v1453, %v1452
        %v1567 = vpack.c.b16 %v1455, %v1454
        %v1568 = vpack.c.b16 %v1457, %v1456
        %v1569 = vpack.c.b16 %v1459, %v1458
        %v1570 = vpack.c.b16 %v1461, %v1460
        %v1571 = vpack.c.b16 %v1463, %v1462
        %v1572 = vpack.c.b16 %v1465, %v1464
        %v1573 = vpack.c.b16 %v1467, %v1466
        %v1574 = vpack.c.b16 %v1469, %v1468
        %v1575 = vpack.c.b16 %v1471, %v1470
        %v1576 = vpack.c.b16 %v1473, %v1472
        %v1577 = vpack.c.b16 %v1475, %v1474
        %v1578 = vpack.c.b16 %v1477, %v1476
        %v1579 = vpack.c.b16 %v1479, %v1478
        %v1580 = vpack.c.b16 %v1481, %v1480
        %v1581 = vpack.c.b16 %v1483, %v1482
        %v1582 = vpack.c.b16 %v1485, %v1484
        %v1583 = vpack.c.b16 %v1487, %v1486
        %v1584 = vpack.c.b16 %v1489, %v1488
        %v1585 = vpack.c.b16 %v1491, %v1490
        %v1586 = vpack.c.b16 %v1493, %v1492
        %v1587 = vpack.c.b16 %v1495, %v1494
        %v1588 = vpack.c.b16 %v1497, %v1496
        %v1589 = vpack.c.b16 %v1499, %v1498
        %v1590 = vpack.c.b16 %v1501, %v1500
        %v1591 = vpack.c.b16 %v1503, %v1502
        %v1592 = vpack.c.b16 %v1505, %v1504
        %v1593 = vpack.c.b16 %v1507, %v1506
        %v1594 = vpack.c.b16 %v1509, %v1508
        %v1595 = vpack.c.b16 %v1511, %v1510
        %v1596 = vpack.c.b16 %v1513, %v1512
        %v1597 = vpack.c.b16 %v1515, %v1514
        %v1598 = vpack.c.b16 %v1517, %v1516
        %v1599 = vpack.c.b16 %v1519, %v1518
        %v1600 = vpack.c.b16 %v1521, %v1520
        %v1601 = vpack.c.b16 %v1523, %v1522
        %v1602 = vpack.c.b16 %v1525, %v1524
        %v1603 = vpack.c.b16 %v1527, %v1526
        %v1604 = vpack.c.b16 %v1529, %v1528
        %v1605 = vpack.c.b16 %v1531, %v1530
        %v1606 = vpack.c.b16 %v1533, %v1532
        %v1607 = vpack.c.b16 %v1535, %v1534
        %1680 = vmatprep.subr.bf16.mxu0 0
        %1681 = vmatpush1.bf16.msra.mxu0 %v1536
        %1682 = vmatprep.subr.bf16.mxu0 0
        %1683 = vmatpush1.bf16.msra.mxu0 %v1537
        %1684 = vmatprep.subr.bf16.mxu0 0
        %1685 = vmatpush1.bf16.msra.mxu0 %v1538
        %1686 = vmatprep.subr.bf16.mxu0 0
        %1687 = vmatpush1.bf16.msra.mxu0 %v1539
        %1688 = vmatprep.subr.bf16.mxu0 0
        %1689 = vmatpush1.bf16.msra.mxu0 %v1540
        %1690 = vmatprep.subr.bf16.mxu0 0
        %1691 = vmatpush1.bf16.msra.mxu0 %v1541
        %1692 = vmatprep.subr.bf16.mxu0 0
        %1693 = vmatpush1.bf16.msra.mxu0 %v1542
        %1694 = vmatprep.subr.bf16.mxu0 0
        %1695 = vmatpush1.bf16.msra.mxu0 %v1543
        %1696 = vmatprep.subr.bf16.mxu0 0
        %1697 = vmatpush1.bf16.msra.mxu0 %v1544
        %1698 = vmatprep.subr.bf16.mxu0 0
        %1699 = vmatpush1.bf16.msra.mxu0 %v1545
        %1700 = vmatprep.subr.bf16.mxu0 0
        %1701 = vmatpush1.bf16.msra.mxu0 %v1546
        %1702 = vmatprep.subr.bf16.mxu0 0
        %1703 = vmatpush1.bf16.msra.mxu0 %v1547
        %1704 = vmatprep.subr.bf16.mxu0 0
        %1705 = vmatpush1.bf16.msra.mxu0 %v1548
        %1706 = vmatprep.subr.bf16.mxu0 0
        %1707 = vmatpush1.bf16.msra.mxu0 %v1549
        %1708 = vmatprep.subr.bf16.mxu0 0
        %1709 = vmatpush1.bf16.msra.mxu0 %v1550
        %1710 = vmatprep.subr.bf16.mxu0 0
        %1711 = vmatpush1.bf16.msra.mxu0 %v1551
        %1712 = vmatprep.mubr.bf16.mxu0 %v1195
        %1713 = vmatmul.mubr.bf16.gmra.mrb[0].mxu0 %v1194
        %v1714 = vpop.f32.mrb[0].mxu0
        %v1715 = vadd.f32 %v1192, %v1714
        %v1716 = vpop.f32.mrb[0].mxu0
        %v1717 = vpop.f32.mrb[0].mxu0
        %v1718 = vadd.f32 %v1192, %v1717
        %v1719 = vpop.f32.mrb[0].mxu0
        %1720 = vmatprep.mubr.bf16.mxu0 %v1201
        %1721 = vmatmul.mubr.bf16.gmra.mrb[0].mxu0 %v1200
        %v1722 = vpop.f32.mrb[0].mxu0
        %v1723 = vadd.f32 %v1192, %v1722
        %v1724 = vpop.f32.mrb[0].mxu0
        %v1725 = vpop.f32.mrb[0].mxu0
        %v1726 = vadd.f32 %v1192, %v1725
        %v1727 = vpop.f32.mrb[0].mxu0
        %1728 = vmatprep.mubr.bf16.mxu0 %v1207
        %1729 = vmatmul.mubr.bf16.gmra.mrb[0].mxu0 %v1206
        %v1730 = vpop.f32.mrb[0].mxu0
        %v1731 = vadd.f32 %v1192, %v1730
        %v1732 = vpop.f32.mrb[0].mxu0
        %v1733 = vpop.f32.mrb[0].mxu0
        %v1734 = vadd.f32 %v1192, %v1733
        %v1735 = vpop.f32.mrb[0].mxu0
        %1736 = vmatprep.mubr.bf16.mxu0 %v1213
        %1737 = vmatmul.mubr.bf16.gmra.mrb[0].mxu0 %v1212
        %v1738 = vpop.f32.mrb[0].mxu0
        %v1739 = vadd.f32 %v1192, %v1738
        %v1740 = vpop.f32.mrb[0].mxu0
        %v1741 = vpop.f32.mrb[0].mxu0
        %v1742 = vadd.f32 %v1192, %v1741
        %v1743 = vpop.f32.mrb[0].mxu0
        %1744 = vdwg.mxu0
        %1745 = vmatprep.subr.bf16.mxu0 0
        %1746 = vmatpush1.bf16.msra.mxu0 %v1552
        %1747 = vmatprep.subr.bf16.mxu0 0
        %1748 = vmatpush1.bf16.msra.mxu0 %v1553
        %1749 = vmatprep.subr.bf16.mxu0 0
        %1750 = vmatpush1.bf16.msra.mxu0 %v1554
        %1751 = vmatprep.subr.bf16.mxu0 0
        %1752 = vmatpush1.bf16.msra.mxu0 %v1555
        %1753 = vmatprep.subr.bf16.mxu0 0
        %1754 = vmatpush1.bf16.msra.mxu0 %v1556
        %1755 = vmatprep.subr.bf16.mxu0 0
        %1756 = vmatpush1.bf16.msra.mxu0 %v1557
        %1757 = vmatprep.subr.bf16.mxu0 0
        %1758 = vmatpush1.bf16.msra.mxu0 %v1558
        %1759 = vmatprep.subr.bf16.mxu0 0
        %1760 = vmatpush1.bf16.msra.mxu0 %v1559
        %1761 = vmatprep.subr.bf16.mxu0 0
        %1762 = vmatpush1.bf16.msra.mxu0 %v1560
        %1763 = vmatprep.subr.bf16.mxu0 0
        %1764 = vmatpush1.bf16.msra.mxu0 %v1561
        %1765 = vmatprep.subr.bf16.mxu0 0
        %1766 = vmatpush1.bf16.msra.mxu0 %v1562
        %1767 = vmatprep.subr.bf16.mxu0 0
        %1768 = vmatpush1.bf16.msra.mxu0 %v1563
        %1769 = vmatprep.subr.bf16.mxu0 0
        %1770 = vmatpush1.bf16.msra.mxu0 %v1564
        %1771 = vmatprep.subr.bf16.mxu0 0
        %1772 = vmatpush1.bf16.msra.mxu0 %v1565
        %1773 = vmatprep.subr.bf16.mxu0 0
        %1774 = vmatpush1.bf16.msra.mxu0 %v1566
        %1775 = vmatprep.subr.bf16.mxu0 0
        %1776 = vmatpush1.bf16.msra.mxu0 %v1567
        %1777 = vmatprep.mubr.bf16.mxu0 %v1197
        %1778 = vmatmul.mubr.bf16.gmra.mrb[0].mxu0 %v1196
        %v1779 = vpop.f32.mrb[0].mxu0
        %v1780 = vadd.f32 %v1715, %v1779
        %v1781 = vpop.f32.mrb[0].mxu0
        %v1782 = vpop.f32.mrb[0].mxu0
        %v1783 = vadd.f32 %v1718, %v1782
        %v1784 = vpop.f32.mrb[0].mxu0
        %1785 = vmatprep.mubr.bf16.mxu0 %v1203
        %1786 = vmatmul.mubr.bf16.gmra.mrb[0].mxu0 %v1202
        %v1787 = vpop.f32.mrb[0].mxu0
        %v1788 = vadd.f32 %v1723, %v1787
        %v1789 = vpop.f32.mrb[0].mxu0
        %v1790 = vpop.f32.mrb[0].mxu0
        %v1791 = vadd.f32 %v1726, %v1790
        %v1792 = vpop.f32.mrb[0].mxu0
        %1793 = vmatprep.mubr.bf16.mxu0 %v1209
        %1794 = vmatmul.mubr.bf16.gmra.mrb[0].mxu0 %v1208
        %v1795 = vpop.f32.mrb[0].mxu0
        %v1796 = vadd.f32 %v1731, %v1795
        %v1797 = vpop.f32.mrb[0].mxu0
        %v1798 = vpop.f32.mrb[0].mxu0
        %v1799 = vadd.f32 %v1734, %v1798
        %v1800 = vpop.f32.mrb[0].mxu0
        %1801 = vmatprep.mubr.bf16.mxu0 %v1215
        %1802 = vmatmul.mubr.bf16.gmra.mrb[0].mxu0 %v1214
        %v1803 = vpop.f32.mrb[0].mxu0
        %v1804 = vadd.f32 %v1739, %v1803
        %v1805 = vpop.f32.mrb[0].mxu0
        %v1806 = vpop.f32.mrb[0].mxu0
        %v1807 = vadd.f32 %v1742, %v1806
        %v1808 = vpop.f32.mrb[0].mxu0
        %1809 = vdwg.mxu0
        %1810 = vmatprep.subr.bf16.mxu0 0
        %1811 = vmatpush1.bf16.msra.mxu0 %v1568
        %1812 = vmatprep.subr.bf16.mxu0 0
        %1813 = vmatpush1.bf16.msra.mxu0 %v1569
        %1814 = vmatprep.subr.bf16.mxu0 0
        %1815 = vmatpush1.bf16.msra.mxu0 %v1570
        %1816 = vmatprep.subr.bf16.mxu0 0
        %1817 = vmatpush1.bf16.msra.mxu0 %v1571
        %1818 = vmatprep.subr.bf16.mxu0 0
        %1819 = vmatpush1.bf16.msra.mxu0 %v1572
        %1820 = vmatprep.subr.bf16.mxu0 0
        %1821 = vmatpush1.bf16.msra.mxu0 %v1573
        %1822 = vmatprep.subr.bf16.mxu0 0
        %1823 = vmatpush1.bf16.msra.mxu0 %v1574
        %1824 = vmatprep.subr.bf16.mxu0 0
        %1825 = vmatpush1.bf16.msra.mxu0 %v1575
        %1826 = vmatprep.subr.bf16.mxu0 0
        %1827 = vmatpush1.bf16.msra.mxu0 %v1576
        %1828 = vmatprep.subr.bf16.mxu0 0
        %1829 = vmatpush1.bf16.msra.mxu0 %v1577
        %1830 = vmatprep.subr.bf16.mxu0 0
        %1831 = vmatpush1.bf16.msra.mxu0 %v1578
        %1832 = vmatprep.subr.bf16.mxu0 0
        %1833 = vmatpush1.bf16.msra.mxu0 %v1579
        %1834 = vmatprep.subr.bf16.mxu0 0
        %1835 = vmatpush1.bf16.msra.mxu0 %v1580
        %1836 = vmatprep.subr.bf16.mxu0 0
        %1837 = vmatpush1.bf16.msra.mxu0 %v1581
        %1838 = vmatprep.subr.bf16.mxu0 0
        %1839 = vmatpush1.bf16.msra.mxu0 %v1582
        %1840 = vmatprep.subr.bf16.mxu0 0
        %1841 = vmatpush1.bf16.msra.mxu0 %v1583
        %1842 = vmatprep.mubr.bf16.mxu0 %v1199
        %1843 = vmatmul.mubr.bf16.gmra.mrb[0].mxu0 %v1198
        %v1844 = vpop.f32.mrb[0].mxu0
        %v1845 = vadd.f32 %v1780, %v1844
        %v1846 = vpop.f32.mrb[0].mxu0
        %v1847 = vpop.f32.mrb[0].mxu0
        %v1848 = vadd.f32 %v1783, %v1847
        %v1849 = vpop.f32.mrb[0].mxu0
        %1850 = vmatprep.mubr.bf16.mxu0 %v1205
        %1851 = vmatmul.mubr.bf16.gmra.mrb[0].mxu0 %v1204
        %v1852 = vpop.f32.mrb[0].mxu0
        %v1853 = vadd.f32 %v1788, %v1852
        %v1854 = vpop.f32.mrb[0].mxu0
        %v1855 = vpop.f32.mrb[0].mxu0
        %v1856 = vadd.f32 %v1791, %v1855
        %v1857 = vpop.f32.mrb[0].mxu0
        %1858 = vmatprep.mubr.bf16.mxu0 %v1211
        %1859 = vmatmul.mubr.bf16.gmra.mrb[0].mxu0 %v1210
        %v1860 = vpop.f32.mrb[0].mxu0
        %v1861 = vadd.f32 %v1796, %v1860
        %v1862 = vpop.f32.mrb[0].mxu0
        %v1863 = vpop.f32.mrb[0].mxu0
        %v1864 = vadd.f32 %v1799, %v1863
        %v1865 = vpop.f32.mrb[0].mxu0
        %1866 = vmatprep.mubr.bf16.mxu0 %v1217
        %1867 = vmatmul.mubr.bf16.gmra.mrb[0].mxu0 %v1216
        %v1868 = vpop.f32.mrb[0].mxu0
        %v1869 = vadd.f32 %v1804, %v1868
        %v1870 = vpop.f32.mrb[0].mxu0
        %v1871 = vpop.f32.mrb[0].mxu0
        %v1872 = vadd.f32 %v1807, %v1871
        %v1873 = vpop.f32.mrb[0].mxu0
        %1874 = vdwg.mxu0
        %1875 = vmatprep.subr.bf16.mxu0 0
        %1876 = vmatpush1.bf16.msra.mxu0 %v1584
        %1877 = vmatprep.subr.bf16.mxu0 0
        %1878 = vmatpush1.bf16.msra.mxu0 %v1585
        %1879 = vmatprep.subr.bf16.mxu0 0
        %1880 = vmatpush1.bf16.msra.mxu0 %v1586
        %1881 = vmatprep.subr.bf16.mxu0 0
        %1882 = vmatpush1.bf16.msra.mxu0 %v1587
        %1883 = vmatprep.subr.bf16.mxu0 0
        %1884 = vmatpush1.bf16.msra.mxu0 %v1588
        %1885 = vmatprep.subr.bf16.mxu0 0
        %1886 = vmatpush1.bf16.msra.mxu0 %v1589
        %1887 = vmatprep.subr.bf16.mxu0 0
        %1888 = vmatpush1.bf16.msra.mxu0 %v1590
        %1889 = vmatprep.subr.bf16.mxu0 0
        %1890 = vmatpush1.bf16.msra.mxu0 %v1591
        %1891 = vmatprep.subr.bf16.mxu0 0
        %1892 = vmatpush1.bf16.msra.mxu0 %v1592
        %1893 = vmatprep.subr.bf16.mxu0 0
        %1894 = vmatpush1.bf16.msra.mxu0 %v1593
        %1895 = vmatprep.subr.bf16.mxu0 0
        %1896 = vmatpush1.bf16.msra.mxu0 %v1594
        %1897 = vmatprep.subr.bf16.mxu0 0
        %1898 = vmatpush1.bf16.msra.mxu0 %v1595
        %1899 = vmatprep.subr.bf16.mxu0 0
        %1900 = vmatpush1.bf16.msra.mxu0 %v1596
        %1901 = vmatprep.subr.bf16.mxu0 0
        %1902 = vmatpush1.bf16.msra.mxu0 %v1597
        %1903 = vmatprep.subr.bf16.mxu0 0
        %1904 = vmatpush1.bf16.msra.mxu0 %v1598
        %1905 = vmatprep.subr.bf16.mxu0 0
        %1906 = vmatpush1.bf16.msra.mxu0 %v1599
        %1907 = vmatprep.mubr.bf16.mxu0 %v1201
        %1908 = vmatmul.mubr.bf16.gmra.mrb[0].mxu0 %v1200
        %v1909 = vpop.f32.mrb[0].mxu0
        %v1910 = vadd.f32 %v1845, %v1909
        %v1911 = vpop.f32.mrb[0].mxu0
        %v1912 = vpop.f32.mrb[0].mxu0
        %v1913 = vadd.f32 %v1848, %v1912
        %v1914 = vpop.f32.mrb[0].mxu0
        %1915 = vmatprep.mubr.bf16.mxu0 %v1207
        %1916 = vmatmul.mubr.bf16.gmra.mrb[0].mxu0 %v1206
        %v1917 = vpop.f32.mrb[0].mxu0
        %v1918 = vadd.f32 %v1853, %v1917
        %v1919 = vpop.f32.mrb[0].mxu0
        %v1920 = vpop.f32.mrb[0].mxu0
        %v1921 = vadd.f32 %v1856, %v1920
        %v1922 = vpop.f32.mrb[0].mxu0
        %1923 = vmatprep.mubr.bf16.mxu0 %v1213
        %1924 = vmatmul.mubr.bf16.gmra.mrb[0].mxu0 %v1212
        %v1925 = vpop.f32.mrb[0].mxu0
        %v1926 = vadd.f32 %v1861, %v1925
        %v1927 = vpop.f32.mrb[0].mxu0
        %v1928 = vpop.f32.mrb[0].mxu0
        %v1929 = vadd.f32 %v1864, %v1928
        %v1930 = vpop.f32.mrb[0].mxu0
        %1931 = vmatprep.mubr.bf16.mxu0 %v1219
        %1932 = vmatmul.mubr.bf16.gmra.mrb[0].mxu0 %v1218
        %v1933 = vpop.f32.mrb[0].mxu0
        %v1934 = vadd.f32 %v1869, %v1933
        %v1935 = vpop.f32.mrb[0].mxu0
        %v1936 = vpop.f32.mrb[0].mxu0
        %v1937 = vadd.f32 %v1872, %v1936
        %v1938 = vpop.f32.mrb[0].mxu0
        %1939 = vdwg.mxu0
        %1940 = vmatprep.subr.bf16.mxu0 0
        %1941 = vmatpush1.bf16.msra.mxu0 %v1600
        %1942 = vmatprep.subr.bf16.mxu0 0
        %1943 = vmatpush1.bf16.msra.mxu0 %v1601
        %1944 = vmatprep.subr.bf16.mxu0 0
        %1945 = vmatpush1.bf16.msra.mxu0 %v1602
        %1946 = vmatprep.subr.bf16.mxu0 0
        %1947 = vmatpush1.bf16.msra.mxu0 %v1603
        %1948 = vmatprep.subr.bf16.mxu0 0
        %1949 = vmatpush1.bf16.msra.mxu0 %v1604
        %1950 = vmatprep.subr.bf16.mxu0 0
        %1951 = vmatpush1.bf16.msra.mxu0 %v1605
        %1952 = vmatprep.subr.bf16.mxu0 0
        %1953 = vmatpush1.bf16.msra.mxu0 %v1606
        %1954 = vmatprep.subr.bf16.mxu0 0
        %1955 = vmatpush1.bf16.msra.mxu0 %v1607
        %1956 = vmatprep.subr.bf16.mxu0 0
        %1957 = vmatpush1.bf16.msra.mxu0 0
        %1958 = vmatprep.subr.bf16.mxu0 0
        %1959 = vmatpush1.bf16.msra.mxu0 0
        %1960 = vmatprep.subr.bf16.mxu0 0
        %1961 = vmatpush1.bf16.msra.mxu0 0
        %1962 = vmatprep.subr.bf16.mxu0 0
        %1963 = vmatpush1.bf16.msra.mxu0 0
        %1964 = vmatprep.subr.bf16.mxu0 0
        %1965 = vmatpush1.bf16.msra.mxu0 0
        %1966 = vmatprep.subr.bf16.mxu0 0
        %1967 = vmatpush1.bf16.msra.mxu0 0
        %1968 = vmatprep.subr.bf16.mxu0 0
        %1969 = vmatpush1.bf16.msra.mxu0 0
        %1970 = vmatprep.subr.bf16.mxu0 0
        %1971 = vmatpush1.bf16.msra.mxu0 0
        %1972 = vmatprep.mubr.bf16.mxu0 0
        %1973 = vmatmul.mubr.bf16.gmra.mrb[0].mxu0 %v1202
        %v1974 = vpop.f32.mrb[0].mxu0
        %v1975 = vadd.f32 %v1910, %v1974
        %v1976 = vpop.f32.mrb[0].mxu0
        %v1977 = vpop.f32.mrb[0].mxu0
        %v1978 = vadd.f32 %v1913, %v1977
        %v1979 = vpop.f32.mrb[0].mxu0
        %1980 = vmatprep.mubr.bf16.mxu0 0
        %1981 = vmatmul.mubr.bf16.gmra.mrb[0].mxu0 %v1208
        %v1982 = vpop.f32.mrb[0].mxu0
        %v1983 = vadd.f32 %v1918, %v1982
        %v1984 = vpop.f32.mrb[0].mxu0
        %v1985 = vpop.f32.mrb[0].mxu0
        %v1986 = vadd.f32 %v1921, %v1985
        %v1987 = vpop.f32.mrb[0].mxu0
        %1988 = vmatprep.mubr.bf16.mxu0 0
        %1989 = vmatmul.mubr.bf16.gmra.mrb[0].mxu0 %v1214
        %v1990 = vpop.f32.mrb[0].mxu0
        %v1991 = vadd.f32 %v1926, %v1990
        %v1992 = vpop.f32.mrb[0].mxu0
        %v1993 = vpop.f32.mrb[0].mxu0
        %v1994 = vadd.f32 %v1929, %v1993
        %v1995 = vpop.f32.mrb[0].mxu0
        %1996 = vmatprep.mubr.bf16.mxu0 0
        %1997 = vmatmul.mubr.bf16.gmra.mrb[0].mxu0 %v1220
        %v1998 = vpop.f32.mrb[0].mxu0
        %v1999 = vadd.f32 %v1934, %v1998
        %v2000 = vpop.f32.mrb[0].mxu0
        %v2001 = vpop.f32.mrb[0].mxu0
        %v2002 = vadd.f32 %v1937, %v2001
        %v2003 = vpop.f32.mrb[0].mxu0
        %2004 = vdwg.mxu0
        %v2005 = vpack.c.bf16 %v1975, %v1975
        %v2006 = vpack.c.bf16 %v1978, %v1978
        %v2007 = vpack.c.bf16 %v1983, %v1983
        %v2008 = vpack.c.bf16 %v1986, %v1986
        %v2009 = vpack.c.bf16 %v1991, %v1991
        %v2010 = vpack.c.bf16 %v1994, %v1994
        %v2011 = vpack.c.bf16 %v1999, %v1999
        %v2012 = vpack.c.bf16 %v2002, %v2002
        %2013 = vst [vmem:[%s455] sm:$0xf] %v2005
        %2014 = vst [vmem:[%s455 + $0x4] sm:$0xf] %v2006
        %2015 = vst [vmem:[%s455 + $0x8] sm:$0xf] %v2007
        %2016 = vst [vmem:[%s455 + $0xc] sm:$0xf] %v2008
        %2017 = vst [vmem:[%s455 + $0x10] sm:$0xf] %v2009
        %2018 = vst [vmem:[%s455 + $0x14] sm:$0xf] %v2010
        %2019 = vst [vmem:[%s455 + $0x18] sm:$0xf] %v2011
        %2020 = vst [vmem:[%s455 + $0x1c] sm:$0xf] %v2012
        %v2021 = vadd.f32 %v1975, %v1978
        %v2022 = vadd.f32 %v2021, %v1983
        %v2023 = vadd.f32 %v2022, %v1986
        %v2024 = vadd.f32 %v2023, %v1991
        %v2025 = vadd.f32 %v2024, %v1994
        %v2026 = vadd.f32 %v2025, %v1999
        %v2027 = vadd.f32 %v2026, %v2002
        %v2028 = vrot.slane %v2027, 4
        %v2029 = vadd.f32 %v2027, %v2028
        %v2030 = vrot.slane %v2029, 2
        %v2031 = vadd.f32 %v2029, %v2030
        %v2032 = vrot.slane %v2031, 1
        %v2033 = vadd.f32 %v2031, %v2032
        %v2034 = vmul.f32 %v1975, %v1975
        %v2035 = vmul.f32 %v1978, %v1978
        %v2036 = vmul.f32 %v1983, %v1983
        %v2037 = vmul.f32 %v1986, %v1986
        %v2038 = vmul.f32 %v1991, %v1991
        %v2039 = vmul.f32 %v1994, %v1994
        %v2040 = vmul.f32 %v1999, %v1999
        %v2041 = vmul.f32 %v2002, %v2002
        %v2042 = vadd.f32 %v2034, %v2035
        %v2043 = vadd.f32 %v2042, %v2036
        %v2044 = vadd.f32 %v2043, %v2037
        %v2045 = vadd.f32 %v2044, %v2038
        %v2046 = vadd.f32 %v2045, %v2039
        %v2047 = vadd.f32 %v2046, %v2040
        %v2048 = vadd.f32 %v2047, %v2041
        %v2049 = vrot.slane %v2048, 4
        %v2050 = vadd.f32 %v2048, %v2049
        %v2051 = vrot.slane %v2050, 2
        %v2052 = vadd.f32 %v2050, %v2051
        %v2053 = vrot.slane %v2052, 1
        %v2054 = vadd.f32 %v2052, %v2053
        %vm2055 = vcmask 1040384
        %v2056 = vsel %vm2055, %v2033, %v2054
        %vm2057 = vcmask 1041408
        %v2058 = vsel %vm2057, %v2056, 0.0
        %2059 = vst [vmem:[%s469] sm:$0xff] %v2058
        %v2060 = vld [vmem:[%s5] sm:$0x1]
        %v2061 = vld [vmem:[%s6] sm:$0x1]
        %v2062 = vld [vmem:[%s542] sm:$0xff]
        %v2063 = vld [vmem:[%s542 + $0x8] sm:$0xff]
        %v2064 = vld [vmem:[%s542 + $0x10] sm:$0xff]
        %v2065 = vld [vmem:[%s542 + $0x18] sm:$0xff]
        %v2066 = vld [vmem:[%s542 + $0x20] sm:$0xff]
        %v2067 = vld [vmem:[%s542 + $0x28] sm:$0xff]
        %v2068 = vld [vmem:[%s542 + $0x30] sm:$0xff]
        %v2069 = vld [vmem:[%s542 + $0x38] sm:$0xff]
        %v2071 = vlaneseq
        %v2072 = vshrl.u32 %v2071, 7
        %v2073 = vsub.s32 0, %v2072
        %v2074 = vrot.slane %v2060, %v2073
        %v2076 = vmul.f32 %v2062, %v2074
        %v2077 = vmul.f32 %v2063, %v2074
        %v2078 = vmul.f32 %v2064, %v2074
        %v2079 = vmul.f32 %v2065, %v2074
        %v2080 = vmul.f32 %v2066, %v2074
        %v2081 = vmul.f32 %v2067, %v2074
        %v2082 = vmul.f32 %v2068, %v2074
        %v2083 = vmul.f32 %v2069, %v2074
        %v2085 = vlaneseq
        %v2086 = vshrl.u32 %v2085, 7
        %v2087 = vsub.s32 0, %v2086
        %v2088 = vrot.slane %v2061, %v2087
        %v2090 = vadd.f32 %v2076, %v2088
        %v2091 = vadd.f32 %v2077, %v2088
        %v2092 = vadd.f32 %v2078, %v2088
        %v2093 = vadd.f32 %v2079, %v2088
        %v2094 = vadd.f32 %v2080, %v2088
        %v2095 = vadd.f32 %v2081, %v2088
        %v2096 = vadd.f32 %v2082, %v2088
        %v2097 = vadd.f32 %v2083, %v2088
        %v2098 = vmax.f32 %v2090, 0.0
        %v2099 = vmax.f32 %v2091, 0.0
        %v2100 = vmax.f32 %v2092, 0.0
        %v2101 = vmax.f32 %v2093, 0.0
        %v2102 = vmax.f32 %v2094, 0.0
        %v2103 = vmax.f32 %v2095, 0.0
        %v2104 = vmax.f32 %v2096, 0.0
        %v2105 = vmax.f32 %v2097, 0.0
        %v2106 = vpack.c.bf16 %v2098, %v2098
        %v2107 = vpack.c.bf16 %v2099, %v2099
        %v2108 = vpack.c.bf16 %v2100, %v2100
        %v2109 = vpack.c.bf16 %v2101, %v2101
        %v2110 = vpack.c.bf16 %v2102, %v2102
        %v2111 = vpack.c.bf16 %v2103, %v2103
        %v2112 = vpack.c.bf16 %v2104, %v2104
        %v2113 = vpack.c.bf16 %v2105, %v2105
        %v2122 = vunpack.c.l.b16 %v2106
        %v2123 = vunpack.c.l.b16 %v2107
        %v2124 = vunpack.c.l.b16 %v2108
        %v2125 = vunpack.c.l.b16 %v2109
        %v2126 = vunpack.c.l.b16 %v2110
        %v2127 = vunpack.c.l.b16 %v2111
        %v2128 = vunpack.c.l.b16 %v2112
        %v2129 = vunpack.c.l.b16 %v2113
        %v2130 = vpack.c.b16 %v2122, %v2122
        %v2131 = vpack.c.b16 %v2123, %v2123
        %v2132 = vpack.c.b16 %v2124, %v2124
        %v2133 = vpack.c.b16 %v2125, %v2125
        %v2134 = vpack.c.b16 %v2126, %v2126
        %v2135 = vpack.c.b16 %v2127, %v2127
        %v2136 = vpack.c.b16 %v2128, %v2128
        %v2137 = vpack.c.b16 %v2129, %v2129
        %v2139 = vshrl.u32 %v2130, 16
        %v2141 = vrot.slane %v2139, 7
        %v2142 = vshll.u32 %v2130, 16
        %v2144 = vor.u32 %v2141, %v2142
        %v2145 = vrot.slane %v2141, 4
        %v2147 = vshrl.u32 %v2131, 16
        %v2149 = vrot.slane %v2147, 7
        %v2150 = vshll.u32 %v2131, 16
        %v2152 = vor.u32 %v2149, %v2150
        %v2153 = vrot.slane %v2149, 4
        %v2155 = vshrl.u32 %v2132, 16
        %v2157 = vrot.slane %v2155, 7
        %v2158 = vshll.u32 %v2132, 16
        %v2160 = vor.u32 %v2157, %v2158
        %v2161 = vrot.slane %v2157, 4
        %v2163 = vshrl.u32 %v2133, 16
        %v2165 = vrot.slane %v2163, 7
        %v2166 = vshll.u32 %v2133, 16
        %v2168 = vor.u32 %v2165, %v2166
        %v2169 = vrot.slane %v2165, 4
        %v2171 = vshrl.u32 %v2134, 16
        %v2173 = vrot.slane %v2171, 7
        %v2174 = vshll.u32 %v2134, 16
        %v2176 = vor.u32 %v2173, %v2174
        %v2177 = vrot.slane %v2173, 4
        %v2179 = vshrl.u32 %v2135, 16
        %v2181 = vrot.slane %v2179, 7
        %v2182 = vshll.u32 %v2135, 16
        %v2184 = vor.u32 %v2181, %v2182
        %v2185 = vrot.slane %v2181, 4
        %v2187 = vshrl.u32 %v2136, 16
        %v2189 = vrot.slane %v2187, 7
        %v2190 = vshll.u32 %v2136, 16
        %v2192 = vor.u32 %v2189, %v2190
        %v2193 = vrot.slane %v2189, 4
        %v2195 = vshrl.u32 %v2137, 16
        %v2197 = vrot.slane %v2195, 7
        %v2198 = vshll.u32 %v2137, 16
        %v2200 = vor.u32 %v2197, %v2198
        %v2201 = vrot.slane %v2197, 4
        %v2218 = vld [vmem:[%s699] sm:$0xf]
        %v2219 = vsel %vm701, %v2144, %v2218
        %2220 = vst [vmem:[%s699] sm:$0xf] %v2219
        %v2221 = vld [vmem:[%s699 + $0x4] sm:$0x1]
        %v2222 = vsel %vm476, %v2145, %v2221
        %2223 = vst [vmem:[%s699 + $0x4] sm:$0x1] %v2222
        %v2224 = vld [vmem:[%s699 + $0x8] sm:$0xf]
        %v2225 = vsel %vm701, %v2152, %v2224
        %2226 = vst [vmem:[%s699 + $0x8] sm:$0xf] %v2225
        %v2227 = vld [vmem:[%s699 + $0xc] sm:$0x1]
        %v2228 = vsel %vm476, %v2153, %v2227
        %2229 = vst [vmem:[%s699 + $0xc] sm:$0x1] %v2228
        %v2230 = vld [vmem:[%s699 + $0x10] sm:$0xf]
        %v2231 = vsel %vm701, %v2160, %v2230
        %2232 = vst [vmem:[%s699 + $0x10] sm:$0xf] %v2231
        %v2233 = vld [vmem:[%s699 + $0x14] sm:$0x1]
        %v2234 = vsel %vm476, %v2161, %v2233
        %2235 = vst [vmem:[%s699 + $0x14] sm:$0x1] %v2234
        %v2236 = vld [vmem:[%s699 + $0x18] sm:$0xf]
        %v2237 = vsel %vm701, %v2168, %v2236
        %2238 = vst [vmem:[%s699 + $0x18] sm:$0xf] %v2237
        %v2239 = vld [vmem:[%s699 + $0x1c] sm:$0x1]
        %v2240 = vsel %vm476, %v2169, %v2239
        %2241 = vst [vmem:[%s699 + $0x1c] sm:$0x1] %v2240
        %v2242 = vld [vmem:[%s699 + $0x20] sm:$0xf]
        %v2243 = vsel %vm701, %v2176, %v2242
        %2244 = vst [vmem:[%s699 + $0x20] sm:$0xf] %v2243
        %v2245 = vld [vmem:[%s699 + $0x24] sm:$0x1]
        %v2246 = vsel %vm476, %v2177, %v2245
        %2247 = vst [vmem:[%s699 + $0x24] sm:$0x1] %v2246
        %v2248 = vld [vmem:[%s699 + $0x28] sm:$0xf]
        %v2249 = vsel %vm701, %v2184, %v2248
        %2250 = vst [vmem:[%s699 + $0x28] sm:$0xf] %v2249
        %v2251 = vld [vmem:[%s699 + $0x2c] sm:$0x1]
        %v2252 = vsel %vm476, %v2185, %v2251
        %2253 = vst [vmem:[%s699 + $0x2c] sm:$0x1] %v2252
        %v2254 = vld [vmem:[%s699 + $0x30] sm:$0xf]
        %v2255 = vsel %vm701, %v2192, %v2254
        %2256 = vst [vmem:[%s699 + $0x30] sm:$0xf] %v2255
        %v2257 = vld [vmem:[%s699 + $0x34] sm:$0x1]
        %v2258 = vsel %vm476, %v2193, %v2257
        %2259 = vst [vmem:[%s699 + $0x34] sm:$0x1] %v2258
        %v2260 = vld [vmem:[%s699 + $0x38] sm:$0xf]
        %v2261 = vsel %vm701, %v2200, %v2260
        %2262 = vst [vmem:[%s699 + $0x38] sm:$0xf] %v2261
        %v2263 = vld [vmem:[%s699 + $0x3c] sm:$0x1]
        %v2264 = vsel %vm476, %v2201, %v2263
        %2265 = vst [vmem:[%s699 + $0x3c] sm:$0x1] %v2264
        // Predicated region
        $region85: #{tpu_custom_call.1} parent=55 // pred_check
          %p2266 = pneg %p750
        $region86: #{tpu_custom_call.1} parent=55 // pred_check_branch
          %2268 = sbr.rel (%p2266) target = $region88
        $region87: #{tpu_custom_call.1} parent=55 // pred_region
          %v2269 = vld [vmem:[#allocation2] sm:$0xf]
          %v2270 = vsel %vm701, 0, %v2269
          %2271 = vst [vmem:[#allocation2] sm:$0xf] %v2270
          %v2272 = vld [vmem:[#allocation2 + $0x4] sm:$0x1]
          %v2273 = vsel %vm476, 0, %v2272
          %2274 = vst [vmem:[#allocation2 + $0x4] sm:$0x1] %v2273
        $region88: #{tpu_custom_call.1} parent=55 // pred_fallthru
          _
        // Predicated region
        $region89: #{tpu_custom_call.1} parent=55 // pred_check
          %p2275 = pneg %p760
        $region90: #{tpu_custom_call.1} parent=55 // pred_check_branch
          %2277 = sbr.rel (%p2275) target = $region92
        $region91: #{tpu_custom_call.1} parent=55 // pred_region
          %s2278 = ssub.s32 %s473, 1
          %s2279 = smul.u32 %s2278, 8
          %s2280 = scalar_lea.vmem %s413, %s2279 [#allocation3]
          %v2281 = vld [vmem:[%s2280] sm:$0xff]
          %v2282 = vmul.f32 %v2281, %v2074
          %v2283 = vadd.f32 %v2282, %v2088
          %v2284 = vmax.f32 %v2283, 0.0
          %v2285 = vpack.c.bf16 %v2284, %v2284
          %v2287 = vunpack.c.l.b16 %v2285
          %v2288 = vpack.c.b16 %v2287, %v2287
          %v2290 = vshrl.u32 %v2288, 16
          %v2292 = vrot.slane %v2290, 7
          %v2293 = vshll.u32 %v2288, 16
          %v2295 = vor.u32 %v2292, %v2293
          %v2296 = vrot.slane %v2292, 4
          %v2299 = vld [vmem:[#allocation2] sm:$0xf]
          %v2300 = vsel %vm701, %v2295, %v2299
          %2301 = vst [vmem:[#allocation2] sm:$0xf] %v2300
          %v2302 = vld [vmem:[#allocation2 + $0x4] sm:$0x1]
          %v2303 = vsel %vm476, %v2296, %v2302
          %2304 = vst [vmem:[#allocation2 + $0x4] sm:$0x1] %v2303
        $region92: #{tpu_custom_call.1} parent=55 // pred_fallthru
          _
        // Predicated region
        $region93: #{tpu_custom_call.1} parent=55 // pred_check
          %p2305 = pneg %p750
        $region94: #{tpu_custom_call.1} parent=55 // pred_check_branch
          %2307 = sbr.rel (%p2305) target = $region96
        $region95: #{tpu_custom_call.1} parent=55 // pred_region
          %s2308 = scalar_lea.vmem [#allocation2], 72
          %v2309 = vld [vmem:[%s2308] sm:$0xf]
          %v2310 = vsel %vm701, 0, %v2309
          %2311 = vst [vmem:[%s2308] sm:$0xf] %v2310
          %v2312 = vld [vmem:[%s2308 + $0x4] sm:$0x1]
          %v2313 = vsel %vm476, 0, %v2312
          %2314 = vst [vmem:[%s2308 + $0x4] sm:$0x1] %v2313
        $region96: #{tpu_custom_call.1} parent=55 // pred_fallthru
          _
        // Predicated region
        $region97: #{tpu_custom_call.1} parent=55 // pred_check
          %p2315 = pneg %p801
        $region98: #{tpu_custom_call.1} parent=55 // pred_check_branch
          %2317 = sbr.rel (%p2315) target = $region100
        $region99: #{tpu_custom_call.1} parent=55 // pred_region
          %s2318 = sadd.s32 %s473, 8
          %s2319 = smul.u32 %s2318, 8
          %s2320 = scalar_lea.vmem %s413, %s2319 [#allocation3]
          %v2321 = vld [vmem:[%s2320] sm:$0xff]
          %v2322 = vmul.f32 %v2321, %v2074
          %v2323 = vadd.f32 %v2322, %v2088
          %v2324 = vmax.f32 %v2323, 0.0
          %v2325 = vpack.c.bf16 %v2324, %v2324
          %v2327 = vunpack.c.l.b16 %v2325
          %v2328 = vpack.c.b16 %v2327, %v2327
          %v2330 = vshrl.u32 %v2328, 16
          %v2332 = vrot.slane %v2330, 7
          %v2333 = vshll.u32 %v2328, 16
          %v2335 = vor.u32 %v2332, %v2333
          %v2336 = vrot.slane %v2332, 4
          %s2339 = scalar_lea.vmem [#allocation2], 72
          %v2340 = vld [vmem:[%s2339] sm:$0xf]
          %v2341 = vsel %vm701, %v2335, %v2340
          %2342 = vst [vmem:[%s2339] sm:$0xf] %v2341
          %v2343 = vld [vmem:[%s2339 + $0x4] sm:$0x1]
          %v2344 = vsel %vm476, %v2336, %v2343
          %2345 = vst [vmem:[%s2339 + $0x4] sm:$0x1] %v2344
        $region100: #{tpu_custom_call.1} parent=55 // pred_fallthru
          _
        %v2346 = vld [vmem:[%s8] sm:$0x1]
        %v2347 = vld [vmem:[#allocation2] sm:$0xf]
        %v2348 = vld [vmem:[#allocation2 + $0x8] sm:$0xf]
        %v2349 = vld [vmem:[#allocation2 + $0x10] sm:$0xf]
        %v2350 = vld [vmem:[#allocation2 + $0x18] sm:$0xf]
        %v2351 = vld [vmem:[#allocation2 + $0x20] sm:$0xf]
        %v2352 = vld [vmem:[#allocation2 + $0x28] sm:$0xf]
        %v2353 = vld [vmem:[#allocation2 + $0x30] sm:$0xf]
        %v2354 = vld [vmem:[#allocation2 + $0x38] sm:$0xf]
        %v2355 = vld [vmem:[#allocation2 + $0x40] sm:$0xf]
        %v2356 = vld [vmem:[#allocation2 + $0x48] sm:$0xf]
        %v2357 = vld [vmem:[#allocation2 + $0x4] sm:$0x1]
        %v2358 = vld [vmem:[#allocation2 + $0xc] sm:$0x1]
        %v2359 = vld [vmem:[#allocation2 + $0x14] sm:$0x1]
        %v2360 = vld [vmem:[#allocation2 + $0x1c] sm:$0x1]
        %v2361 = vld [vmem:[#allocation2 + $0x24] sm:$0x1]
        %v2362 = vld [vmem:[#allocation2 + $0x2c] sm:$0x1]
        %v2363 = vld [vmem:[#allocation2 + $0x34] sm:$0x1]
        %v2364 = vld [vmem:[#allocation2 + $0x3c] sm:$0x1]
        %v2365 = vld [vmem:[#allocation2 + $0x44] sm:$0x1]
        %v2366 = vld [vmem:[#allocation2 + $0x4c] sm:$0x1]
        %v2367 = vld [vmem:[#allocation2] sm:$0xe]
        %v2368 = vld [vmem:[#allocation2 + $0x8] sm:$0xe]
        %v2369 = vld [vmem:[#allocation2 + $0x10] sm:$0xe]
        %v2370 = vld [vmem:[#allocation2 + $0x18] sm:$0xe]
        %v2371 = vld [vmem:[#allocation2 + $0x20] sm:$0xe]
        %v2372 = vld [vmem:[#allocation2 + $0x28] sm:$0xe]
        %v2373 = vld [vmem:[#allocation2 + $0x30] sm:$0xe]
        %v2374 = vld [vmem:[#allocation2 + $0x38] sm:$0xe]
        %v2375 = vld [vmem:[#allocation2 + $0x40] sm:$0xe]
        %v2376 = vld [vmem:[#allocation2 + $0x48] sm:$0xe]
        %v2397 = vunpack.c.l.b16 %v2347
        %v2398 = vunpack.c.l.b16 %v2357
        %v2399 = vunpack.c.l.b16 %v2348
        %v2400 = vunpack.c.l.b16 %v2358
        %v2401 = vunpack.c.l.b16 %v2349
        %v2402 = vunpack.c.l.b16 %v2359
        %v2403 = vunpack.c.l.b16 %v2350
        %v2404 = vunpack.c.l.b16 %v2360
        %v2405 = vunpack.c.l.b16 %v2351
        %v2406 = vunpack.c.l.b16 %v2361
        %v2407 = vunpack.c.l.b16 %v2352
        %v2408 = vunpack.c.l.b16 %v2362
        %v2409 = vunpack.c.l.b16 %v2353
        %v2410 = vunpack.c.l.b16 %v2363
        %v2411 = vunpack.c.l.b16 %v2354
        %v2412 = vunpack.c.l.b16 %v2364
        %v2413 = vunpack.c.l.b16 %v2355
        %v2414 = vunpack.c.l.b16 %v2365
        %v2415 = vunpack.c.l.b16 %v2356
        %v2416 = vunpack.c.l.b16 %v2366
        %v2417 = vpack.c.b16 %v2398, %v2397
        %v2418 = vpack.c.b16 %v2400, %v2399
        %v2419 = vpack.c.b16 %v2402, %v2401
        %v2420 = vpack.c.b16 %v2404, %v2403
        %v2421 = vpack.c.b16 %v2406, %v2405
        %v2422 = vpack.c.b16 %v2408, %v2407
        %v2423 = vpack.c.b16 %v2410, %v2409
        %v2424 = vpack.c.b16 %v2412, %v2411
        %v2425 = vpack.c.b16 %v2414, %v2413
        %v2426 = vpack.c.b16 %v2416, %v2415
        %v2428 = vshrl.u32 %v2417, 16
        %v2430 = vshll.u32 %v2417, 16
        %v2432 = vrot.slane %v2430, 1
        %v2433 = vor.u32 %v2428, %v2432
        %v2435 = vshrl.u32 %v2418, 16
        %v2437 = vshll.u32 %v2418, 16
        %v2439 = vrot.slane %v2437, 1
        %v2440 = vor.u32 %v2435, %v2439
        %v2442 = vshrl.u32 %v2419, 16
        %v2444 = vshll.u32 %v2419, 16
        %v2446 = vrot.slane %v2444, 1
        %v2447 = vor.u32 %v2442, %v2446
        %v2449 = vshrl.u32 %v2420, 16
        %v2451 = vshll.u32 %v2420, 16
        %v2453 = vrot.slane %v2451, 1
        %v2454 = vor.u32 %v2449, %v2453
        %v2456 = vshrl.u32 %v2421, 16
        %v2458 = vshll.u32 %v2421, 16
        %v2460 = vrot.slane %v2458, 1
        %v2461 = vor.u32 %v2456, %v2460
        %v2463 = vshrl.u32 %v2422, 16
        %v2465 = vshll.u32 %v2422, 16
        %v2467 = vrot.slane %v2465, 1
        %v2468 = vor.u32 %v2463, %v2467
        %v2470 = vshrl.u32 %v2423, 16
        %v2472 = vshll.u32 %v2423, 16
        %v2474 = vrot.slane %v2472, 1
        %v2475 = vor.u32 %v2470, %v2474
        %v2477 = vshrl.u32 %v2424, 16
        %v2479 = vshll.u32 %v2424, 16
        %v2481 = vrot.slane %v2479, 1
        %v2482 = vor.u32 %v2477, %v2481
        %v2484 = vshrl.u32 %v2425, 16
        %v2486 = vshll.u32 %v2425, 16
        %v2488 = vrot.slane %v2486, 1
        %v2489 = vor.u32 %v2484, %v2488
        %v2491 = vshrl.u32 %v2426, 16
        %v2493 = vshll.u32 %v2426, 16
        %v2495 = vrot.slane %v2493, 1
        %v2496 = vor.u32 %v2491, %v2495
        %v2507 = vunpack.c.l.b16 %v2367
        %v2508 = vunpack.c.l.b16 %v2368
        %v2509 = vunpack.c.l.b16 %v2369
        %v2510 = vunpack.c.l.b16 %v2370
        %v2511 = vunpack.c.l.b16 %v2371
        %v2512 = vunpack.c.l.b16 %v2372
        %v2513 = vunpack.c.l.b16 %v2373
        %v2514 = vunpack.c.l.b16 %v2374
        %v2515 = vunpack.c.l.b16 %v2375
        %v2516 = vunpack.c.l.b16 %v2376
        %v2517 = vpack.c.b16 %v2398, %v2507
        %v2518 = vpack.c.b16 %v2400, %v2508
        %v2519 = vpack.c.b16 %v2402, %v2509
        %v2520 = vpack.c.b16 %v2404, %v2510
        %v2521 = vpack.c.b16 %v2406, %v2511
        %v2522 = vpack.c.b16 %v2408, %v2512
        %v2523 = vpack.c.b16 %v2410, %v2513
        %v2524 = vpack.c.b16 %v2412, %v2514
        %v2525 = vpack.c.b16 %v2414, %v2515
        %v2526 = vpack.c.b16 %v2416, %v2516
        %v2527 = vrot.slane %v2517, 1
        %v2528 = vrot.slane %v2518, 1
        %v2529 = vrot.slane %v2519, 1
        %v2530 = vrot.slane %v2520, 1
        %v2531 = vrot.slane %v2521, 1
        %v2532 = vrot.slane %v2522, 1
        %v2533 = vrot.slane %v2523, 1
        %v2534 = vrot.slane %v2524, 1
        %v2535 = vrot.slane %v2525, 1
        %v2536 = vrot.slane %v2526, 1
        %v2537 = vunpack.c.l.b16 %v2433
        %v2538 = vunpack.c.l.b16 %v2527
        %v2539 = vunpack.c.l.b16 %v2440
        %v2540 = vunpack.c.l.b16 %v2528
        %v2541 = vunpack.c.l.b16 %v2447
        %v2542 = vunpack.c.l.b16 %v2529
        %v2543 = vunpack.c.l.b16 %v2454
        %v2544 = vunpack.c.l.b16 %v2530
        %v2545 = vunpack.c.l.b16 %v2461
        %v2546 = vunpack.c.l.b16 %v2531
        %v2547 = vunpack.c.l.b16 %v2468
        %v2548 = vunpack.c.l.b16 %v2532
        %v2549 = vunpack.c.l.b16 %v2475
        %v2550 = vunpack.c.l.b16 %v2533
        %v2551 = vunpack.c.l.b16 %v2482
        %v2552 = vunpack.c.l.b16 %v2534
        %v2553 = vunpack.c.l.b16 %v2489
        %v2554 = vunpack.c.l.b16 %v2535
        %v2555 = vunpack.c.l.b16 %v2496
        %v2556 = vunpack.c.l.b16 %v2536
        %v2557 = vld [vmem:[#allocation8] sm:$0xf]
        %v2558 = vld [vmem:[#allocation8 + $0x4] sm:$0xf]
        %v2559 = vld [vmem:[#allocation8 + $0x8] sm:$0xf]
        %v2560 = vld [vmem:[#allocation8 + $0xc] sm:$0xf]
        %v2561 = vld [vmem:[#allocation8 + $0x10] sm:$0xf]
        %v2562 = vld [vmem:[#allocation8 + $0x14] sm:$0xf]
        %v2563 = vld [vmem:[#allocation8 + $0x18] sm:$0xf]
        %v2564 = vld [vmem:[#allocation8 + $0x1c] sm:$0xf]
        %v2565 = vld [vmem:[#allocation8 + $0x20] sm:$0xf]
        %v2566 = vld [vmem:[#allocation8 + $0x24] sm:$0xf]
        %v2567 = vld [vmem:[#allocation8 + $0x28] sm:$0xf]
        %v2568 = vld [vmem:[#allocation8 + $0x2c] sm:$0xf]
        %v2569 = vld [vmem:[#allocation8 + $0x30] sm:$0xf]
        %v2570 = vld [vmem:[#allocation8 + $0x34] sm:$0xf]
        %v2571 = vld [vmem:[#allocation8 + $0x38] sm:$0xf]
        %v2572 = vld [vmem:[#allocation8 + $0x3c] sm:$0xf]
        %v2573 = vld [vmem:[#allocation8 + $0x40] sm:$0xf]
        %v2574 = vld [vmem:[#allocation8 + $0x44] sm:$0xf]
        %v2575 = vld [vmem:[#allocation8 + $0x48] sm:$0xf]
        %v2576 = vld [vmem:[#allocation8 + $0x4c] sm:$0xf]
        %v2577 = vld [vmem:[#allocation8 + $0x50] sm:$0xf]
        %v2578 = vld [vmem:[#allocation8 + $0x54] sm:$0xf]
        %v2579 = vld [vmem:[#allocation8 + $0x58] sm:$0xf]
        %v2580 = vld [vmem:[#allocation8 + $0x5c] sm:$0xf]
        %v2581 = vld [vmem:[#allocation8 + $0x60] sm:$0xf]
        %v2582 = vld [vmem:[#allocation8 + $0x64] sm:$0xf]
        %v2583 = vld [vmem:[#allocation8 + $0x68] sm:$0xf]
        %v2584 = vld [vmem:[#allocation8 + $0x6c] sm:$0xf]
        %v2585 = vld [vmem:[#allocation8 + $0x70] sm:$0xf]
        %v2586 = vld [vmem:[#allocation8 + $0x74] sm:$0xf]
        %v2587 = vld [vmem:[#allocation8 + $0x78] sm:$0xf]
        %v2588 = vld [vmem:[#allocation8 + $0x7c] sm:$0xf]
        %v2589 = vld [vmem:[#allocation8 + $0x80] sm:$0xf]
        %v2590 = vld [vmem:[#allocation8 + $0x84] sm:$0xf]
        %v2591 = vld [vmem:[#allocation8 + $0x88] sm:$0xf]
        %v2592 = vld [vmem:[#allocation8 + $0x8c] sm:$0xf]
        %v2593 = vld [vmem:[#allocation8 + $0x90] sm:$0xf]
        %v2594 = vld [vmem:[#allocation8 + $0x94] sm:$0xf]
        %v2595 = vld [vmem:[#allocation8 + $0x98] sm:$0xf]
        %v2596 = vld [vmem:[#allocation8 + $0x9c] sm:$0xf]
        %v2597 = vld [vmem:[#allocation8 + $0xa0] sm:$0xf]
        %v2598 = vld [vmem:[#allocation8 + $0xa4] sm:$0xf]
        %v2599 = vld [vmem:[#allocation8 + $0xa8] sm:$0xf]
        %v2600 = vld [vmem:[#allocation8 + $0xac] sm:$0xf]
        %v2601 = vld [vmem:[#allocation8 + $0xb0] sm:$0xf]
        %v2602 = vld [vmem:[#allocation8 + $0xb4] sm:$0xf]
        %v2603 = vld [vmem:[#allocation8 + $0xb8] sm:$0xf]
        %v2604 = vld [vmem:[#allocation8 + $0xbc] sm:$0xf]
        %v2605 = vld [vmem:[#allocation8 + $0xc0] sm:$0xf]
        %v2606 = vld [vmem:[#allocation8 + $0xc4] sm:$0xf]
        %v2607 = vld [vmem:[#allocation8 + $0xc8] sm:$0xf]
        %v2608 = vld [vmem:[#allocation8 + $0xcc] sm:$0xf]
        %v2609 = vld [vmem:[#allocation8 + $0xd0] sm:$0xf]
        %v2610 = vld [vmem:[#allocation8 + $0xd4] sm:$0xf]
        %v2611 = vld [vmem:[#allocation8 + $0xd8] sm:$0xf]
        %v2612 = vld [vmem:[#allocation8 + $0xdc] sm:$0xf]
        %v2613 = vld [vmem:[#allocation8 + $0xe0] sm:$0xf]
        %v2614 = vld [vmem:[#allocation8 + $0xe4] sm:$0xf]
        %v2615 = vld [vmem:[#allocation8 + $0xe8] sm:$0xf]
        %v2616 = vld [vmem:[#allocation8 + $0xec] sm:$0xf]
        %v2617 = vld [vmem:[#allocation8 + $0xf0] sm:$0xf]
        %v2618 = vld [vmem:[#allocation8 + $0xf4] sm:$0xf]
        %v2619 = vld [vmem:[#allocation8 + $0xf8] sm:$0xf]
        %v2620 = vld [vmem:[#allocation8 + $0xfc] sm:$0xf]
        %v2621 = vld [vmem:[#allocation8 + $0x100] sm:$0xf]
        %v2622 = vld [vmem:[#allocation8 + $0x104] sm:$0xf]
        %v2623 = vld [vmem:[#allocation8 + $0x108] sm:$0xf]
        %v2624 = vld [vmem:[#allocation8 + $0x10c] sm:$0xf]
        %v2625 = vld [vmem:[#allocation8 + $0x110] sm:$0xf]
        %v2626 = vld [vmem:[#allocation8 + $0x114] sm:$0xf]
        %v2627 = vld [vmem:[#allocation8 + $0x118] sm:$0xf]
        %v2628 = vld [vmem:[#allocation8 + $0x11c] sm:$0xf]
        %v2629 = vld [vmem:[#allocation8 + $0x120] sm:$0xf]
        %v2630 = vld [vmem:[#allocation8 + $0x124] sm:$0xf]
        %v2631 = vld [vmem:[#allocation8 + $0x128] sm:$0xf]
        %v2632 = vld [vmem:[#allocation8 + $0x12c] sm:$0xf]
        %v2633 = vld [vmem:[#allocation8 + $0x130] sm:$0xf]
        %v2634 = vld [vmem:[#allocation8 + $0x134] sm:$0xf]
        %v2635 = vld [vmem:[#allocation8 + $0x138] sm:$0xf]
        %v2636 = vld [vmem:[#allocation8 + $0x13c] sm:$0xf]
        %v2637 = vld [vmem:[#allocation8 + $0x140] sm:$0xf]
        %v2638 = vld [vmem:[#allocation8 + $0x144] sm:$0xf]
        %v2639 = vld [vmem:[#allocation8 + $0x148] sm:$0xf]
        %v2640 = vld [vmem:[#allocation8 + $0x14c] sm:$0xf]
        %v2641 = vld [vmem:[#allocation8 + $0x150] sm:$0xf]
        %v2642 = vld [vmem:[#allocation8 + $0x154] sm:$0xf]
        %v2643 = vld [vmem:[#allocation8 + $0x158] sm:$0xf]
        %v2644 = vld [vmem:[#allocation8 + $0x15c] sm:$0xf]
        %v2645 = vld [vmem:[#allocation8 + $0x160] sm:$0xf]
        %v2646 = vld [vmem:[#allocation8 + $0x164] sm:$0xf]
        %v2647 = vld [vmem:[#allocation8 + $0x168] sm:$0xf]
        %v2648 = vld [vmem:[#allocation8 + $0x16c] sm:$0xf]
        %v2649 = vld [vmem:[#allocation8 + $0x170] sm:$0xf]
        %v2650 = vld [vmem:[#allocation8 + $0x174] sm:$0xf]
        %v2651 = vld [vmem:[#allocation8 + $0x178] sm:$0xf]
        %v2652 = vld [vmem:[#allocation8 + $0x17c] sm:$0xf]
        %v2653 = vld [vmem:[#allocation8 + $0x180] sm:$0xf]
        %v2654 = vld [vmem:[#allocation8 + $0x184] sm:$0xf]
        %v2655 = vld [vmem:[#allocation8 + $0x188] sm:$0xf]
        %v2656 = vld [vmem:[#allocation8 + $0x18c] sm:$0xf]
        %v2657 = vld [vmem:[#allocation8 + $0x190] sm:$0xf]
        %v2658 = vld [vmem:[#allocation8 + $0x194] sm:$0xf]
        %v2659 = vld [vmem:[#allocation8 + $0x198] sm:$0xf]
        %v2660 = vld [vmem:[#allocation8 + $0x19c] sm:$0xf]
        %v2661 = vld [vmem:[#allocation8 + $0x1a0] sm:$0xf]
        %v2662 = vld [vmem:[#allocation8 + $0x1a4] sm:$0xf]
        %v2663 = vld [vmem:[#allocation8 + $0x1a8] sm:$0xf]
        %v2664 = vld [vmem:[#allocation8 + $0x1ac] sm:$0xf]
        %v2665 = vld [vmem:[#allocation8 + $0x1b0] sm:$0xf]
        %v2666 = vld [vmem:[#allocation8 + $0x1b4] sm:$0xf]
        %v2667 = vld [vmem:[#allocation8 + $0x1b8] sm:$0xf]
        %v2668 = vld [vmem:[#allocation8 + $0x1bc] sm:$0xf]
        %v2669 = vld [vmem:[#allocation8 + $0x1c0] sm:$0xf]
        %v2670 = vld [vmem:[#allocation8 + $0x1c4] sm:$0xf]
        %v2671 = vld [vmem:[#allocation8 + $0x1c8] sm:$0xf]
        %v2672 = vld [vmem:[#allocation8 + $0x1cc] sm:$0xf]
        %v2673 = vld [vmem:[#allocation8 + $0x1d0] sm:$0xf]
        %v2674 = vld [vmem:[#allocation8 + $0x1d4] sm:$0xf]
        %v2675 = vld [vmem:[#allocation8 + $0x1d8] sm:$0xf]
        %v2676 = vld [vmem:[#allocation8 + $0x1dc] sm:$0xf]
        %v2677 = vld [vmem:[#allocation8 + $0x1e0] sm:$0xf]
        %v2678 = vld [vmem:[#allocation8 + $0x1e4] sm:$0xf]
        %v2679 = vld [vmem:[#allocation8 + $0x1e8] sm:$0xf]
        %v2680 = vld [vmem:[#allocation8 + $0x1ec] sm:$0xf]
        %v2681 = vld [vmem:[#allocation8 + $0x1f0] sm:$0xf]
        %v2682 = vld [vmem:[#allocation8 + $0x1f4] sm:$0xf]
        %v2683 = vld [vmem:[#allocation8 + $0x1f8] sm:$0xf]
        %v2684 = vld [vmem:[#allocation8 + $0x1fc] sm:$0xf]
        %v2685 = vld [vmem:[#allocation8 + $0x200] sm:$0xf]
        %v2686 = vld [vmem:[#allocation8 + $0x204] sm:$0xf]
        %v2687 = vld [vmem:[#allocation8 + $0x208] sm:$0xf]
        %v2688 = vld [vmem:[#allocation8 + $0x20c] sm:$0xf]
        %v2689 = vld [vmem:[#allocation8 + $0x210] sm:$0xf]
        %v2690 = vld [vmem:[#allocation8 + $0x214] sm:$0xf]
        %v2691 = vld [vmem:[#allocation8 + $0x218] sm:$0xf]
        %v2692 = vld [vmem:[#allocation8 + $0x21c] sm:$0xf]
        %v2693 = vld [vmem:[#allocation8 + $0x220] sm:$0xf]
        %v2694 = vld [vmem:[#allocation8 + $0x224] sm:$0xf]
        %v2695 = vld [vmem:[#allocation8 + $0x228] sm:$0xf]
        %v2696 = vld [vmem:[#allocation8 + $0x22c] sm:$0xf]
        %v2697 = vld [vmem:[#allocation8 + $0x230] sm:$0xf]
        %v2698 = vld [vmem:[#allocation8 + $0x234] sm:$0xf]
        %v2699 = vld [vmem:[#allocation8 + $0x238] sm:$0xf]
        %v2700 = vld [vmem:[#allocation8 + $0x23c] sm:$0xf]
        %v2702 = vlaneseq
        %v2703 = vshrl.u32 %v2702, 7
        %v2704 = vsub.s32 0, %v2703
        %v2705 = vrot.slane %v2346, %v2704
        %v2707 = vpack.c.b16 %v2399, %v2397
        %v2708 = vpack.c.b16 %v2539, %v2537
        %v2709 = vpack.c.b16 %v2540, %v2538
        %v2710 = vpack.c.b16 %v2401, %v2399
        %v2711 = vpack.c.b16 %v2541, %v2539
        %v2712 = vpack.c.b16 %v2542, %v2540
        %v2713 = vpack.c.b16 %v2403, %v2401
        %v2714 = vpack.c.b16 %v2543, %v2541
        %v2715 = vpack.c.b16 %v2544, %v2542
        %v2716 = vpack.c.b16 %v2405, %v2403
        %v2717 = vpack.c.b16 %v2545, %v2543
        %v2718 = vpack.c.b16 %v2546, %v2544
        %v2719 = vpack.c.b16 %v2407, %v2405
        %v2720 = vpack.c.b16 %v2547, %v2545
        %v2721 = vpack.c.b16 %v2548, %v2546
        %v2722 = vpack.c.b16 %v2409, %v2407
        %v2723 = vpack.c.b16 %v2549, %v2547
        %v2724 = vpack.c.b16 %v2550, %v2548
        %v2725 = vpack.c.b16 %v2411, %v2409
        %v2726 = vpack.c.b16 %v2551, %v2549
        %v2727 = vpack.c.b16 %v2552, %v2550
        %v2728 = vpack.c.b16 %v2413, %v2411
        %v2729 = vpack.c.b16 %v2553, %v2551
        %v2730 = vpack.c.b16 %v2554, %v2552
        %v2731 = vpack.c.b16 %v2415, %v2413
        %v2732 = vpack.c.b16 %v2555, %v2553
        %v2733 = vpack.c.b16 %v2556, %v2554
        %v2905 = vunpack.c.l.b16 %v2557
        %v2906 = vunpack.c.l.b16 %v2558
        %v2907 = vunpack.c.l.b16 %v2559
        %v2908 = vunpack.c.l.b16 %v2560
        %v2909 = vunpack.c.l.b16 %v2561
        %v2910 = vunpack.c.l.b16 %v2562
        %v2911 = vunpack.c.l.b16 %v2563
        %v2912 = vunpack.c.l.b16 %v2564
        %v2913 = vunpack.c.l.b16 %v2565
        %v2914 = vunpack.c.l.b16 %v2566
        %v2915 = vunpack.c.l.b16 %v2567
        %v2916 = vunpack.c.l.b16 %v2568
        %v2917 = vunpack.c.l.b16 %v2569
        %v2918 = vunpack.c.l.b16 %v2570
        %v2919 = vunpack.c.l.b16 %v2571
        %v2920 = vunpack.c.l.b16 %v2572
        %v2921 = vunpack.c.l.b16 %v2573
        %v2922 = vunpack.c.l.b16 %v2574
        %v2923 = vunpack.c.l.b16 %v2575
        %v2924 = vunpack.c.l.b16 %v2576
        %v2925 = vunpack.c.l.b16 %v2577
        %v2926 = vunpack.c.l.b16 %v2578
        %v2927 = vunpack.c.l.b16 %v2579
        %v2928 = vunpack.c.l.b16 %v2580
        %v2929 = vunpack.c.l.b16 %v2581
        %v2930 = vunpack.c.l.b16 %v2582
        %v2931 = vunpack.c.l.b16 %v2583
        %v2932 = vunpack.c.l.b16 %v2584
        %v2933 = vunpack.c.l.b16 %v2585
        %v2934 = vunpack.c.l.b16 %v2586
        %v2935 = vunpack.c.l.b16 %v2587
        %v2936 = vunpack.c.l.b16 %v2588
        %v2937 = vunpack.c.l.b16 %v2589
        %v2938 = vunpack.c.l.b16 %v2590
        %v2939 = vunpack.c.l.b16 %v2591
        %v2940 = vunpack.c.l.b16 %v2592
        %v2941 = vunpack.c.l.b16 %v2593
        %v2942 = vunpack.c.l.b16 %v2594
        %v2943 = vunpack.c.l.b16 %v2595
        %v2944 = vunpack.c.l.b16 %v2596
        %v2945 = vunpack.c.l.b16 %v2597
        %v2946 = vunpack.c.l.b16 %v2598
        %v2947 = vunpack.c.l.b16 %v2599
        %v2948 = vunpack.c.l.b16 %v2600
        %v2949 = vunpack.c.l.b16 %v2601
        %v2950 = vunpack.c.l.b16 %v2602
        %v2951 = vunpack.c.l.b16 %v2603
        %v2952 = vunpack.c.l.b16 %v2604
        %v2953 = vunpack.c.l.b16 %v2605
        %v2954 = vunpack.c.l.b16 %v2606
        %v2955 = vunpack.c.l.b16 %v2607
        %v2956 = vunpack.c.l.b16 %v2608
        %v2957 = vunpack.c.l.b16 %v2609
        %v2958 = vunpack.c.l.b16 %v2610
        %v2959 = vunpack.c.l.b16 %v2611
        %v2960 = vunpack.c.l.b16 %v2612
        %v2961 = vunpack.c.l.b16 %v2613
        %v2962 = vunpack.c.l.b16 %v2614
        %v2963 = vunpack.c.l.b16 %v2615
        %v2964 = vunpack.c.l.b16 %v2616
        %v2965 = vunpack.c.l.b16 %v2617
        %v2966 = vunpack.c.l.b16 %v2618
        %v2967 = vunpack.c.l.b16 %v2619
        %v2968 = vunpack.c.l.b16 %v2620
        %v2969 = vunpack.c.l.b16 %v2621
        %v2970 = vunpack.c.l.b16 %v2622
        %v2971 = vunpack.c.l.b16 %v2623
        %v2972 = vunpack.c.l.b16 %v2624
        %v2973 = vunpack.c.l.b16 %v2625
        %v2974 = vunpack.c.l.b16 %v2626
        %v2975 = vunpack.c.l.b16 %v2627
        %v2976 = vunpack.c.l.b16 %v2628
        %v2977 = vunpack.c.l.b16 %v2629
        %v2978 = vunpack.c.l.b16 %v2630
        %v2979 = vunpack.c.l.b16 %v2631
        %v2980 = vunpack.c.l.b16 %v2632
        %v2981 = vunpack.c.l.b16 %v2633
        %v2982 = vunpack.c.l.b16 %v2634
        %v2983 = vunpack.c.l.b16 %v2635
        %v2984 = vunpack.c.l.b16 %v2636
        %v2985 = vunpack.c.l.b16 %v2637
        %v2986 = vunpack.c.l.b16 %v2638
        %v2987 = vunpack.c.l.b16 %v2639
        %v2988 = vunpack.c.l.b16 %v2640
        %v2989 = vunpack.c.l.b16 %v2641
        %v2990 = vunpack.c.l.b16 %v2642
        %v2991 = vunpack.c.l.b16 %v2643
        %v2992 = vunpack.c.l.b16 %v2644
        %v2993 = vunpack.c.l.b16 %v2645
        %v2994 = vunpack.c.l.b16 %v2646
        %v2995 = vunpack.c.l.b16 %v2647
        %v2996 = vunpack.c.l.b16 %v2648
        %v2997 = vunpack.c.l.b16 %v2649
        %v2998 = vunpack.c.l.b16 %v2650
        %v2999 = vunpack.c.l.b16 %v2651
        %v3000 = vunpack.c.l.b16 %v2652
        %v3001 = vunpack.c.l.b16 %v2653
        %v3002 = vunpack.c.l.b16 %v2654
        %v3003 = vunpack.c.l.b16 %v2655
        %v3004 = vunpack.c.l.b16 %v2656
        %v3005 = vunpack.c.l.b16 %v2657
        %v3006 = vunpack.c.l.b16 %v2658
        %v3007 = vunpack.c.l.b16 %v2659
        %v3008 = vunpack.c.l.b16 %v2660
        %v3009 = vunpack.c.l.b16 %v2661
        %v3010 = vunpack.c.l.b16 %v2662
        %v3011 = vunpack.c.l.b16 %v2663
        %v3012 = vunpack.c.l.b16 %v2664
        %v3013 = vunpack.c.l.b16 %v2665
        %v3014 = vunpack.c.l.b16 %v2666
        %v3015 = vunpack.c.l.b16 %v2667
        %v3016 = vunpack.c.l.b16 %v2668
        %v3017 = vunpack.c.l.b16 %v2669
        %v3018 = vunpack.c.l.b16 %v2670
        %v3019 = vunpack.c.l.b16 %v2671
        %v3020 = vunpack.c.l.b16 %v2672
        %v3021 = vunpack.c.l.b16 %v2673
        %v3022 = vunpack.c.l.b16 %v2674
        %v3023 = vunpack.c.l.b16 %v2675
        %v3024 = vunpack.c.l.b16 %v2676
        %v3025 = vunpack.c.l.b16 %v2677
        %v3026 = vunpack.c.l.b16 %v2678
        %v3027 = vunpack.c.l.b16 %v2679
        %v3028 = vunpack.c.l.b16 %v2680
        %v3029 = vunpack.c.l.b16 %v2681
        %v3030 = vunpack.c.l.b16 %v2682
        %v3031 = vunpack.c.l.b16 %v2683
        %v3032 = vunpack.c.l.b16 %v2684
        %v3033 = vunpack.c.l.b16 %v2685
        %v3034 = vunpack.c.l.b16 %v2686
        %v3035 = vunpack.c.l.b16 %v2687
        %v3036 = vunpack.c.l.b16 %v2688
        %v3037 = vunpack.c.l.b16 %v2689
        %v3038 = vunpack.c.l.b16 %v2690
        %v3039 = vunpack.c.l.b16 %v2691
        %v3040 = vunpack.c.l.b16 %v2692
        %v3041 = vunpack.c.l.b16 %v2693
        %v3042 = vunpack.c.l.b16 %v2694
        %v3043 = vunpack.c.l.b16 %v2695
        %v3044 = vunpack.c.l.b16 %v2696
        %v3045 = vunpack.c.l.b16 %v2697
        %v3046 = vunpack.c.l.b16 %v2698
        %v3047 = vunpack.c.l.b16 %v2699
        %v3048 = vunpack.c.l.b16 %v2700
        %v3049 = vpack.c.b16 %v2906, %v2905
        %v3050 = vpack.c.b16 %v2908, %v2907
        %v3051 = vpack.c.b16 %v2910, %v2909
        %v3052 = vpack.c.b16 %v2912, %v2911
        %v3053 = vpack.c.b16 %v2914, %v2913
        %v3054 = vpack.c.b16 %v2916, %v2915
        %v3055 = vpack.c.b16 %v2918, %v2917
        %v3056 = vpack.c.b16 %v2920, %v2919
        %v3057 = vpack.c.b16 %v2922, %v2921
        %v3058 = vpack.c.b16 %v2924, %v2923
        %v3059 = vpack.c.b16 %v2926, %v2925
        %v3060 = vpack.c.b16 %v2928, %v2927
        %v3061 = vpack.c.b16 %v2930, %v2929
        %v3062 = vpack.c.b16 %v2932, %v2931
        %v3063 = vpack.c.b16 %v2934, %v2933
        %v3064 = vpack.c.b16 %v2936, %v2935
        %v3065 = vpack.c.b16 %v2938, %v2937
        %v3066 = vpack.c.b16 %v2940, %v2939
        %v3067 = vpack.c.b16 %v2942, %v2941
        %v3068 = vpack.c.b16 %v2944, %v2943
        %v3069 = vpack.c.b16 %v2946, %v2945
        %v3070 = vpack.c.b16 %v2948, %v2947
        %v3071 = vpack.c.b16 %v2950, %v2949
        %v3072 = vpack.c.b16 %v2952, %v2951
        %v3073 = vpack.c.b16 %v2954, %v2953
        %v3074 = vpack.c.b16 %v2956, %v2955
        %v3075 = vpack.c.b16 %v2958, %v2957
        %v3076 = vpack.c.b16 %v2960, %v2959
        %v3077 = vpack.c.b16 %v2962, %v2961
        %v3078 = vpack.c.b16 %v2964, %v2963
        %v3079 = vpack.c.b16 %v2966, %v2965
        %v3080 = vpack.c.b16 %v2968, %v2967
        %v3081 = vpack.c.b16 %v2970, %v2969
        %v3082 = vpack.c.b16 %v2972, %v2971
        %v3083 = vpack.c.b16 %v2974, %v2973
        %v3084 = vpack.c.b16 %v2976, %v2975
        %v3085 = vpack.c.b16 %v2978, %v2977
        %v3086 = vpack.c.b16 %v2980, %v2979
        %v3087 = vpack.c.b16 %v2982, %v2981
        %v3088 = vpack.c.b16 %v2984, %v2983
        %v3089 = vpack.c.b16 %v2986, %v2985
        %v3090 = vpack.c.b16 %v2988, %v2987
        %v3091 = vpack.c.b16 %v2990, %v2989
        %v3092 = vpack.c.b16 %v2992, %v2991
        %v3093 = vpack.c.b16 %v2994, %v2993
        %v3094 = vpack.c.b16 %v2996, %v2995
        %v3095 = vpack.c.b16 %v2998, %v2997
        %v3096 = vpack.c.b16 %v3000, %v2999
        %v3097 = vpack.c.b16 %v3002, %v3001
        %v3098 = vpack.c.b16 %v3004, %v3003
        %v3099 = vpack.c.b16 %v3006, %v3005
        %v3100 = vpack.c.b16 %v3008, %v3007
        %v3101 = vpack.c.b16 %v3010, %v3009
        %v3102 = vpack.c.b16 %v3012, %v3011
        %v3103 = vpack.c.b16 %v3014, %v3013
        %v3104 = vpack.c.b16 %v3016, %v3015
        %v3105 = vpack.c.b16 %v3018, %v3017
        %v3106 = vpack.c.b16 %v3020, %v3019
        %v3107 = vpack.c.b16 %v3022, %v3021
        %v3108 = vpack.c.b16 %v3024, %v3023
        %v3109 = vpack.c.b16 %v3026, %v3025
        %v3110 = vpack.c.b16 %v3028, %v3027
        %v3111 = vpack.c.b16 %v3030, %v3029
        %v3112 = vpack.c.b16 %v3032, %v3031
        %v3113 = vpack.c.b16 %v3034, %v3033
        %v3114 = vpack.c.b16 %v3036, %v3035
        %v3115 = vpack.c.b16 %v3038, %v3037
        %v3116 = vpack.c.b16 %v3040, %v3039
        %v3117 = vpack.c.b16 %v3042, %v3041
        %v3118 = vpack.c.b16 %v3044, %v3043
        %v3119 = vpack.c.b16 %v3046, %v3045
        %v3120 = vpack.c.b16 %v3048, %v3047
        %3193 = vmatprep.subr.bf16.mxu0 0
        %3194 = vmatpush1.bf16.msra.mxu0 %v3049
        %3195 = vmatprep.subr.bf16.mxu0 0
        %3196 = vmatpush1.bf16.msra.mxu0 %v3050
        %3197 = vmatprep.subr.bf16.mxu0 0
        %3198 = vmatpush1.bf16.msra.mxu0 %v3051
        %3199 = vmatprep.subr.bf16.mxu0 0
        %3200 = vmatpush1.bf16.msra.mxu0 %v3052
        %3201 = vmatprep.subr.bf16.mxu0 0
        %3202 = vmatpush1.bf16.msra.mxu0 %v3053
        %3203 = vmatprep.subr.bf16.mxu0 0
        %3204 = vmatpush1.bf16.msra.mxu0 %v3054
        %3205 = vmatprep.subr.bf16.mxu0 0
        %3206 = vmatpush1.bf16.msra.mxu0 %v3055
        %3207 = vmatprep.subr.bf16.mxu0 0
        %3208 = vmatpush1.bf16.msra.mxu0 %v3056
        %3209 = vmatprep.subr.bf16.mxu0 0
        %3210 = vmatpush1.bf16.msra.mxu0 %v3057
        %3211 = vmatprep.subr.bf16.mxu0 0
        %3212 = vmatpush1.bf16.msra.mxu0 %v3058
        %3213 = vmatprep.subr.bf16.mxu0 0
        %3214 = vmatpush1.bf16.msra.mxu0 %v3059
        %3215 = vmatprep.subr.bf16.mxu0 0
        %3216 = vmatpush1.bf16.msra.mxu0 %v3060
        %3217 = vmatprep.subr.bf16.mxu0 0
        %3218 = vmatpush1.bf16.msra.mxu0 %v3061
        %3219 = vmatprep.subr.bf16.mxu0 0
        %3220 = vmatpush1.bf16.msra.mxu0 %v3062
        %3221 = vmatprep.subr.bf16.mxu0 0
        %3222 = vmatpush1.bf16.msra.mxu0 %v3063
        %3223 = vmatprep.subr.bf16.mxu0 0
        %3224 = vmatpush1.bf16.msra.mxu0 %v3064
        %3225 = vmatprep.mubr.bf16.mxu0 %v2708
        %3226 = vmatmul.mubr.bf16.gmra.mrb[0].mxu0 %v2707
        %v3227 = vpop.f32.mrb[0].mxu0
        %v3228 = vadd.f32 %v2705, %v3227
        %v3229 = vpop.f32.mrb[0].mxu0
        %v3230 = vpop.f32.mrb[0].mxu0
        %v3231 = vadd.f32 %v2705, %v3230
        %v3232 = vpop.f32.mrb[0].mxu0
        %3233 = vmatprep.mubr.bf16.mxu0 %v2714
        %3234 = vmatmul.mubr.bf16.gmra.mrb[0].mxu0 %v2713
        %v3235 = vpop.f32.mrb[0].mxu0
        %v3236 = vadd.f32 %v2705, %v3235
        %v3237 = vpop.f32.mrb[0].mxu0
        %v3238 = vpop.f32.mrb[0].mxu0
        %v3239 = vadd.f32 %v2705, %v3238
        %v3240 = vpop.f32.mrb[0].mxu0
        %3241 = vmatprep.mubr.bf16.mxu0 %v2720
        %3242 = vmatmul.mubr.bf16.gmra.mrb[0].mxu0 %v2719
        %v3243 = vpop.f32.mrb[0].mxu0
        %v3244 = vadd.f32 %v2705, %v3243
        %v3245 = vpop.f32.mrb[0].mxu0
        %v3246 = vpop.f32.mrb[0].mxu0
        %v3247 = vadd.f32 %v2705, %v3246
        %v3248 = vpop.f32.mrb[0].mxu0
        %3249 = vmatprep.mubr.bf16.mxu0 %v2726
        %3250 = vmatmul.mubr.bf16.gmra.mrb[0].mxu0 %v2725
        %v3251 = vpop.f32.mrb[0].mxu0
        %v3252 = vadd.f32 %v2705, %v3251
        %v3253 = vpop.f32.mrb[0].mxu0
        %v3254 = vpop.f32.mrb[0].mxu0
        %v3255 = vadd.f32 %v2705, %v3254
        %v3256 = vpop.f32.mrb[0].mxu0
        %3257 = vdwg.mxu0
        %3258 = vmatprep.subr.bf16.mxu0 0
        %3259 = vmatpush1.bf16.msra.mxu0 %v3065
        %3260 = vmatprep.subr.bf16.mxu0 0
        %3261 = vmatpush1.bf16.msra.mxu0 %v3066
        %3262 = vmatprep.subr.bf16.mxu0 0
        %3263 = vmatpush1.bf16.msra.mxu0 %v3067
        %3264 = vmatprep.subr.bf16.mxu0 0
        %3265 = vmatpush1.bf16.msra.mxu0 %v3068
        %3266 = vmatprep.subr.bf16.mxu0 0
        %3267 = vmatpush1.bf16.msra.mxu0 %v3069
        %3268 = vmatprep.subr.bf16.mxu0 0
        %3269 = vmatpush1.bf16.msra.mxu0 %v3070
        %3270 = vmatprep.subr.bf16.mxu0 0
        %3271 = vmatpush1.bf16.msra.mxu0 %v3071
        %3272 = vmatprep.subr.bf16.mxu0 0
        %3273 = vmatpush1.bf16.msra.mxu0 %v3072
        %3274 = vmatprep.subr.bf16.mxu0 0
        %3275 = vmatpush1.bf16.msra.mxu0 %v3073
        %3276 = vmatprep.subr.bf16.mxu0 0
        %3277 = vmatpush1.bf16.msra.mxu0 %v3074
        %3278 = vmatprep.subr.bf16.mxu0 0
        %3279 = vmatpush1.bf16.msra.mxu0 %v3075
        %3280 = vmatprep.subr.bf16.mxu0 0
        %3281 = vmatpush1.bf16.msra.mxu0 %v3076
        %3282 = vmatprep.subr.bf16.mxu0 0
        %3283 = vmatpush1.bf16.msra.mxu0 %v3077
        %3284 = vmatprep.subr.bf16.mxu0 0
        %3285 = vmatpush1.bf16.msra.mxu0 %v3078
        %3286 = vmatprep.subr.bf16.mxu0 0
        %3287 = vmatpush1.bf16.msra.mxu0 %v3079
        %3288 = vmatprep.subr.bf16.mxu0 0
        %3289 = vmatpush1.bf16.msra.mxu0 %v3080
        %3290 = vmatprep.mubr.bf16.mxu0 %v2710
        %3291 = vmatmul.mubr.bf16.gmra.mrb[0].mxu0 %v2709
        %v3292 = vpop.f32.mrb[0].mxu0
        %v3293 = vadd.f32 %v3228, %v3292
        %v3294 = vpop.f32.mrb[0].mxu0
        %v3295 = vpop.f32.mrb[0].mxu0
        %v3296 = vadd.f32 %v3231, %v3295
        %v3297 = vpop.f32.mrb[0].mxu0
        %3298 = vmatprep.mubr.bf16.mxu0 %v2716
        %3299 = vmatmul.mubr.bf16.gmra.mrb[0].mxu0 %v2715
        %v3300 = vpop.f32.mrb[0].mxu0
        %v3301 = vadd.f32 %v3236, %v3300
        %v3302 = vpop.f32.mrb[0].mxu0
        %v3303 = vpop.f32.mrb[0].mxu0
        %v3304 = vadd.f32 %v3239, %v3303
        %v3305 = vpop.f32.mrb[0].mxu0
        %3306 = vmatprep.mubr.bf16.mxu0 %v2722
        %3307 = vmatmul.mubr.bf16.gmra.mrb[0].mxu0 %v2721
        %v3308 = vpop.f32.mrb[0].mxu0
        %v3309 = vadd.f32 %v3244, %v3308
        %v3310 = vpop.f32.mrb[0].mxu0
        %v3311 = vpop.f32.mrb[0].mxu0
        %v3312 = vadd.f32 %v3247, %v3311
        %v3313 = vpop.f32.mrb[0].mxu0
        %3314 = vmatprep.mubr.bf16.mxu0 %v2728
        %3315 = vmatmul.mubr.bf16.gmra.mrb[0].mxu0 %v2727
        %v3316 = vpop.f32.mrb[0].mxu0
        %v3317 = vadd.f32 %v3252, %v3316
        %v3318 = vpop.f32.mrb[0].mxu0
        %v3319 = vpop.f32.mrb[0].mxu0
        %v3320 = vadd.f32 %v3255, %v3319
        %v3321 = vpop.f32.mrb[0].mxu0
        %3322 = vdwg.mxu0
        %3323 = vmatprep.subr.bf16.mxu0 0
        %3324 = vmatpush1.bf16.msra.mxu0 %v3081
        %3325 = vmatprep.subr.bf16.mxu0 0
        %3326 = vmatpush1.bf16.msra.mxu0 %v3082
        %3327 = vmatprep.subr.bf16.mxu0 0
        %3328 = vmatpush1.bf16.msra.mxu0 %v3083
        %3329 = vmatprep.subr.bf16.mxu0 0
        %3330 = vmatpush1.bf16.msra.mxu0 %v3084
        %3331 = vmatprep.subr.bf16.mxu0 0
        %3332 = vmatpush1.bf16.msra.mxu0 %v3085
        %3333 = vmatprep.subr.bf16.mxu0 0
        %3334 = vmatpush1.bf16.msra.mxu0 %v3086
        %3335 = vmatprep.subr.bf16.mxu0 0
        %3336 = vmatpush1.bf16.msra.mxu0 %v3087
        %3337 = vmatprep.subr.bf16.mxu0 0
        %3338 = vmatpush1.bf16.msra.mxu0 %v3088
        %3339 = vmatprep.subr.bf16.mxu0 0
        %3340 = vmatpush1.bf16.msra.mxu0 %v3089
        %3341 = vmatprep.subr.bf16.mxu0 0
        %3342 = vmatpush1.bf16.msra.mxu0 %v3090
        %3343 = vmatprep.subr.bf16.mxu0 0
        %3344 = vmatpush1.bf16.msra.mxu0 %v3091
        %3345 = vmatprep.subr.bf16.mxu0 0
        %3346 = vmatpush1.bf16.msra.mxu0 %v3092
        %3347 = vmatprep.subr.bf16.mxu0 0
        %3348 = vmatpush1.bf16.msra.mxu0 %v3093
        %3349 = vmatprep.subr.bf16.mxu0 0
        %3350 = vmatpush1.bf16.msra.mxu0 %v3094
        %3351 = vmatprep.subr.bf16.mxu0 0
        %3352 = vmatpush1.bf16.msra.mxu0 %v3095
        %3353 = vmatprep.subr.bf16.mxu0 0
        %3354 = vmatpush1.bf16.msra.mxu0 %v3096
        %3355 = vmatprep.mubr.bf16.mxu0 %v2712
        %3356 = vmatmul.mubr.bf16.gmra.mrb[0].mxu0 %v2711
        %v3357 = vpop.f32.mrb[0].mxu0
        %v3358 = vadd.f32 %v3293, %v3357
        %v3359 = vpop.f32.mrb[0].mxu0
        %v3360 = vpop.f32.mrb[0].mxu0
        %v3361 = vadd.f32 %v3296, %v3360
        %v3362 = vpop.f32.mrb[0].mxu0
        %3363 = vmatprep.mubr.bf16.mxu0 %v2718
        %3364 = vmatmul.mubr.bf16.gmra.mrb[0].mxu0 %v2717
        %v3365 = vpop.f32.mrb[0].mxu0
        %v3366 = vadd.f32 %v3301, %v3365
        %v3367 = vpop.f32.mrb[0].mxu0
        %v3368 = vpop.f32.mrb[0].mxu0
        %v3369 = vadd.f32 %v3304, %v3368
        %v3370 = vpop.f32.mrb[0].mxu0
        %3371 = vmatprep.mubr.bf16.mxu0 %v2724
        %3372 = vmatmul.mubr.bf16.gmra.mrb[0].mxu0 %v2723
        %v3373 = vpop.f32.mrb[0].mxu0
        %v3374 = vadd.f32 %v3309, %v3373
        %v3375 = vpop.f32.mrb[0].mxu0
        %v3376 = vpop.f32.mrb[0].mxu0
        %v3377 = vadd.f32 %v3312, %v3376
        %v3378 = vpop.f32.mrb[0].mxu0
        %3379 = vmatprep.mubr.bf16.mxu0 %v2730
        %3380 = vmatmul.mubr.bf16.gmra.mrb[0].mxu0 %v2729
        %v3381 = vpop.f32.mrb[0].mxu0
        %v3382 = vadd.f32 %v3317, %v3381
        %v3383 = vpop.f32.mrb[0].mxu0
        %v3384 = vpop.f32.mrb[0].mxu0
        %v3385 = vadd.f32 %v3320, %v3384
        %v3386 = vpop.f32.mrb[0].mxu0
        %3387 = vdwg.mxu0
        %3388 = vmatprep.subr.bf16.mxu0 0
        %3389 = vmatpush1.bf16.msra.mxu0 %v3097
        %3390 = vmatprep.subr.bf16.mxu0 0
        %3391 = vmatpush1.bf16.msra.mxu0 %v3098
        %3392 = vmatprep.subr.bf16.mxu0 0
        %3393 = vmatpush1.bf16.msra.mxu0 %v3099
        %3394 = vmatprep.subr.bf16.mxu0 0
        %3395 = vmatpush1.bf16.msra.mxu0 %v3100
        %3396 = vmatprep.subr.bf16.mxu0 0
        %3397 = vmatpush1.bf16.msra.mxu0 %v3101
        %3398 = vmatprep.subr.bf16.mxu0 0
        %3399 = vmatpush1.bf16.msra.mxu0 %v3102
        %3400 = vmatprep.subr.bf16.mxu0 0
        %3401 = vmatpush1.bf16.msra.mxu0 %v3103
        %3402 = vmatprep.subr.bf16.mxu0 0
        %3403 = vmatpush1.bf16.msra.mxu0 %v3104
        %3404 = vmatprep.subr.bf16.mxu0 0
        %3405 = vmatpush1.bf16.msra.mxu0 %v3105
        %3406 = vmatprep.subr.bf16.mxu0 0
        %3407 = vmatpush1.bf16.msra.mxu0 %v3106
        %3408 = vmatprep.subr.bf16.mxu0 0
        %3409 = vmatpush1.bf16.msra.mxu0 %v3107
        %3410 = vmatprep.subr.bf16.mxu0 0
        %3411 = vmatpush1.bf16.msra.mxu0 %v3108
        %3412 = vmatprep.subr.bf16.mxu0 0
        %3413 = vmatpush1.bf16.msra.mxu0 %v3109
        %3414 = vmatprep.subr.bf16.mxu0 0
        %3415 = vmatpush1.bf16.msra.mxu0 %v3110
        %3416 = vmatprep.subr.bf16.mxu0 0
        %3417 = vmatpush1.bf16.msra.mxu0 %v3111
        %3418 = vmatprep.subr.bf16.mxu0 0
        %3419 = vmatpush1.bf16.msra.mxu0 %v3112
        %3420 = vmatprep.mubr.bf16.mxu0 %v2714
        %3421 = vmatmul.mubr.bf16.gmra.mrb[0].mxu0 %v2713
        %v3422 = vpop.f32.mrb[0].mxu0
        %v3423 = vadd.f32 %v3358, %v3422
        %v3424 = vpop.f32.mrb[0].mxu0
        %v3425 = vpop.f32.mrb[0].mxu0
        %v3426 = vadd.f32 %v3361, %v3425
        %v3427 = vpop.f32.mrb[0].mxu0
        %3428 = vmatprep.mubr.bf16.mxu0 %v2720
        %3429 = vmatmul.mubr.bf16.gmra.mrb[0].mxu0 %v2719
        %v3430 = vpop.f32.mrb[0].mxu0
        %v3431 = vadd.f32 %v3366, %v3430
        %v3432 = vpop.f32.mrb[0].mxu0
        %v3433 = vpop.f32.mrb[0].mxu0
        %v3434 = vadd.f32 %v3369, %v3433
        %v3435 = vpop.f32.mrb[0].mxu0
        %3436 = vmatprep.mubr.bf16.mxu0 %v2726
        %3437 = vmatmul.mubr.bf16.gmra.mrb[0].mxu0 %v2725
        %v3438 = vpop.f32.mrb[0].mxu0
        %v3439 = vadd.f32 %v3374, %v3438
        %v3440 = vpop.f32.mrb[0].mxu0
        %v3441 = vpop.f32.mrb[0].mxu0
        %v3442 = vadd.f32 %v3377, %v3441
        %v3443 = vpop.f32.mrb[0].mxu0
        %3444 = vmatprep.mubr.bf16.mxu0 %v2732
        %3445 = vmatmul.mubr.bf16.gmra.mrb[0].mxu0 %v2731
        %v3446 = vpop.f32.mrb[0].mxu0
        %v3447 = vadd.f32 %v3382, %v3446
        %v3448 = vpop.f32.mrb[0].mxu0
        %v3449 = vpop.f32.mrb[0].mxu0
        %v3450 = vadd.f32 %v3385, %v3449
        %v3451 = vpop.f32.mrb[0].mxu0
        %3452 = vdwg.mxu0
        %3453 = vmatprep.subr.bf16.mxu0 0
        %3454 = vmatpush1.bf16.msra.mxu0 %v3113
        %3455 = vmatprep.subr.bf16.mxu0 0
        %3456 = vmatpush1.bf16.msra.mxu0 %v3114
        %3457 = vmatprep.subr.bf16.mxu0 0
        %3458 = vmatpush1.bf16.msra.mxu0 %v3115
        %3459 = vmatprep.subr.bf16.mxu0 0
        %3460 = vmatpush1.bf16.msra.mxu0 %v3116
        %3461 = vmatprep.subr.bf16.mxu0 0
        %3462 = vmatpush1.bf16.msra.mxu0 %v3117
        %3463 = vmatprep.subr.bf16.mxu0 0
        %3464 = vmatpush1.bf16.msra.mxu0 %v3118
        %3465 = vmatprep.subr.bf16.mxu0 0
        %3466 = vmatpush1.bf16.msra.mxu0 %v3119
        %3467 = vmatprep.subr.bf16.mxu0 0
        %3468 = vmatpush1.bf16.msra.mxu0 %v3120
        %3469 = vmatprep.subr.bf16.mxu0 0
        %3470 = vmatpush1.bf16.msra.mxu0 0
        %3471 = vmatprep.subr.bf16.mxu0 0
        %3472 = vmatpush1.bf16.msra.mxu0 0
        %3473 = vmatprep.subr.bf16.mxu0 0
        %3474 = vmatpush1.bf16.msra.mxu0 0
        %3475 = vmatprep.subr.bf16.mxu0 0
        %3476 = vmatpush1.bf16.msra.mxu0 0
        %3477 = vmatprep.subr.bf16.mxu0 0
        %3478 = vmatpush1.bf16.msra.mxu0 0
        %3479 = vmatprep.subr.bf16.mxu0 0
        %3480 = vmatpush1.bf16.msra.mxu0 0
        %3481 = vmatprep.subr.bf16.mxu0 0
        %3482 = vmatpush1.bf16.msra.mxu0 0
        %3483 = vmatprep.subr.bf16.mxu0 0
        %3484 = vmatpush1.bf16.msra.mxu0 0
        %3485 = vmatprep.mubr.bf16.mxu0 0
        %3486 = vmatmul.mubr.bf16.gmra.mrb[0].mxu0 %v2715
        %v3487 = vpop.f32.mrb[0].mxu0
        %v3488 = vadd.f32 %v3423, %v3487
        %v3489 = vpop.f32.mrb[0].mxu0
        %v3490 = vpop.f32.mrb[0].mxu0
        %v3491 = vadd.f32 %v3426, %v3490
        %v3492 = vpop.f32.mrb[0].mxu0
        %3493 = vmatprep.mubr.bf16.mxu0 0
        %3494 = vmatmul.mubr.bf16.gmra.mrb[0].mxu0 %v2721
        %v3495 = vpop.f32.mrb[0].mxu0
        %v3496 = vadd.f32 %v3431, %v3495
        %v3497 = vpop.f32.mrb[0].mxu0
        %v3498 = vpop.f32.mrb[0].mxu0
        %v3499 = vadd.f32 %v3434, %v3498
        %v3500 = vpop.f32.mrb[0].mxu0
        %3501 = vmatprep.mubr.bf16.mxu0 0
        %3502 = vmatmul.mubr.bf16.gmra.mrb[0].mxu0 %v2727
        %v3503 = vpop.f32.mrb[0].mxu0
        %v3504 = vadd.f32 %v3439, %v3503
        %v3505 = vpop.f32.mrb[0].mxu0
        %v3506 = vpop.f32.mrb[0].mxu0
        %v3507 = vadd.f32 %v3442, %v3506
        %v3508 = vpop.f32.mrb[0].mxu0
        %3509 = vmatprep.mubr.bf16.mxu0 0
        %3510 = vmatmul.mubr.bf16.gmra.mrb[0].mxu0 %v2733
        %v3511 = vpop.f32.mrb[0].mxu0
        %v3512 = vadd.f32 %v3447, %v3511
        %v3513 = vpop.f32.mrb[0].mxu0
        %v3514 = vpop.f32.mrb[0].mxu0
        %v3515 = vadd.f32 %v3450, %v3514
        %v3516 = vpop.f32.mrb[0].mxu0
        %3517 = vdwg.mxu0
        %v3518 = vpack.c.bf16 %v3488, %v3488
        %v3519 = vpack.c.bf16 %v3491, %v3491
        %v3520 = vpack.c.bf16 %v3496, %v3496
        %v3521 = vpack.c.bf16 %v3499, %v3499
        %v3522 = vpack.c.bf16 %v3504, %v3504
        %v3523 = vpack.c.bf16 %v3507, %v3507
        %v3524 = vpack.c.bf16 %v3512, %v3512
        %v3525 = vpack.c.bf16 %v3515, %v3515
        %3526 = vst [vmem:[%s462] sm:$0xf] %v3518
        %3527 = vst [vmem:[%s462 + $0x4] sm:$0xf] %v3519
        %3528 = vst [vmem:[%s462 + $0x8] sm:$0xf] %v3520
        %3529 = vst [vmem:[%s462 + $0xc] sm:$0xf] %v3521
        %3530 = vst [vmem:[%s462 + $0x10] sm:$0xf] %v3522
        %3531 = vst [vmem:[%s462 + $0x14] sm:$0xf] %v3523
        %3532 = vst [vmem:[%s462 + $0x18] sm:$0xf] %v3524
        %3533 = vst [vmem:[%s462 + $0x1c] sm:$0xf] %v3525
        %s3534 = sand.u32 %s249, 1
        %s3535 = scalar_lea.sflag [#allocation5], %s3534
        %s3536 = sand.u32 %s249, 1
        %s3537 = smul.addr %s3536, 32
        %s3538 = scalar_lea.vmem [#allocation9], %s3537
        %s3539 = sand.u32 %s33, 1
        %s3540 = scalar_lea.sflag [#allocation11], %s3539
        %s3541 = sand.u32 %s277, 1
        %s3542 = smul.addr %s3541, 32
        %s3543 = scalar_lea.vmem [#allocation10], %s3542
        %s3544 = sand.u32 %s33, 1
        %s3545 = scalar_lea.sflag [#allocation11], %s3544
        %s3546 = sand.u32 %s305, 1
        %s3547 = smul.addr %s3546, 8
        %s3548 = scalar_lea.vmem [#allocation12], %s3547
        // Predicated region
        $region101: #{tpu_custom_call.1} parent=55 // pred_check
          %p3549 = pneg %p259
        $region102: #{tpu_custom_call.1} parent=55 // pred_check_branch
          %3551 = sbr.rel (%p3549) target = $region104
        $region103: #{tpu_custom_call.1} parent=55 // pred_region
          %s3552 = smul.u32 8, %s38
          %s3554 = ssub.s32 512, 512
          %3555 = vsyncadd %s3535, %s3554
          %s3556 = smul.addr %s37, 8
          %s3557 = sadd.s32 %s3552, %s3556
          %s3558 = smul.addr %s3557, 64
          %s3559 = scalar_lea.hbm %s9, %s3558
          %s3560 = sshll.u32 %s3538, 4
          %s3561 = int_to_ptr.vmem [resolvable:$true] %s3560
          %3566 = dma.vmem_to_hbm [thread:$0]  %s3561, 512, %s3559, %s3535, 64, 64, 4
        $region104: #{tpu_custom_call.1} parent=55 // pred_fallthru
          _
        // Predicated region
        $region105: #{tpu_custom_call.1} parent=55 // pred_check
          %p3567 = pneg %p287
        $region106: #{tpu_custom_call.1} parent=55 // pred_check_branch
          %3569 = sbr.rel (%p3567) target = $region108
        $region107: #{tpu_custom_call.1} parent=55 // pred_region
          %s3570 = smul.u32 8, %s38
          %s3572 = ssub.s32 512, 512
          %3573 = vsyncadd %s3540, %s3572
          %s3574 = smul.addr %s37, 8
          %s3575 = sadd.s32 %s3570, %s3574
          %s3576 = smul.addr %s3575, 64
          %s3577 = scalar_lea.hbm %s10, %s3576
          %s3578 = sshll.u32 %s3543, 4
          %s3579 = int_to_ptr.vmem [resolvable:$true] %s3578
          %3584 = dma.vmem_to_hbm [thread:$0]  %s3579, 512, %s3577, %s3540, 64, 64, 4
        $region108: #{tpu_custom_call.1} parent=55 // pred_fallthru
          _
        // Predicated region
        $region109: #{tpu_custom_call.1} parent=55 // pred_check
          %p3585 = pneg %p315
        $region110: #{tpu_custom_call.1} parent=55 // pred_check_branch
          %3587 = sbr.rel (%p3585) target = $region112
        $region111: #{tpu_custom_call.1} parent=55 // pred_region
          %s3589 = ssub.s32 128, 128
          %3590 = vsyncadd %s3545, %s3589
          %s3591 = sadd.s32 %s38, %s37
          %s3592 = smul.addr %s3591, 128
          %s3593 = scalar_lea.hbm %s11, %s3592
          %s3595 = sshll.u32 %s3548, 4
          %s3596 = int_to_ptr.vmem [resolvable:$true] %s3595
          %3598 = dma.vmem_to_hbm [thread:$0]  %s3596, 128, %s3593, %s3545
        $region112: #{tpu_custom_call.1} parent=55 // pred_fallthru
          _
      $region56: #{tpu_custom_call.1} parent=5 // pred_fallthru
        _
      %p3599 = scmp.le.s32.totalorder 2, %s28
      // Predicated region
      $region113: #{tpu_custom_call.1} parent=5 // pred_check
        %p3600 = pneg %p3599
      $region114: #{tpu_custom_call.1} parent=5 // pred_check_branch
        %3602 = sbr.rel (%p3600) target = $region116
      $region115: #{tpu_custom_call.1} parent=5 // pred_region
        %s3603 = ssub.s32 %s28, 2
        // Predicated region
        $region117: #{tpu_custom_call.1} parent=115 // pred_check
          %p3604 = pneg %p265
        $region118: #{tpu_custom_call.1} parent=115 // pred_check_branch
          %3606 = sbr.rel (%p3604) target = $region120
        $region119: #{tpu_custom_call.1} parent=115 // pred_region
          %s3607 = sand.u32 %s250, 1
          %s3608 = scalar_lea.sflag [#allocation5], %s3607
          %s3609 = sand.u32 %s250, 1
          %s3610 = smul.addr %s3609, 32
          %s3611 = scalar_lea.vmem [#allocation9], %s3610
          %3612 = dma.done %s3608, 512
        $region120: #{tpu_custom_call.1} parent=115 // pred_fallthru
          _
        // Predicated region
        $region121: #{tpu_custom_call.1} parent=115 // pred_check
          %p3613 = pneg %p293
        $region122: #{tpu_custom_call.1} parent=115 // pred_check_branch
          %3615 = sbr.rel (%p3613) target = $region124
        $region123: #{tpu_custom_call.1} parent=115 // pred_region
          %s3616 = sand.u32 %s34, 1
          %s3617 = scalar_lea.sflag [#allocation11], %s3616
          %s3618 = sand.u32 %s278, 1
          %s3619 = smul.addr %s3618, 32
          %s3620 = scalar_lea.vmem [#allocation10], %s3619
          %3621 = dma.done %s3617, 512
        $region124: #{tpu_custom_call.1} parent=115 // pred_fallthru
          _
        // Predicated region
        $region125: #{tpu_custom_call.1} parent=115 // pred_check
          %p3622 = pneg %p321
        $region126: #{tpu_custom_call.1} parent=115 // pred_check_branch
          %3624 = sbr.rel (%p3622) target = $region128
        $region127: #{tpu_custom_call.1} parent=115 // pred_region
          %s3625 = sand.u32 %s34, 1
          %s3626 = scalar_lea.sflag [#allocation11], %s3625
          %s3627 = sand.u32 %s306, 1
          %s3628 = smul.addr %s3627, 8
          %s3629 = scalar_lea.vmem [#allocation12], %s3628
          %3630 = dma.done %s3626, 128
        $region128: #{tpu_custom_call.1} parent=115 // pred_fallthru
          _
      $region116: #{tpu_custom_call.1} parent=5 // pred_fallthru
        _
    $region6: #{tpu_custom_call.1} parent=1 // loop_footer
      %s32 = sadd.s32 1, %s28
    $region7: #{tpu_custom_call.1} parent=1 // loop_footer_branch
      %27 = sbr.rel target = $region3
    $region8: #{tpu_custom_call.1} parent=1 // loop_exit
      _
    %3631 = vsyncpa [#allocation4], 1
    %s3632 = scalar_lea.sflag [#allocation4], 1
    %3633 = vsyncpa %s3632, 1
    %3634 = vsyncpa [#allocation7], 1
    %3635 = vsyncpa [#allocation5], 1
    %s3636 = scalar_lea.sflag [#allocation5], 1
    %3637 = vsyncpa %s3636, 1
    %3638 = vsyncpa [#allocation11], 1
    %s3639 = scalar_lea.sflag [#allocation11], 1
    %3640 = vsyncpa %s3639, 1

</llo_original>
